<compile_context>
chip_gen: v7x
topology: tpu7x:2x2x1
jax: 0.10.0
libtpu: 0.0.40
codegen_flags: <defaults>
</compile_context>

<pallas_src>
import functools
import math

import jax
import jax.numpy as jnp
from jax.experimental import pallas as pl
from jax.experimental.pallas import tpu as pltpu


# ---------------------------------------------------------------------------
# tiling helper
# ---------------------------------------------------------------------------
def _pick_tile(dim, target, align):
    """Largest legal TPU block size <= target for `dim`.

    Returns either the full dim (always legal) or a divisor of `dim` that is a
    multiple of `align` (8 for sublane axes, 128 for lane axes)."""
    if dim <= target:
        return dim
    t = (target // align) * align
    while t >= align:
        if dim % t == 0:
            return t
        t -= align
    return dim


# ---------------------------------------------------------------------------
# Pallas kernels
# ---------------------------------------------------------------------------
def _linear_kernel(x_ref, w_ref, b_ref, o_ref, acc_ref, *, relu):
    @pl.when(pl.program_id(2) == 0)
    def _():
        acc_ref[...] = jnp.zeros_like(acc_ref)

    acc_ref[...] += jnp.dot(x_ref[...], w_ref[...],
                            preferred_element_type=jnp.float32)

    @pl.when(pl.program_id(2) == pl.num_programs(2) - 1)
    def _():
        out = acc_ref[...] + b_ref[...]
        if relu:
            out = jnp.maximum(out, 0.0)
        o_ref[...] = out.astype(o_ref.dtype)


def pallas_linear(x2d, w, b, relu=False):
    M, K = x2d.shape
    N = w.shape[1]
    tm = _pick_tile(M, 256, 8)
    tk = _pick_tile(K, 512, 128)
    tn = _pick_tile(N, 512, 128)
    grid = (M // tm, N // tn, K // tk)
    kernel = functools.partial(_linear_kernel, relu=relu)
    return pl.pallas_call(
        kernel,
        out_shape=jax.ShapeDtypeStruct((M, N), jnp.float32),
        grid_spec=pltpu.PrefetchScalarGridSpec(
            num_scalar_prefetch=0,
            grid=grid,
            in_specs=[
                pl.BlockSpec((tm, tk), lambda i, j, k: (i, k)),
                pl.BlockSpec((tk, tn), lambda i, j, k: (k, j)),
                pl.BlockSpec((1, tn), lambda i, j, k: (0, j)),
            ],
            out_specs=pl.BlockSpec((tm, tn), lambda i, j, k: (i, j)),
            scratch_shapes=[pltpu.VMEM((tm, tn), jnp.float32)],
        ),
        compiler_params=pltpu.CompilerParams(
            dimension_semantics=("parallel", "parallel", "arbitrary")),
        cost_estimate=pl.CostEstimate(
            flops=2 * M * N * K, transcendentals=0,
            bytes_accessed=4 * (M * K + K * N + M * N + N)),
    )(x2d, w, b.reshape(1, N))


def _add_layernorm_kernel(x_ref, r_ref, g_ref, b_ref, o_ref):
    # Fused residual add + LayerNorm, single-pass statistics.
    x = x_ref[...].astype(jnp.float32) + r_ref[...].astype(jnp.float32)
    mu = jnp.mean(x, axis=-1, keepdims=True)
    var = jnp.mean(x * x, axis=-1, keepdims=True) - mu * mu
    y = (x - mu) * jax.lax.rsqrt(var + 1e-5)
    o_ref[...] = (y * g_ref[...] + b_ref[...]).astype(o_ref.dtype)


def pallas_add_layernorm(x2d, r2d, gamma, beta):
    M, D = x2d.shape
    tm = _pick_tile(M, 512, 8)
    return pl.pallas_call(
        _add_layernorm_kernel,
        out_shape=jax.ShapeDtypeStruct((M, D), jnp.float32),
        grid_spec=pltpu.PrefetchScalarGridSpec(
            num_scalar_prefetch=0,
            grid=(M // tm,),
            in_specs=[
                pl.BlockSpec((tm, D), lambda i: (i, 0)),
                pl.BlockSpec((tm, D), lambda i: (i, 0)),
                pl.BlockSpec((1, D), lambda i: (0, 0)),
                pl.BlockSpec((1, D), lambda i: (0, 0)),
            ],
            out_specs=pl.BlockSpec((tm, D), lambda i: (i, 0)),
        ),
        compiler_params=pltpu.CompilerParams(
            dimension_semantics=("parallel",)),
    )(x2d, r2d, gamma.reshape(1, D), beta.reshape(1, D))


def _ffn_kernel(x_ref, w1_ref, b1_ref, w2_ref, b2_ref, o_ref):
    h = jnp.dot(x_ref[...], w1_ref[...], preferred_element_type=jnp.float32)
    h = jnp.maximum(h + b1_ref[...], 0.0)
    out = jnp.dot(h, w2_ref[...], preferred_element_type=jnp.float32) + b2_ref[...]
    o_ref[...] = out.astype(o_ref.dtype)


def pallas_ffn(x2d, w1, b1, w2, b2):
    M, D = x2d.shape
    Dff = w1.shape[1]
    # Fall back to two tiled linears when the fused weights would not fit VMEM.
    if 2 * D * Dff * 4 > 8 * 1024 * 1024:
        h = pallas_linear(x2d, w1, b1, relu=True)
        return pallas_linear(h, w2, b2)
    tm = _pick_tile(M, 256, 8)
    return pl.pallas_call(
        _ffn_kernel,
        out_shape=jax.ShapeDtypeStruct((M, D), jnp.float32),
        grid_spec=pltpu.PrefetchScalarGridSpec(
            num_scalar_prefetch=0,
            grid=(M // tm,),
            in_specs=[
                pl.BlockSpec((tm, D), lambda i: (i, 0)),
                pl.BlockSpec((D, Dff), lambda i: (0, 0)),
                pl.BlockSpec((1, Dff), lambda i: (0, 0)),
                pl.BlockSpec((Dff, D), lambda i: (0, 0)),
                pl.BlockSpec((1, D), lambda i: (0, 0)),
            ],
            out_specs=pl.BlockSpec((tm, D), lambda i: (i, 0)),
        ),
        compiler_params=pltpu.CompilerParams(
            dimension_semantics=("parallel",)),
        cost_estimate=pl.CostEstimate(
            flops=4 * M * D * Dff, transcendentals=0,
            bytes_accessed=4 * (2 * M * D + 2 * D * Dff + D + Dff)),
    )(x2d, w1, b1.reshape(1, Dff), w2, b2.reshape(1, D))


def _attn_core(q, k, v, bias, heads, scale):
    """q: (Tq, D)  k,v: (Tk, D)  bias: additive mask broadcastable to (Tq, Tk)."""
    D = q.shape[-1]
    dh = D // heads
    outs = []
    for h in range(heads):
        qh = q[:, h * dh:(h + 1) * dh]
        kh = k[:, h * dh:(h + 1) * dh]
        vh = v[:, h * dh:(h + 1) * dh]
        s = jax.lax.dot_general(qh, kh, (((1,), (1,)), ((), ())),
                                preferred_element_type=jnp.float32)
        s = s * scale + bias
        s = s - jnp.max(s, axis=-1, keepdims=True)
        e = jnp.exp(s)
        denom = jnp.sum(e, axis=-1, keepdims=True)        # >= 1 after max-sub
        p = e * pl.reciprocal(denom, approx=True)
        outs.append(jnp.dot(p, vh, preferred_element_type=jnp.float32))
    return jnp.concatenate(outs, axis=-1)                 # (Tq, D), lane-dense store


def _self_attn_kernel(qkv_ref, pad_ref, o_ref, *, heads, causal):
    D = o_ref.shape[-1]
    T = o_ref.shape[-2]
    qkv = qkv_ref[0].astype(jnp.float32)                  # (T, 3D)
    q = qkv[:, :D]
    k = qkv[:, D:2 * D]
    v = qkv[:, 2 * D:]
    NEG = jnp.float32(-1e9)
    pad = pad_ref[0]                                      # (1, T), 1.0 == pad token
    bias = jnp.where(pad > 0.0, NEG, 0.0)                 # broadcast over query rows
    if causal:
        qi = jax.lax.broadcasted_iota(jnp.int32, (T, T), 0)
        ki = jax.lax.broadcasted_iota(jnp.int32, (T, T), 1)
        bias = bias + jnp.where(ki > qi, NEG, 0.0)
    scale = 1.0 / math.sqrt(D // heads)
    o_ref[0] = _attn_core(q, k, v, bias, heads, scale).astype(o_ref.dtype)


def _cross_attn_kernel(q_ref, kv_ref, pad_ref, o_ref, *, heads):
    D = o_ref.shape[-1]
    q = q_ref[0].astype(jnp.float32)                      # (Tq, D)
    kv = kv_ref[0].astype(jnp.float32)                    # (Tk, 2D)
    k = kv[:, :D]
    v = kv[:, D:]
    NEG = jnp.float32(-1e9)
    pad = pad_ref[0]                                      # (1, Tk)
    bias = jnp.where(pad > 0.0, NEG, 0.0)
    scale = 1.0 / math.sqrt(D // heads)
    o_ref[0] = _attn_core(q, k, v, bias, heads, scale).astype(o_ref.dtype)


def pallas_self_attention(qkv, pad, heads, causal):
    # qkv: (B, T, 3D)  pad: (B, 1, T) float32
    B, T, D3 = qkv.shape
    D = D3 // 3
    kernel = functools.partial(_self_attn_kernel, heads=heads, causal=causal)
    return pl.pallas_call(
        kernel,
        out_shape=jax.ShapeDtypeStruct((B, T, D), jnp.float32),
        grid=(B,),
        in_specs=[
            pl.BlockSpec((1, T, D3), lambda b: (b, 0, 0)),
            pl.BlockSpec((1, 1, T), lambda b: (b, 0, 0)),
        ],
        out_specs=pl.BlockSpec((1, T, D), lambda b: (b, 0, 0)),
        compiler_params=pltpu.CompilerParams(
            dimension_semantics=("parallel",)),
    )(qkv, pad)


def pallas_cross_attention(q, kv, pad, heads):
    # q: (B, Tq, D)  kv: (B, Tk, 2D)  pad: (B, 1, Tk)
    B, Tq, D = q.shape
    Tk = kv.shape[1]
    kernel = functools.partial(_cross_attn_kernel, heads=heads)
    return pl.pallas_call(
        kernel,
        out_shape=jax.ShapeDtypeStruct((B, Tq, D), jnp.float32),
        grid=(B,),
        in_specs=[
            pl.BlockSpec((1, Tq, D), lambda b: (b, 0, 0)),
            pl.BlockSpec((1, Tk, 2 * D), lambda b: (b, 0, 0)),
            pl.BlockSpec((1, 1, Tk), lambda b: (b, 0, 0)),
        ],
        out_specs=pl.BlockSpec((1, Tq, D), lambda b: (b, 0, 0)),
        compiler_params=pltpu.CompilerParams(
            dimension_semantics=("parallel",)),
    )(q, kv, pad)


# ---------------------------------------------------------------------------
# Transformer building blocks
# ---------------------------------------------------------------------------
def self_attention_block(x, p, pad, heads, causal):
    B, T, D = x.shape
    qkv = pallas_linear(x.reshape(B * T, D), p["wqkv"], p["bqkv"])   # fused QKV
    o = pallas_self_attention(qkv.reshape(B, T, 3 * D), pad, heads, causal)
    return pallas_linear(o.reshape(B * T, D), p["wo"], p["bo"]).reshape(B, T, D)


def cross_attention_block(y, mem, p, pad, heads):
    B, Tq, D = y.shape
    Tk = mem.shape[1]
    q = pallas_linear(y.reshape(B * Tq, D), p["wq"], p["bq"]).reshape(B, Tq, D)
    kv = pallas_linear(mem.reshape(B * Tk, D), p["wkv"], p["bkv"]).reshape(B, Tk, 2 * D)
    o = pallas_cross_attention(q, kv, pad, heads)
    return pallas_linear(o.reshape(B * Tq, D), p["wo"], p["bo"]).reshape(B, Tq, D)


def encoder_layer(x, p, src_pad, heads):
    B, T, D = x.shape
    attn = self_attention_block(x, p["sa"], src_pad, heads, causal=False)
    x2 = pallas_add_layernorm(x.reshape(B * T, D), attn.reshape(B * T, D),
                              p["ln1_g"], p["ln1_b"])
    h = pallas_ffn(x2, p["w1"], p["b1"], p["w2"], p["b2"])
    x3 = pallas_add_layernorm(x2, h, p["ln2_g"], p["ln2_b"])
    return x3.reshape(B, T, D)


def decoder_layer(y, mem, p, trg_pad, src_pad, heads):
    B, T, D = y.shape
    sa = self_attention_block(y, p["sa"], trg_pad, heads, causal=True)
    y2 = pallas_add_layernorm(y.reshape(B * T, D), sa.reshape(B * T, D),
                              p["ln1_g"], p["ln1_b"])
    ca = cross_attention_block(y2.reshape(B, T, D), mem, p["ca"], src_pad, heads)
    y3 = pallas_add_layernorm(y2, ca.reshape(B * T, D), p["ln2_g"], p["ln2_b"])
    h = pallas_ffn(y3, p["w1"], p["b1"], p["w2"], p["b2"])
    y4 = pallas_add_layernorm(y3, h, p["ln3_g"], p["ln3_b"])
    return y4.reshape(B, T, D)


# ---------------------------------------------------------------------------
# Parameter construction (deterministic, synthetic)
# ---------------------------------------------------------------------------
def _dense(key, fan_in, fan_out):
    k1, k2 = jax.random.split(key)
    bound = 1.0 / math.sqrt(fan_in)
    w = jax.random.uniform(k1, (fan_in, fan_out), jnp.float32, -bound, bound)
    b = jax.random.uniform(k2, (fan_out,), jnp.float32, -bound, bound)
    return w, b


def _self_attn_params(key, d_model):
    ks = jax.random.split(key, 4)
    wq, bq = _dense(ks[0], d_model, d_model)
    wk, bk = _dense(ks[1], d_model, d_model)
    wv, bv = _dense(ks[2], d_model, d_model)
    wo, bo = _dense(ks[3], d_model, d_model)
    return dict(wqkv=jnp.concatenate([wq, wk, wv], axis=1),
                bqkv=jnp.concatenate([bq, bk, bv], axis=0),
                wo=wo, bo=bo)


def _cross_attn_params(key, d_model):
    ks = jax.random.split(key, 4)
    wq, bq = _dense(ks[0], d_model, d_model)
    wk, bk = _dense(ks[1], d_model, d_model)
    wv, bv = _dense(ks[2], d_model, d_model)
    wo, bo = _dense(ks[3], d_model, d_model)
    return dict(wq=wq, bq=bq,
                wkv=jnp.concatenate([wk, wv], axis=1),
                bkv=jnp.concatenate([bk, bv], axis=0),
                wo=wo, bo=bo)


def _enc_layer_params(key, d_model, d_ff):
    ks = jax.random.split(key, 3)
    w1, b1 = _dense(ks[1], d_model, d_ff)
    w2, b2 = _dense(ks[2], d_ff, d_model)
    return dict(
        sa=_self_attn_params(ks[0], d_model),
        w1=w1, b1=b1, w2=w2, b2=b2,
        ln1_g=jnp.ones((d_model,), jnp.float32), ln1_b=jnp.zeros((d_model,), jnp.float32),
        ln2_g=jnp.ones((d_model,), jnp.float32), ln2_b=jnp.zeros((d_model,), jnp.float32),
    )


def _dec_layer_params(key, d_model, d_ff):
    ks = jax.random.split(key, 4)
    w1, b1 = _dense(ks[2], d_model, d_ff)
    w2, b2 = _dense(ks[3], d_ff, d_model)
    return dict(
        sa=_self_attn_params(ks[0], d_model),
        ca=_cross_attn_params(ks[1], d_model),
        w1=w1, b1=b1, w2=w2, b2=b2,
        ln1_g=jnp.ones((d_model,), jnp.float32), ln1_b=jnp.zeros((d_model,), jnp.float32),
        ln2_g=jnp.ones((d_model,), jnp.float32), ln2_b=jnp.zeros((d_model,), jnp.float32),
        ln3_g=jnp.ones((d_model,), jnp.float32), ln3_b=jnp.zeros((d_model,), jnp.float32),
    )


def make_sinusoidal_pe(max_len, d_model):
    pos = jnp.arange(max_len, dtype=jnp.float32)[:, None]
    i = jnp.arange(0, d_model, 2, dtype=jnp.float32)[None, :]
    div = jnp.exp(-math.log(10000.0) * i / d_model)
    pe = jnp.zeros((max_len, d_model), jnp.float32)
    pe = pe.at[:, 0::2].set(jnp.sin(pos * div))
    pe = pe.at[:, 1::2].set(jnp.cos(pos * div))
    return pe


def init_params(key, heads, d_model, layers, input_vocab, target_vocab, max_seq_len):
    d_ff = 4 * d_model
    ks = jax.random.split(key, 4 + 2 * layers)
    inp_emb = jax.random.normal(ks[0], (input_vocab, d_model), jnp.float32) * 0.02
    trg_emb = jax.random.normal(ks[1], (target_vocab, d_model), jnp.float32) * 0.02
    wf, bf = _dense(ks[2], d_model, target_vocab)
    enc_layers = [_enc_layer_params(ks[4 + i], d_model, d_ff) for i in range(layers)]
    dec_layers = [_dec_layer_params(ks[4 + layers + i], d_model, d_ff) for i in range(layers)]
    return dict(
        inp_emb=inp_emb, trg_emb=trg_emb, wf=wf, bf=bf,
        pe=make_sinusoidal_pe(max_seq_len, d_model),
        enc_layers=enc_layers, dec_layers=dec_layers,
    )


# ---------------------------------------------------------------------------
# Full forward pass (mirrors Seq2SeqTransformer.forward)
# ---------------------------------------------------------------------------
def seq2seq_forward(params, src, trg, *, heads, d_model, pad_idx=1):
    B, Ts = src.shape
    _, Tt = trg.shape
    D = d_model

    # Only O(B*T) pad vectors are materialized; the additive causal/pad bias is
    # rebuilt inside the attention kernels.
    src_pad = (src == pad_idx).astype(jnp.float32).reshape(B, 1, Ts)
    trg_pad = (trg == pad_idx).astype(jnp.float32).reshape(B, 1, Tt)

    # token embedding (scaled) + sinusoidal positional encoding
    # TODO(synk): dropout inside PositionalEncoding is identity (eval mode).
    scale = math.sqrt(D)
    x = jnp.take(params["inp_emb"], src, axis=0) * scale + params["pe"][:Ts][None]
    y = jnp.take(params["trg_emb"], trg, axis=0) * scale + params["pe"][:Tt][None]

    mem = x
    for lp in params["enc_layers"]:
        mem = encoder_layer(mem, lp, src_pad, heads)

    out = y
    for lp in params["dec_layers"]:
        out = decoder_layer(out, mem, lp, trg_pad, src_pad, heads)

    logits = pallas_linear(out.reshape(B * Tt, D), params["wf"], params["bf"])
    return logits.reshape(B, Tt, -1)


# ---------------------------------------------------------------------------
if __name__ == "__main__":
    heads = 4
    d_model = 32
    layers = 2
    input_vocab_size = 50
    target_vocab_size = 60
    max_seq_len = 16
    B, Ts, Tt = 2, 8, 8
    pad_idx = 1

    key = jax.random.PRNGKey(0)
    kp, ks, kt = jax.random.split(key, 3)
    params = init_params(kp, heads, d_model, layers,
                         input_vocab_size, target_vocab_size, max_seq_len)

    # token ids in [2, vocab); tail tokens set to pad_idx=1 to exercise masking
    src = jax.random.randint(ks, (B, Ts), 2, input_vocab_size, dtype=jnp.int32)
    trg = jax.random.randint(kt, (B, Tt), 2, target_vocab_size, dtype=jnp.int32)
    src = src.at[1, -2:].set(pad_idx)
    trg = trg.at[1, -3:].set(pad_idx)

    fwd = jax.jit(functools.partial(seq2seq_forward, heads=heads,
                                    d_model=d_model, pad_idx=pad_idx))
    logits = fwd(params, src, trg)
    logits = jax.block_until_ready(logits)

    assert logits.shape == (B, Tt, target_vocab_size)
    assert bool(jnp.all(jnp.isfinite(logits)))
    print("KERNEL_OK")
</pallas_src>

<mosaic_0001>
module attributes {stable_mosaic.version = 11 : i64} {
  func.func @_linear_kernel(%arg0: i32, %arg1: i32, %arg2: i32, %arg3: memref<16x32xf32, #tpu.memory_space<vmem>>, %arg4: memref<32x32xf32, #tpu.memory_space<vmem>>, %arg5: memref<1x32xf32, #tpu.memory_space<vmem>>, %arg6: memref<16x32xf32, #tpu.memory_space<vmem>>, %arg7: memref<16x32xf32, #tpu.memory_space<vmem>>) attributes {dimension_semantics = [#tpu.dimension_semantics<parallel>, #tpu.dimension_semantics<parallel>, #tpu.dimension_semantics<arbitrary>], iteration_bounds = array<i64: 1, 1, 1>, scalar_prefetch = 0 : i64, scratch_operands = 1 : i64, tpu.core_type = #tpu.core_type<tc>, window_params = [{transform_indices = @transform_0, window_bounds = array<i64: 16, 32>}, {transform_indices = @transform_1, window_bounds = array<i64: 32, 32>}, {transform_indices = @transform_2, window_bounds = array<i64: 1, 32>}, {transform_indices = @transform_3, window_bounds = array<i64: 16, 32>}]} {
    %c0_i32 = arith.constant 0 : i32
    %0 = arith.cmpi eq, %arg2, %c0_i32 : i32
    %1 = arith.extui %0 : i1 to i32
    %c0_i32_0 = arith.constant 0 : i32
    %2 = arith.cmpi ne, %1, %c0_i32_0 : i32
    scf.if %2 {
      %cst_10 = arith.constant 0.000000e+00 : f32
      %12 = vector.broadcast %cst_10 : f32 to vector<16x32xf32>
      %c0_11 = arith.constant 0 : index
      %c0_12 = arith.constant 0 : index
      %13 = vector.load %arg7[%c0_11, %c0_12] : memref<16x32xf32, #tpu.memory_space<vmem>>, vector<16x32xf32>
      tpu.vector_store %arg7[%c0_11, %c0_12], %12 {strides = array<i32>} : memref<16x32xf32, #tpu.memory_space<vmem>>, vector<16x32xf32>,
    } else {
    }
    %c0 = arith.constant 0 : index
    %c0_1 = arith.constant 0 : index
    %3 = vector.load %arg7[%c0, %c0_1] : memref<16x32xf32, #tpu.memory_space<vmem>>, vector<16x32xf32>
    %c0_2 = arith.constant 0 : index
    %c0_3 = arith.constant 0 : index
    %4 = vector.load %arg3[%c0_2, %c0_3] : memref<16x32xf32, #tpu.memory_space<vmem>>, vector<16x32xf32>
    %c0_4 = arith.constant 0 : index
    %c0_5 = arith.constant 0 : index
    %5 = vector.load %arg4[%c0_4, %c0_5] : memref<32x32xf32, #tpu.memory_space<vmem>>, vector<32x32xf32>
    %cst = arith.constant dense<0.000000e+00> : vector<16x32xf32>
    %6 = tpu.matmul %4, %5, %cst {dimension_numbers = #tpu.dot_dimension_numbers<[1], [0], [0], [1], [0, 0, 1, 1], [], []>} : vector<16x32xf32>, vector<32x32xf32>, vector<16x32xf32> -> vector<16x32xf32>
    %7 = arith.addf %3, %6 : vector<16x32xf32>
    %c0_6 = arith.constant 0 : index
    %c0_7 = arith.constant 0 : index
    %8 = vector.load %arg7[%c0_6, %c0_7] : memref<16x32xf32, #tpu.memory_space<vmem>>, vector<16x32xf32>
    tpu.vector_store %arg7[%c0_6, %c0_7], %7 {strides = array<i32>} : memref<16x32xf32, #tpu.memory_space<vmem>>, vector<16x32xf32>,
    %c0_i32_8 = arith.constant 0 : i32
    %9 = arith.cmpi eq, %arg2, %c0_i32_8 : i32
    %10 = arith.extui %9 : i1 to i32
    %c0_i32_9 = arith.constant 0 : i32
    %11 = arith.cmpi ne, %10, %c0_i32_9 : i32
    scf.if %11 {
      %c0_10 = arith.constant 0 : index
      %c0_11 = arith.constant 0 : index
      %12 = vector.load %arg7[%c0_10, %c0_11] : memref<16x32xf32, #tpu.memory_space<vmem>>, vector<16x32xf32>
      %c0_12 = arith.constant 0 : index
      %c0_13 = arith.constant 0 : index
      %13 = vector.load %arg5[%c0_12, %c0_13] : memref<1x32xf32, #tpu.memory_space<vmem>>, vector<1x32xf32>
      %14 = vector.broadcast %13 : vector<1x32xf32> to vector<16x32xf32>
      %15 = arith.addf %12, %14 : vector<16x32xf32>
      %c0_14 = arith.constant 0 : index
      %c0_15 = arith.constant 0 : index
      %16 = vector.load %arg6[%c0_14, %c0_15] : memref<16x32xf32, #tpu.memory_space<vmem>>, vector<16x32xf32>
      tpu.vector_store %arg6[%c0_14, %c0_15], %15 {strides = array<i32>} : memref<16x32xf32, #tpu.memory_space<vmem>>, vector<16x32xf32>,
    } else {
    }
    return
  }
  func.func @transform_0(%arg0: i32, %arg1: i32, %arg2: i32) -> (i32, i32) {
    %c0_i32 = arith.constant 0 : i32
    return %arg0, %arg2 : i32, i32
  }
  func.func @transform_1(%arg0: i32, %arg1: i32, %arg2: i32) -> (i32, i32) {
    %c0_i32 = arith.constant 0 : i32
    return %arg2, %arg1 : i32, i32
  }
  func.func @transform_2(%arg0: i32, %arg1: i32, %arg2: i32) -> (i32, i32) {
    %c0_i32 = arith.constant 0 : i32
    %c0_i32_0 = arith.constant 0 : i32
    return %c0_i32, %arg1 : i32, i32
  }
  func.func @transform_3(%arg0: i32, %arg1: i32, %arg2: i32) -> (i32, i32) {
    %c0_i32 = arith.constant 0 : i32
    return %arg0, %arg1 : i32, i32
  }
}

module attributes {stable_mosaic.version = 11 : i64} {
  func.func @_self_attn_kernel(%arg0: i32, %arg1: memref<1x8x96xf32, #tpu.memory_space<vmem>>, %arg2: memref<1x1x8xf32, #tpu.memory_space<vmem>>, %arg3: memref<1x8x32xf32, #tpu.memory_space<vmem>>) attributes {dimension_semantics = [#tpu.dimension_semantics<parallel>], iteration_bounds = array<i64: 2>, scalar_prefetch = 0 : i64, scratch_operands = 0 : i64, tpu.core_type = #tpu.core_type<tc>, window_params = [{transform_indices = @transform_0, window_bounds = array<i64: 1, 8, 96>}, {transform_indices = @transform_1, window_bounds = array<i64: 1, 1, 8>}, {transform_indices = @transform_2, window_bounds = array<i64: 1, 8, 32>}]} {
    %c0 = arith.constant 0 : index
    %c0_0 = arith.constant 0 : index
    %c0_1 = arith.constant 0 : index
    %0 = vector.load %arg1[%c0, %c0_0, %c0_1] : memref<1x8x96xf32, #tpu.memory_space<vmem>>, vector<1x8x96xf32>
    %1 = vector.shape_cast %0 : vector<1x8x96xf32> to vector<8x96xf32>
    %2 = vector.extract_strided_slice %1 {offsets = [0, 0], sizes = [8, 32], strides = [1, 1]} : vector<8x96xf32> to vector<8x32xf32>
    %3 = vector.extract_strided_slice %1 {offsets = [0, 32], sizes = [8, 32], strides = [1, 1]} : vector<8x96xf32> to vector<8x32xf32>
    %4 = vector.extract_strided_slice %1 {offsets = [0, 64], sizes = [8, 32], strides = [1, 1]} : vector<8x96xf32> to vector<8x32xf32>
    %c0_2 = arith.constant 0 : index
    %c0_3 = arith.constant 0 : index
    %c0_4 = arith.constant 0 : index
    %5 = vector.load %arg2[%c0_2, %c0_3, %c0_4] : memref<1x1x8xf32, #tpu.memory_space<vmem>>, vector<1x1x8xf32>
    %6 = vector.shape_cast %5 : vector<1x1x8xf32> to vector<1x8xf32>
    %cst = arith.constant 0.000000e+00 : f32
    %7 = vector.broadcast %cst : f32 to vector<1x8xf32>
    %8 = arith.cmpf ogt, %6, %7 : vector<1x8xf32>
    %cst_5 = arith.constant -1.000000e+09 : f32
    %cst_6 = arith.constant 0.000000e+00 : f32
    %9 = vector.broadcast %cst_5 : f32 to vector<1x8xf32>
    %10 = vector.broadcast %cst_6 : f32 to vector<1x8xf32>
    %11 = arith.select %8, %9, %10 : vector<1x8xi1>, vector<1x8xf32>
    %12 = vector.extract_strided_slice %2 {offsets = [0, 0], sizes = [8, 8], strides = [1, 1]} : vector<8x32xf32> to vector<8x8xf32>
    %13 = vector.extract_strided_slice %3 {offsets = [0, 0], sizes = [8, 8], strides = [1, 1]} : vector<8x32xf32> to vector<8x8xf32>
    %14 = vector.extract_strided_slice %4 {offsets = [0, 0], sizes = [8, 8], strides = [1, 1]} : vector<8x32xf32> to vector<8x8xf32>
    %cst_7 = arith.constant dense<0.000000e+00> : vector<8x8xf32>
    %15 = tpu.matmul %12, %13, %cst_7 {dimension_numbers = #tpu.dot_dimension_numbers<[1], [1], [0], [0], [0, 0, 1, 0], [], []>} : vector<8x8xf32>, vector<8x8xf32>, vector<8x8xf32> -> vector<8x8xf32>
    %cst_8 = arith.constant 0.353553385 : f32
    %16 = vector.broadcast %cst_8 : f32 to vector<8x8xf32>
    %17 = arith.mulf %15, %16 : vector<8x8xf32>
    %18 = vector.broadcast %11 : vector<1x8xf32> to vector<8x8xf32>
    %19 = arith.addf %17, %18 : vector<8x8xf32>
    %cst_9 = arith.constant dense<0xFF800000> : vector<8xf32>
    %20 = vector.multi_reduction <maximumf>, %19, %cst_9 [1] : vector<8x8xf32> to vector<8xf32>
    %21 = vector.shape_cast %20 : vector<8xf32> to vector<8x1xf32>
    %22 = vector.broadcast %21 : vector<8x1xf32> to vector<8x8xf32>
    %23 = arith.subf %19, %22 : vector<8x8xf32>
    %24 = math.exp %23 : vector<8x8xf32>
    %cst_10 = arith.constant dense<0.000000e+00> : vector<8xf32>
    %25 = vector.multi_reduction <add>, %24, %cst_10 [1] : vector<8x8xf32> to vector<8xf32>
    %26 = vector.shape_cast %25 : vector<8xf32> to vector<8x1xf32>
    %27 = tpu.reciprocal %26 {approx = true} : vector<8x1xf32> -> vector<8x1xf32>
    %28 = vector.broadcast %27 : vector<8x1xf32> to vector<8x8xf32>
    %29 = arith.mulf %24, %28 : vector<8x8xf32>
    %cst_11 = arith.constant dense<0.000000e+00> : vector<8x8xf32>
    %30 = tpu.matmul %29, %14, %cst_11 {dimension_numbers = #tpu.dot_dimension_numbers<[1], [0], [0], [1], [0, 0, 1, 1], [], []>} : vector<8x8xf32>, vector<8x8xf32>, vector<8x8xf32> -> vector<8x8xf32>
    %31 = vector.extract_strided_slice %2 {offsets = [0, 8], sizes = [8, 8], strides = [1, 1]} : vector<8x32xf32> to vector<8x8xf32>
    %32 = vector.extract_strided_slice %3 {offsets = [0, 8], sizes = [8, 8], strides = [1, 1]} : vector<8x32xf32> to vector<8x8xf32>
    %33 = vector.extract_strided_slice %4 {offsets = [0, 8], sizes = [8, 8], strides = [1, 1]} : vector<8x32xf32> to vector<8x8xf32>
    %cst_12 = arith.constant dense<0.000000e+00> : vector<8x8xf32>
    %34 = tpu.matmul %31, %32, %cst_12 {dimension_numbers = #tpu.dot_dimension_numbers<[1], [1], [0], [0], [0, 0, 1, 0], [], []>} : vector<8x8xf32>, vector<8x8xf32>, vector<8x8xf32> -> vector<8x8xf32>
    %cst_13 = arith.constant 0.353553385 : f32
    %35 = vector.broadcast %cst_13 : f32 to vector<8x8xf32>
    %36 = arith.mulf %34, %35 : vector<8x8xf32>
    %37 = vector.broadcast %11 : vector<1x8xf32> to vector<8x8xf32>
    %38 = arith.addf %36, %37 : vector<8x8xf32>
    %cst_14 = arith.constant dense<0xFF800000> : vector<8xf32>
    %39 = vector.multi_reduction <maximumf>, %38, %cst_14 [1] : vector<8x8xf32> to vector<8xf32>
    %40 = vector.shape_cast %39 : vector<8xf32> to vector<8x1xf32>
    %41 = vector.broadcast %40 : vector<8x1xf32> to vector<8x8xf32>
    %42 = arith.subf %38, %41 : vector<8x8xf32>
    %43 = math.exp %42 : vector<8x8xf32>
    %cst_15 = arith.constant dense<0.000000e+00> : vector<8xf32>
    %44 = vector.multi_reduction <add>, %43, %cst_15 [1] : vector<8x8xf32> to vector<8xf32>
    %45 = vector.shape_cast %44 : vector<8xf32> to vector<8x1xf32>
    %46 = tpu.reciprocal %45 {approx = true} : vector<8x1xf32> -> vector<8x1xf32>
    %47 = vector.broadcast %46 : vector<8x1xf32> to vector<8x8xf32>
    %48 = arith.mulf %43, %47 : vector<8x8xf32>
    %cst_16 = arith.constant dense<0.000000e+00> : vector<8x8xf32>
    %49 = tpu.matmul %48, %33, %cst_16 {dimension_numbers = #tpu.dot_dimension_numbers<[1], [0], [0], [1], [0, 0, 1, 1], [], []>} : vector<8x8xf32>, vector<8x8xf32>, vector<8x8xf32> -> vector<8x8xf32>
    %50 = vector.extract_strided_slice %2 {offsets = [0, 16], sizes = [8, 8], strides = [1, 1]} : vector<8x32xf32> to vector<8x8xf32>
    %51 = vector.extract_strided_slice %3 {offsets = [0, 16], sizes = [8, 8], strides = [1, 1]} : vector<8x32xf32> to vector<8x8xf32>
    %52 = vector.extract_strided_slice %4 {offsets = [0, 16], sizes = [8, 8], strides = [1, 1]} : vector<8x32xf32> to vector<8x8xf32>
    %cst_17 = arith.constant dense<0.000000e+00> : vector<8x8xf32>
    %53 = tpu.matmul %50, %51, %cst_17 {dimension_numbers = #tpu.dot_dimension_numbers<[1], [1], [0], [0], [0, 0, 1, 0], [], []>} : vector<8x8xf32>, vector<8x8xf32>, vector<8x8xf32> -> vector<8x8xf32>
    %cst_18 = arith.constant 0.353553385 : f32
    %54 = vector.broadcast %cst_18 : f32 to vector<8x8xf32>
    %55 = arith.mulf %53, %54 : vector<8x8xf32>
    %56 = vector.broadcast %11 : vector<1x8xf32> to vector<8x8xf32>
    %57 = arith.addf %55, %56 : vector<8x8xf32>
    %cst_19 = arith.constant dense<0xFF800000> : vector<8xf32>
    %58 = vector.multi_reduction <maximumf>, %57, %cst_19 [1] : vector<8x8xf32> to vector<8xf32>
    %59 = vector.shape_cast %58 : vector<8xf32> to vector<8x1xf32>
    %60 = vector.broadcast %59 : vector<8x1xf32> to vector<8x8xf32>
    %61 = arith.subf %57, %60 : vector<8x8xf32>
    %62 = math.exp %61 : vector<8x8xf32>
    %cst_20 = arith.constant dense<0.000000e+00> : vector<8xf32>
    %63 = vector.multi_reduction <add>, %62, %cst_20 [1] : vector<8x8xf32> to vector<8xf32>
    %64 = vector.shape_cast %63 : vector<8xf32> to vector<8x1xf32>
    %65 = tpu.reciprocal %64 {approx = true} : vector<8x1xf32> -> vector<8x1xf32>
    %66 = vector.broadcast %65 : vector<8x1xf32> to vector<8x8xf32>
    %67 = arith.mulf %62, %66 : vector<8x8xf32>
    %cst_21 = arith.constant dense<0.000000e+00> : vector<8x8xf32>
    %68 = tpu.matmul %67, %52, %cst_21 {dimension_numbers = #tpu.dot_dimension_numbers<[1], [0], [0], [1], [0, 0, 1, 1], [], []>} : vector<8x8xf32>, vector<8x8xf32>, vector<8x8xf32> -> vector<8x8xf32>
    %69 = vector.extract_strided_slice %2 {offsets = [0, 24], sizes = [8, 8], strides = [1, 1]} : vector<8x32xf32> to vector<8x8xf32>
    %70 = vector.extract_strided_slice %3 {offsets = [0, 24], sizes = [8, 8], strides = [1, 1]} : vector<8x32xf32> to vector<8x8xf32>
    %71 = vector.extract_strided_slice %4 {offsets = [0, 24], sizes = [8, 8], strides = [1, 1]} : vector<8x32xf32> to vector<8x8xf32>
    %cst_22 = arith.constant dense<0.000000e+00> : vector<8x8xf32>
    %72 = tpu.matmul %69, %70, %cst_22 {dimension_numbers = #tpu.dot_dimension_numbers<[1], [1], [0], [0], [0, 0, 1, 0], [], []>} : vector<8x8xf32>, vector<8x8xf32>, vector<8x8xf32> -> vector<8x8xf32>
    %cst_23 = arith.constant 0.353553385 : f32
    %73 = vector.broadcast %cst_23 : f32 to vector<8x8xf32>
    %74 = arith.mulf %72, %73 : vector<8x8xf32>
    %75 = vector.broadcast %11 : vector<1x8xf32> to vector<8x8xf32>
    %76 = arith.addf %74, %75 : vector<8x8xf32>
    %cst_24 = arith.constant dense<0xFF800000> : vector<8xf32>
    %77 = vector.multi_reduction <maximumf>, %76, %cst_24 [1] : vector<8x8xf32> to vector<8xf32>
    %78 = vector.shape_cast %77 : vector<8xf32> to vector<8x1xf32>
    %79 = vector.broadcast %78 : vector<8x1xf32> to vector<8x8xf32>
    %80 = arith.subf %76, %79 : vector<8x8xf32>
    %81 = math.exp %80 : vector<8x8xf32>
    %cst_25 = arith.constant dense<0.000000e+00> : vector<8xf32>
    %82 = vector.multi_reduction <add>, %81, %cst_25 [1] : vector<8x8xf32> to vector<8xf32>
    %83 = vector.shape_cast %82 : vector<8xf32> to vector<8x1xf32>
    %84 = tpu.reciprocal %83 {approx = true} : vector<8x1xf32> -> vector<8x1xf32>
    %85 = vector.broadcast %84 : vector<8x1xf32> to vector<8x8xf32>
    %86 = arith.mulf %81, %85 : vector<8x8xf32>
    %cst_26 = arith.constant dense<0.000000e+00> : vector<8x8xf32>
    %87 = tpu.matmul %86, %71, %cst_26 {dimension_numbers = #tpu.dot_dimension_numbers<[1], [0], [0], [1], [0, 0, 1, 1], [], []>} : vector<8x8xf32>, vector<8x8xf32>, vector<8x8xf32> -> vector<8x8xf32>
    %88 = tpu.concatenate %30, %49, %68, %87 in 1 : vector<8x8xf32>, vector<8x8xf32>, vector<8x8xf32>, vector<8x8xf32> -> vector<8x32xf32>
    %c0_27 = arith.constant 0 : index
    %c0_28 = arith.constant 0 : index
    %c0_29 = arith.constant 0 : index
    %89 = vector.load %arg3[%c0_27, %c0_28, %c0_29] : memref<1x8x32xf32, #tpu.memory_space<vmem>>, vector<1x8x32xf32>
    %90 = vector.shape_cast %89 : vector<1x8x32xf32> to vector<8x32xf32>
    %91 = vector.shape_cast %88 : vector<8x32xf32> to vector<1x8x32xf32>
    tpu.vector_store %arg3[%c0_27, %c0_28, %c0_29], %91 {strides = array<i32>} : memref<1x8x32xf32, #tpu.memory_space<vmem>>, vector<1x8x32xf32>,
    return
  }
  func.func @transform_0(%arg0: i32) -> (i32, i32, i32) {
    %c0_i32 = arith.constant 0 : i32
    %c0_i32_0 = arith.constant 0 : i32
    %c0_i32_1 = arith.constant 0 : i32
    return %arg0, %c0_i32, %c0_i32_0 : i32, i32, i32
  }
  func.func @transform_1(%arg0: i32) -> (i32, i32, i32) {
    %c0_i32 = arith.constant 0 : i32
    %c0_i32_0 = arith.constant 0 : i32
    %c0_i32_1 = arith.constant 0 : i32
    return %arg0, %c0_i32, %c0_i32_0 : i32, i32, i32
  }
  func.func @transform_2(%arg0: i32) -> (i32, i32, i32) {
    %c0_i32 = arith.constant 0 : i32
    %c0_i32_0 = arith.constant 0 : i32
    %c0_i32_1 = arith.constant 0 : i32
    return %arg0, %c0_i32, %c0_i32_0 : i32, i32, i32
  }
}

module attributes {stable_mosaic.version = 11 : i64} {
  func.func @_linear_kernel(%arg0: i32, %arg1: i32, %arg2: i32, %arg3: memref<16x32xf32, #tpu.memory_space<vmem>>, %arg4: memref<32x96xf32, #tpu.memory_space<vmem>>, %arg5: memref<1x96xf32, #tpu.memory_space<vmem>>, %arg6: memref<16x96xf32, #tpu.memory_space<vmem>>, %arg7: memref<16x96xf32, #tpu.memory_space<vmem>>) attributes {dimension_semantics = [#tpu.dimension_semantics<parallel>, #tpu.dimension_semantics<parallel>, #tpu.dimension_semantics<arbitrary>], iteration_bounds = array<i64: 1, 1, 1>, scalar_prefetch = 0 : i64, scratch_operands = 1 : i64, tpu.core_type = #tpu.core_type<tc>, window_params = [{transform_indices = @transform_0, window_bounds = array<i64: 16, 32>}, {transform_indices = @transform_1, window_bounds = array<i64: 32, 96>}, {transform_indices = @transform_2, window_bounds = array<i64: 1, 96>}, {transform_indices = @transform_3, window_bounds = array<i64: 16, 96>}]} {
    %c0_i32 = arith.constant 0 : i32
    %0 = arith.cmpi eq, %arg2, %c0_i32 : i32
    %1 = arith.extui %0 : i1 to i32
    %c0_i32_0 = arith.constant 0 : i32
    %2 = arith.cmpi ne, %1, %c0_i32_0 : i32
    scf.if %2 {
      %cst_10 = arith.constant 0.000000e+00 : f32
      %12 = vector.broadcast %cst_10 : f32 to vector<16x96xf32>
      %c0_11 = arith.constant 0 : index
      %c0_12 = arith.constant 0 : index
      %13 = vector.load %arg7[%c0_11, %c0_12] : memref<16x96xf32, #tpu.memory_space<vmem>>, vector<16x96xf32>
      tpu.vector_store %arg7[%c0_11, %c0_12], %12 {strides = array<i32>} : memref<16x96xf32, #tpu.memory_space<vmem>>, vector<16x96xf32>,
    } else {
    }
    %c0 = arith.constant 0 : index
    %c0_1 = arith.constant 0 : index
    %3 = vector.load %arg7[%c0, %c0_1] : memref<16x96xf32, #tpu.memory_space<vmem>>, vector<16x96xf32>
    %c0_2 = arith.constant 0 : index
    %c0_3 = arith.constant 0 : index
    %4 = vector.load %arg3[%c0_2, %c0_3] : memref<16x32xf32, #tpu.memory_space<vmem>>, vector<16x32xf32>
    %c0_4 = arith.constant 0 : index
    %c0_5 = arith.constant 0 : index
    %5 = vector.load %arg4[%c0_4, %c0_5] : memref<32x96xf32, #tpu.memory_space<vmem>>, vector<32x96xf32>
    %cst = arith.constant dense<0.000000e+00> : vector<16x96xf32>
    %6 = tpu.matmul %4, %5, %cst {dimension_numbers = #tpu.dot_dimension_numbers<[1], [0], [0], [1], [0, 0, 1, 1], [], []>} : vector<16x32xf32>, vector<32x96xf32>, vector<16x96xf32> -> vector<16x96xf32>
    %7 = arith.addf %3, %6 : vector<16x96xf32>
    %c0_6 = arith.constant 0 : index
    %c0_7 = arith.constant 0 : index
    %8 = vector.load %arg7[%c0_6, %c0_7] : memref<16x96xf32, #tpu.memory_space<vmem>>, vector<16x96xf32>
    tpu.vector_store %arg7[%c0_6, %c0_7], %7 {strides = array<i32>} : memref<16x96xf32, #tpu.memory_space<vmem>>, vector<16x96xf32>,
    %c0_i32_8 = arith.constant 0 : i32
    %9 = arith.cmpi eq, %arg2, %c0_i32_8 : i32
    %10 = arith.extui %9 : i1 to i32
    %c0_i32_9 = arith.constant 0 : i32
    %11 = arith.cmpi ne, %10, %c0_i32_9 : i32
    scf.if %11 {
      %c0_10 = arith.constant 0 : index
      %c0_11 = arith.constant 0 : index
      %12 = vector.load %arg7[%c0_10, %c0_11] : memref<16x96xf32, #tpu.memory_space<vmem>>, vector<16x96xf32>
      %c0_12 = arith.constant 0 : index
      %c0_13 = arith.constant 0 : index
      %13 = vector.load %arg5[%c0_12, %c0_13] : memref<1x96xf32, #tpu.memory_space<vmem>>, vector<1x96xf32>
      %14 = vector.broadcast %13 : vector<1x96xf32> to vector<16x96xf32>
      %15 = arith.addf %12, %14 : vector<16x96xf32>
      %c0_14 = arith.constant 0 : index
      %c0_15 = arith.constant 0 : index
      %16 = vector.load %arg6[%c0_14, %c0_15] : memref<16x96xf32, #tpu.memory_space<vmem>>, vector<16x96xf32>
      tpu.vector_store %arg6[%c0_14, %c0_15], %15 {strides = array<i32>} : memref<16x96xf32, #tpu.memory_space<vmem>>, vector<16x96xf32>,
    } else {
    }
    return
  }
  func.func @transform_0(%arg0: i32, %arg1: i32, %arg2: i32) -> (i32, i32) {
    %c0_i32 = arith.constant 0 : i32
    return %arg0, %arg2 : i32, i32
  }
  func.func @transform_1(%arg0: i32, %arg1: i32, %arg2: i32) -> (i32, i32) {
    %c0_i32 = arith.constant 0 : i32
    return %arg2, %arg1 : i32, i32
  }
  func.func @transform_2(%arg0: i32, %arg1: i32, %arg2: i32) -> (i32, i32) {
    %c0_i32 = arith.constant 0 : i32
    %c0_i32_0 = arith.constant 0 : i32
    return %c0_i32, %arg1 : i32, i32
  }
  func.func @transform_3(%arg0: i32, %arg1: i32, %arg2: i32) -> (i32, i32) {
    %c0_i32 = arith.constant 0 : i32
    return %arg0, %arg1 : i32, i32
  }
}

module attributes {stable_mosaic.version = 11 : i64} {
  func.func @_add_layernorm_kernel(%arg0: i32, %arg1: memref<16x32xf32, #tpu.memory_space<vmem>>, %arg2: memref<16x32xf32, #tpu.memory_space<vmem>>, %arg3: memref<1x32xf32, #tpu.memory_space<vmem>>, %arg4: memref<1x32xf32, #tpu.memory_space<vmem>>, %arg5: memref<16x32xf32, #tpu.memory_space<vmem>>) attributes {dimension_semantics = [#tpu.dimension_semantics<parallel>], iteration_bounds = array<i64: 1>, scalar_prefetch = 0 : i64, scratch_operands = 0 : i64, tpu.core_type = #tpu.core_type<tc>, window_params = [{transform_indices = @transform_0, window_bounds = array<i64: 16, 32>}, {transform_indices = @transform_1, window_bounds = array<i64: 16, 32>}, {pipeline_mode = #tpu.pipeline_mode<synchronous>, transform_indices = @transform_2, window_bounds = array<i64: 1, 32>}, {pipeline_mode = #tpu.pipeline_mode<synchronous>, transform_indices = @transform_3, window_bounds = array<i64: 1, 32>}, {transform_indices = @transform_4, window_bounds = array<i64: 16, 32>}]} {
    %c0 = arith.constant 0 : index
    %c0_0 = arith.constant 0 : index
    %0 = vector.load %arg1[%c0, %c0_0] : memref<16x32xf32, #tpu.memory_space<vmem>>, vector<16x32xf32>
    %c0_1 = arith.constant 0 : index
    %c0_2 = arith.constant 0 : index
    %1 = vector.load %arg2[%c0_1, %c0_2] : memref<16x32xf32, #tpu.memory_space<vmem>>, vector<16x32xf32>
    %2 = arith.addf %0, %1 : vector<16x32xf32>
    %cst = arith.constant dense<0.000000e+00> : vector<16xf32>
    %3 = vector.multi_reduction <add>, %2, %cst [1] : vector<16x32xf32> to vector<16xf32>
    %4 = vector.shape_cast %3 : vector<16xf32> to vector<16x1xf32>
    %cst_3 = arith.constant 3.200000e+01 : f32
    %5 = vector.broadcast %cst_3 : f32 to vector<16x1xf32>
    %6 = arith.divf %4, %5 : vector<16x1xf32>
    %7 = arith.mulf %2, %2 : vector<16x32xf32>
    %cst_4 = arith.constant dense<0.000000e+00> : vector<16xf32>
    %8 = vector.multi_reduction <add>, %7, %cst_4 [1] : vector<16x32xf32> to vector<16xf32>
    %9 = vector.shape_cast %8 : vector<16xf32> to vector<16x1xf32>
    %cst_5 = arith.constant 3.200000e+01 : f32
    %10 = vector.broadcast %cst_5 : f32 to vector<16x1xf32>
    %11 = arith.divf %9, %10 : vector<16x1xf32>
    %12 = arith.mulf %6, %6 : vector<16x1xf32>
    %13 = arith.subf %11, %12 : vector<16x1xf32>
    %14 = vector.broadcast %6 : vector<16x1xf32> to vector<16x32xf32>
    %15 = arith.subf %2, %14 : vector<16x32xf32>
    %cst_6 = arith.constant 9.99999974E-6 : f32
    %16 = vector.broadcast %cst_6 : f32 to vector<16x1xf32>
    %17 = arith.addf %13, %16 : vector<16x1xf32>
    %18 = math.rsqrt %17 : vector<16x1xf32>
    %19 = vector.broadcast %18 : vector<16x1xf32> to vector<16x32xf32>
    %20 = arith.mulf %15, %19 : vector<16x32xf32>
    %c0_7 = arith.constant 0 : index
    %c0_8 = arith.constant 0 : index
    %21 = vector.load %arg3[%c0_7, %c0_8] : memref<1x32xf32, #tpu.memory_space<vmem>>, vector<1x32xf32>
    %22 = vector.broadcast %21 : vector<1x32xf32> to vector<16x32xf32>
    %23 = arith.mulf %20, %22 : vector<16x32xf32>
    %c0_9 = arith.constant 0 : index
    %c0_10 = arith.constant 0 : index
    %24 = vector.load %arg4[%c0_9, %c0_10] : memref<1x32xf32, #tpu.memory_space<vmem>>, vector<1x32xf32>
    %25 = vector.broadcast %24 : vector<1x32xf32> to vector<16x32xf32>
    %26 = arith.addf %23, %25 : vector<16x32xf32>
    %c0_11 = arith.constant 0 : index
    %c0_12 = arith.constant 0 : index
    %27 = vector.load %arg5[%c0_11, %c0_12] : memref<16x32xf32, #tpu.memory_space<vmem>>, vector<16x32xf32>
    tpu.vector_store %arg5[%c0_11, %c0_12], %26 {strides = array<i32>} : memref<16x32xf32, #tpu.memory_space<vmem>>, vector<16x32xf32>,
    return
  }
  func.func @transform_0(%arg0: i32) -> (i32, i32) {
    %c0_i32 = arith.constant 0 : i32
    %c0_i32_0 = arith.constant 0 : i32
    return %arg0, %c0_i32 : i32, i32
  }
  func.func @transform_1(%arg0: i32) -> (i32, i32) {
    %c0_i32 = arith.constant 0 : i32
    %c0_i32_0 = arith.constant 0 : i32
    return %arg0, %c0_i32 : i32, i32
  }
  func.func @transform_2(%arg0: i32) -> (i32, i32) {
    %c0_i32 = arith.constant 0 : i32
    %c0_i32_0 = arith.constant 0 : i32
    %c0_i32_1 = arith.constant 0 : i32
    return %c0_i32, %c0_i32_0 : i32, i32
  }
  func.func @transform_3(%arg0: i32) -> (i32, i32) {
    %c0_i32 = arith.constant 0 : i32
    %c0_i32_0 = arith.constant 0 : i32
    %c0_i32_1 = arith.constant 0 : i32
    return %c0_i32, %c0_i32_0 : i32, i32
  }
  func.func @transform_4(%arg0: i32) -> (i32, i32) {
    %c0_i32 = arith.constant 0 : i32
    %c0_i32_0 = arith.constant 0 : i32
    return %arg0, %c0_i32 : i32, i32
  }
}

module attributes {stable_mosaic.version = 11 : i64} {
  func.func @_ffn_kernel(%arg0: i32, %arg1: memref<16x32xf32, #tpu.memory_space<vmem>>, %arg2: memref<32x128xf32, #tpu.memory_space<vmem>>, %arg3: memref<1x128xf32, #tpu.memory_space<vmem>>, %arg4: memref<128x32xf32, #tpu.memory_space<vmem>>, %arg5: memref<1x32xf32, #tpu.memory_space<vmem>>, %arg6: memref<16x32xf32, #tpu.memory_space<vmem>>) attributes {dimension_semantics = [#tpu.dimension_semantics<parallel>], iteration_bounds = array<i64: 1>, scalar_prefetch = 0 : i64, scratch_operands = 0 : i64, tpu.core_type = #tpu.core_type<tc>, window_params = [{transform_indices = @transform_0, window_bounds = array<i64: 16, 32>}, {pipeline_mode = #tpu.pipeline_mode<synchronous>, transform_indices = @transform_1, window_bounds = array<i64: 32, 128>}, {pipeline_mode = #tpu.pipeline_mode<synchronous>, transform_indices = @transform_2, window_bounds = array<i64: 1, 128>}, {pipeline_mode = #tpu.pipeline_mode<synchronous>, transform_indices = @transform_3, window_bounds = array<i64: 128, 32>}, {pipeline_mode = #tpu.pipeline_mode<synchronous>, transform_indices = @transform_4, window_bounds = array<i64: 1, 32>}, {transform_indices = @transform_5, window_bounds = array<i64: 16, 32>}]} {
    %c0 = arith.constant 0 : index
    %c0_0 = arith.constant 0 : index
    %0 = vector.load %arg1[%c0, %c0_0] : memref<16x32xf32, #tpu.memory_space<vmem>>, vector<16x32xf32>
    %c0_1 = arith.constant 0 : index
    %c0_2 = arith.constant 0 : index
    %1 = vector.load %arg2[%c0_1, %c0_2] : memref<32x128xf32, #tpu.memory_space<vmem>>, vector<32x128xf32>
    %cst = arith.constant dense<0.000000e+00> : vector<16x128xf32>
    %2 = tpu.matmul %0, %1, %cst {dimension_numbers = #tpu.dot_dimension_numbers<[1], [0], [0], [1], [0, 0, 1, 1], [], []>} : vector<16x32xf32>, vector<32x128xf32>, vector<16x128xf32> -> vector<16x128xf32>
    %c0_3 = arith.constant 0 : index
    %c0_4 = arith.constant 0 : index
    %3 = vector.load %arg3[%c0_3, %c0_4] : memref<1x128xf32, #tpu.memory_space<vmem>>, vector<1x128xf32>
    %4 = vector.broadcast %3 : vector<1x128xf32> to vector<16x128xf32>
    %5 = arith.addf %2, %4 : vector<16x128xf32>
    %cst_5 = arith.constant 0.000000e+00 : f32
    %6 = vector.broadcast %cst_5 : f32 to vector<16x128xf32>
    %7 = arith.maximumf %5, %6 : vector<16x128xf32>
    %c0_6 = arith.constant 0 : index
    %c0_7 = arith.constant 0 : index
    %8 = vector.load %arg4[%c0_6, %c0_7] : memref<128x32xf32, #tpu.memory_space<vmem>>, vector<128x32xf32>
    %cst_8 = arith.constant dense<0.000000e+00> : vector<16x32xf32>
    %9 = tpu.matmul %7, %8, %cst_8 {dimension_numbers = #tpu.dot_dimension_numbers<[1], [0], [0], [1], [0, 0, 1, 1], [], []>} : vector<16x128xf32>, vector<128x32xf32>, vector<16x32xf32> -> vector<16x32xf32>
    %c0_9 = arith.constant 0 : index
    %c0_10 = arith.constant 0 : index
    %10 = vector.load %arg5[%c0_9, %c0_10] : memref<1x32xf32, #tpu.memory_space<vmem>>, vector<1x32xf32>
    %11 = vector.broadcast %10 : vector<1x32xf32> to vector<16x32xf32>
    %12 = arith.addf %9, %11 : vector<16x32xf32>
    %c0_11 = arith.constant 0 : index
    %c0_12 = arith.constant 0 : index
    %13 = vector.load %arg6[%c0_11, %c0_12] : memref<16x32xf32, #tpu.memory_space<vmem>>, vector<16x32xf32>
    tpu.vector_store %arg6[%c0_11, %c0_12], %12 {strides = array<i32>} : memref<16x32xf32, #tpu.memory_space<vmem>>, vector<16x32xf32>,
    return
  }
  func.func @transform_0(%arg0: i32) -> (i32, i32) {
    %c0_i32 = arith.constant 0 : i32
    %c0_i32_0 = arith.constant 0 : i32
    return %arg0, %c0_i32 : i32, i32
  }
  func.func @transform_1(%arg0: i32) -> (i32, i32) {
    %c0_i32 = arith.constant 0 : i32
    %c0_i32_0 = arith.constant 0 : i32
    %c0_i32_1 = arith.constant 0 : i32
    return %c0_i32, %c0_i32_0 : i32, i32
  }
  func.func @transform_2(%arg0: i32) -> (i32, i32) {
    %c0_i32 = arith.constant 0 : i32
    %c0_i32_0 = arith.constant 0 : i32
    %c0_i32_1 = arith.constant 0 : i32
    return %c0_i32, %c0_i32_0 : i32, i32
  }
  func.func @transform_3(%arg0: i32) -> (i32, i32) {
    %c0_i32 = arith.constant 0 : i32
    %c0_i32_0 = arith.constant 0 : i32
    %c0_i32_1 = arith.constant 0 : i32
    return %c0_i32, %c0_i32_0 : i32, i32
  }
  func.func @transform_4(%arg0: i32) -> (i32, i32) {
    %c0_i32 = arith.constant 0 : i32
    %c0_i32_0 = arith.constant 0 : i32
    %c0_i32_1 = arith.constant 0 : i32
    return %c0_i32, %c0_i32_0 : i32, i32
  }
  func.func @transform_5(%arg0: i32) -> (i32, i32) {
    %c0_i32 = arith.constant 0 : i32
    %c0_i32_0 = arith.constant 0 : i32
    return %arg0, %c0_i32 : i32, i32
  }
}

module attributes {stable_mosaic.version = 11 : i64} {
  func.func @_linear_kernel(%arg0: i32, %arg1: i32, %arg2: i32, %arg3: memref<16x32xf32, #tpu.memory_space<vmem>>, %arg4: memref<32x64xf32, #tpu.memory_space<vmem>>, %arg5: memref<1x64xf32, #tpu.memory_space<vmem>>, %arg6: memref<16x64xf32, #tpu.memory_space<vmem>>, %arg7: memref<16x64xf32, #tpu.memory_space<vmem>>) attributes {dimension_semantics = [#tpu.dimension_semantics<parallel>, #tpu.dimension_semantics<parallel>, #tpu.dimension_semantics<arbitrary>], iteration_bounds = array<i64: 1, 1, 1>, scalar_prefetch = 0 : i64, scratch_operands = 1 : i64, tpu.core_type = #tpu.core_type<tc>, window_params = [{transform_indices = @transform_0, window_bounds = array<i64: 16, 32>}, {transform_indices = @transform_1, window_bounds = array<i64: 32, 64>}, {transform_indices = @transform_2, window_bounds = array<i64: 1, 64>}, {transform_indices = @transform_3, window_bounds = array<i64: 16, 64>}]} {
    %c0_i32 = arith.constant 0 : i32
    %0 = arith.cmpi eq, %arg2, %c0_i32 : i32
    %1 = arith.extui %0 : i1 to i32
    %c0_i32_0 = arith.constant 0 : i32
    %2 = arith.cmpi ne, %1, %c0_i32_0 : i32
    scf.if %2 {
      %cst_10 = arith.constant 0.000000e+00 : f32
      %12 = vector.broadcast %cst_10 : f32 to vector<16x64xf32>
      %c0_11 = arith.constant 0 : index
      %c0_12 = arith.constant 0 : index
      %13 = vector.load %arg7[%c0_11, %c0_12] : memref<16x64xf32, #tpu.memory_space<vmem>>, vector<16x64xf32>
      tpu.vector_store %arg7[%c0_11, %c0_12], %12 {strides = array<i32>} : memref<16x64xf32, #tpu.memory_space<vmem>>, vector<16x64xf32>,
    } else {
    }
    %c0 = arith.constant 0 : index
    %c0_1 = arith.constant 0 : index
    %3 = vector.load %arg7[%c0, %c0_1] : memref<16x64xf32, #tpu.memory_space<vmem>>, vector<16x64xf32>
    %c0_2 = arith.constant 0 : index
    %c0_3 = arith.constant 0 : index
    %4 = vector.load %arg3[%c0_2, %c0_3] : memref<16x32xf32, #tpu.memory_space<vmem>>, vector<16x32xf32>
    %c0_4 = arith.constant 0 : index
    %c0_5 = arith.constant 0 : index
    %5 = vector.load %arg4[%c0_4, %c0_5] : memref<32x64xf32, #tpu.memory_space<vmem>>, vector<32x64xf32>
    %cst = arith.constant dense<0.000000e+00> : vector<16x64xf32>
    %6 = tpu.matmul %4, %5, %cst {dimension_numbers = #tpu.dot_dimension_numbers<[1], [0], [0], [1], [0, 0, 1, 1], [], []>} : vector<16x32xf32>, vector<32x64xf32>, vector<16x64xf32> -> vector<16x64xf32>
    %7 = arith.addf %3, %6 : vector<16x64xf32>
    %c0_6 = arith.constant 0 : index
    %c0_7 = arith.constant 0 : index
    %8 = vector.load %arg7[%c0_6, %c0_7] : memref<16x64xf32, #tpu.memory_space<vmem>>, vector<16x64xf32>
    tpu.vector_store %arg7[%c0_6, %c0_7], %7 {strides = array<i32>} : memref<16x64xf32, #tpu.memory_space<vmem>>, vector<16x64xf32>,
    %c0_i32_8 = arith.constant 0 : i32
    %9 = arith.cmpi eq, %arg2, %c0_i32_8 : i32
    %10 = arith.extui %9 : i1 to i32
    %c0_i32_9 = arith.constant 0 : i32
    %11 = arith.cmpi ne, %10, %c0_i32_9 : i32
    scf.if %11 {
      %c0_10 = arith.constant 0 : index
      %c0_11 = arith.constant 0 : index
      %12 = vector.load %arg7[%c0_10, %c0_11] : memref<16x64xf32, #tpu.memory_space<vmem>>, vector<16x64xf32>
      %c0_12 = arith.constant 0 : index
      %c0_13 = arith.constant 0 : index
      %13 = vector.load %arg5[%c0_12, %c0_13] : memref<1x64xf32, #tpu.memory_space<vmem>>, vector<1x64xf32>
      %14 = vector.broadcast %13 : vector<1x64xf32> to vector<16x64xf32>
      %15 = arith.addf %12, %14 : vector<16x64xf32>
      %c0_14 = arith.constant 0 : index
      %c0_15 = arith.constant 0 : index
      %16 = vector.load %arg6[%c0_14, %c0_15] : memref<16x64xf32, #tpu.memory_space<vmem>>, vector<16x64xf32>
      tpu.vector_store %arg6[%c0_14, %c0_15], %15 {strides = array<i32>} : memref<16x64xf32, #tpu.memory_space<vmem>>, vector<16x64xf32>,
    } else {
    }
    return
  }
  func.func @transform_0(%arg0: i32, %arg1: i32, %arg2: i32) -> (i32, i32) {
    %c0_i32 = arith.constant 0 : i32
    return %arg0, %arg2 : i32, i32
  }
  func.func @transform_1(%arg0: i32, %arg1: i32, %arg2: i32) -> (i32, i32) {
    %c0_i32 = arith.constant 0 : i32
    return %arg2, %arg1 : i32, i32
  }
  func.func @transform_2(%arg0: i32, %arg1: i32, %arg2: i32) -> (i32, i32) {
    %c0_i32 = arith.constant 0 : i32
    %c0_i32_0 = arith.constant 0 : i32
    return %c0_i32, %arg1 : i32, i32
  }
  func.func @transform_3(%arg0: i32, %arg1: i32, %arg2: i32) -> (i32, i32) {
    %c0_i32 = arith.constant 0 : i32
    return %arg0, %arg1 : i32, i32
  }
}

module attributes {stable_mosaic.version = 11 : i64} {
  func.func @_self_attn_kernel(%arg0: i32, %arg1: memref<1x8x96xf32, #tpu.memory_space<vmem>>, %arg2: memref<1x1x8xf32, #tpu.memory_space<vmem>>, %arg3: memref<1x8x32xf32, #tpu.memory_space<vmem>>) attributes {dimension_semantics = [#tpu.dimension_semantics<parallel>], iteration_bounds = array<i64: 2>, scalar_prefetch = 0 : i64, scratch_operands = 0 : i64, tpu.core_type = #tpu.core_type<tc>, window_params = [{transform_indices = @transform_0, window_bounds = array<i64: 1, 8, 96>}, {transform_indices = @transform_1, window_bounds = array<i64: 1, 1, 8>}, {transform_indices = @transform_2, window_bounds = array<i64: 1, 8, 32>}]} {
    %c0 = arith.constant 0 : index
    %c0_0 = arith.constant 0 : index
    %c0_1 = arith.constant 0 : index
    %0 = vector.load %arg1[%c0, %c0_0, %c0_1] : memref<1x8x96xf32, #tpu.memory_space<vmem>>, vector<1x8x96xf32>
    %1 = vector.shape_cast %0 : vector<1x8x96xf32> to vector<8x96xf32>
    %2 = vector.extract_strided_slice %1 {offsets = [0, 0], sizes = [8, 32], strides = [1, 1]} : vector<8x96xf32> to vector<8x32xf32>
    %3 = vector.extract_strided_slice %1 {offsets = [0, 32], sizes = [8, 32], strides = [1, 1]} : vector<8x96xf32> to vector<8x32xf32>
    %4 = vector.extract_strided_slice %1 {offsets = [0, 64], sizes = [8, 32], strides = [1, 1]} : vector<8x96xf32> to vector<8x32xf32>
    %c0_2 = arith.constant 0 : index
    %c0_3 = arith.constant 0 : index
    %c0_4 = arith.constant 0 : index
    %5 = vector.load %arg2[%c0_2, %c0_3, %c0_4] : memref<1x1x8xf32, #tpu.memory_space<vmem>>, vector<1x1x8xf32>
    %6 = vector.shape_cast %5 : vector<1x1x8xf32> to vector<1x8xf32>
    %cst = arith.constant 0.000000e+00 : f32
    %7 = vector.broadcast %cst : f32 to vector<1x8xf32>
    %8 = arith.cmpf ogt, %6, %7 : vector<1x8xf32>
    %cst_5 = arith.constant -1.000000e+09 : f32
    %cst_6 = arith.constant 0.000000e+00 : f32
    %9 = vector.broadcast %cst_5 : f32 to vector<1x8xf32>
    %10 = vector.broadcast %cst_6 : f32 to vector<1x8xf32>
    %11 = arith.select %8, %9, %10 : vector<1x8xi1>, vector<1x8xf32>
    %12 = tpu.iota {dimensions = array<i32: 0>} : vector<8x8xi32>
    %13 = tpu.iota {dimensions = array<i32: 1>} : vector<8x8xi32>
    %14 = arith.cmpi sgt, %13, %12 : vector<8x8xi32>
    %cst_7 = arith.constant -1.000000e+09 : f32
    %cst_8 = arith.constant 0.000000e+00 : f32
    %15 = vector.broadcast %cst_7 : f32 to vector<8x8xf32>
    %16 = vector.broadcast %cst_8 : f32 to vector<8x8xf32>
    %17 = arith.select %14, %15, %16 : vector<8x8xi1>, vector<8x8xf32>
    %18 = vector.broadcast %11 : vector<1x8xf32> to vector<8x8xf32>
    %19 = arith.addf %18, %17 : vector<8x8xf32>
    %20 = vector.extract_strided_slice %2 {offsets = [0, 0], sizes = [8, 8], strides = [1, 1]} : vector<8x32xf32> to vector<8x8xf32>
    %21 = vector.extract_strided_slice %3 {offsets = [0, 0], sizes = [8, 8], strides = [1, 1]} : vector<8x32xf32> to vector<8x8xf32>
    %22 = vector.extract_strided_slice %4 {offsets = [0, 0], sizes = [8, 8], strides = [1, 1]} : vector<8x32xf32> to vector<8x8xf32>
    %cst_9 = arith.constant dense<0.000000e+00> : vector<8x8xf32>
    %23 = tpu.matmul %20, %21, %cst_9 {dimension_numbers = #tpu.dot_dimension_numbers<[1], [1], [0], [0], [0, 0, 1, 0], [], []>} : vector<8x8xf32>, vector<8x8xf32>, vector<8x8xf32> -> vector<8x8xf32>
    %cst_10 = arith.constant 0.353553385 : f32
    %24 = vector.broadcast %cst_10 : f32 to vector<8x8xf32>
    %25 = arith.mulf %23, %24 : vector<8x8xf32>
    %26 = arith.addf %25, %19 : vector<8x8xf32>
    %cst_11 = arith.constant dense<0xFF800000> : vector<8xf32>
    %27 = vector.multi_reduction <maximumf>, %26, %cst_11 [1] : vector<8x8xf32> to vector<8xf32>
    %28 = vector.shape_cast %27 : vector<8xf32> to vector<8x1xf32>
    %29 = vector.broadcast %28 : vector<8x1xf32> to vector<8x8xf32>
    %30 = arith.subf %26, %29 : vector<8x8xf32>
    %31 = math.exp %30 : vector<8x8xf32>
    %cst_12 = arith.constant dense<0.000000e+00> : vector<8xf32>
    %32 = vector.multi_reduction <add>, %31, %cst_12 [1] : vector<8x8xf32> to vector<8xf32>
    %33 = vector.shape_cast %32 : vector<8xf32> to vector<8x1xf32>
    %34 = tpu.reciprocal %33 {approx = true} : vector<8x1xf32> -> vector<8x1xf32>
    %35 = vector.broadcast %34 : vector<8x1xf32> to vector<8x8xf32>
    %36 = arith.mulf %31, %35 : vector<8x8xf32>
    %cst_13 = arith.constant dense<0.000000e+00> : vector<8x8xf32>
    %37 = tpu.matmul %36, %22, %cst_13 {dimension_numbers = #tpu.dot_dimension_numbers<[1], [0], [0], [1], [0, 0, 1, 1], [], []>} : vector<8x8xf32>, vector<8x8xf32>, vector<8x8xf32> -> vector<8x8xf32>
    %38 = vector.extract_strided_slice %2 {offsets = [0, 8], sizes = [8, 8], strides = [1, 1]} : vector<8x32xf32> to vector<8x8xf32>
    %39 = vector.extract_strided_slice %3 {offsets = [0, 8], sizes = [8, 8], strides = [1, 1]} : vector<8x32xf32> to vector<8x8xf32>
    %40 = vector.extract_strided_slice %4 {offsets = [0, 8], sizes = [8, 8], strides = [1, 1]} : vector<8x32xf32> to vector<8x8xf32>
    %cst_14 = arith.constant dense<0.000000e+00> : vector<8x8xf32>
    %41 = tpu.matmul %38, %39, %cst_14 {dimension_numbers = #tpu.dot_dimension_numbers<[1], [1], [0], [0], [0, 0, 1, 0], [], []>} : vector<8x8xf32>, vector<8x8xf32>, vector<8x8xf32> -> vector<8x8xf32>
    %cst_15 = arith.constant 0.353553385 : f32
    %42 = vector.broadcast %cst_15 : f32 to vector<8x8xf32>
    %43 = arith.mulf %41, %42 : vector<8x8xf32>
    %44 = arith.addf %43, %19 : vector<8x8xf32>
    %cst_16 = arith.constant dense<0xFF800000> : vector<8xf32>
    %45 = vector.multi_reduction <maximumf>, %44, %cst_16 [1] : vector<8x8xf32> to vector<8xf32>
    %46 = vector.shape_cast %45 : vector<8xf32> to vector<8x1xf32>
    %47 = vector.broadcast %46 : vector<8x1xf32> to vector<8x8xf32>
    %48 = arith.subf %44, %47 : vector<8x8xf32>
    %49 = math.exp %48 : vector<8x8xf32>
    %cst_17 = arith.constant dense<0.000000e+00> : vector<8xf32>
    %50 = vector.multi_reduction <add>, %49, %cst_17 [1] : vector<8x8xf32> to vector<8xf32>
    %51 = vector.shape_cast %50 : vector<8xf32> to vector<8x1xf32>
    %52 = tpu.reciprocal %51 {approx = true} : vector<8x1xf32> -> vector<8x1xf32>
    %53 = vector.broadcast %52 : vector<8x1xf32> to vector<8x8xf32>
    %54 = arith.mulf %49, %53 : vector<8x8xf32>
    %cst_18 = arith.constant dense<0.000000e+00> : vector<8x8xf32>
    %55 = tpu.matmul %54, %40, %cst_18 {dimension_numbers = #tpu.dot_dimension_numbers<[1], [0], [0], [1], [0, 0, 1, 1], [], []>} : vector<8x8xf32>, vector<8x8xf32>, vector<8x8xf32> -> vector<8x8xf32>
    %56 = vector.extract_strided_slice %2 {offsets = [0, 16], sizes = [8, 8], strides = [1, 1]} : vector<8x32xf32> to vector<8x8xf32>
    %57 = vector.extract_strided_slice %3 {offsets = [0, 16], sizes = [8, 8], strides = [1, 1]} : vector<8x32xf32> to vector<8x8xf32>
    %58 = vector.extract_strided_slice %4 {offsets = [0, 16], sizes = [8, 8], strides = [1, 1]} : vector<8x32xf32> to vector<8x8xf32>
    %cst_19 = arith.constant dense<0.000000e+00> : vector<8x8xf32>
    %59 = tpu.matmul %56, %57, %cst_19 {dimension_numbers = #tpu.dot_dimension_numbers<[1], [1], [0], [0], [0, 0, 1, 0], [], []>} : vector<8x8xf32>, vector<8x8xf32>, vector<8x8xf32> -> vector<8x8xf32>
    %cst_20 = arith.constant 0.353553385 : f32
    %60 = vector.broadcast %cst_20 : f32 to vector<8x8xf32>
    %61 = arith.mulf %59, %60 : vector<8x8xf32>
    %62 = arith.addf %61, %19 : vector<8x8xf32>
    %cst_21 = arith.constant dense<0xFF800000> : vector<8xf32>
    %63 = vector.multi_reduction <maximumf>, %62, %cst_21 [1] : vector<8x8xf32> to vector<8xf32>
    %64 = vector.shape_cast %63 : vector<8xf32> to vector<8x1xf32>
    %65 = vector.broadcast %64 : vector<8x1xf32> to vector<8x8xf32>
    %66 = arith.subf %62, %65 : vector<8x8xf32>
    %67 = math.exp %66 : vector<8x8xf32>
    %cst_22 = arith.constant dense<0.000000e+00> : vector<8xf32>
    %68 = vector.multi_reduction <add>, %67, %cst_22 [1] : vector<8x8xf32> to vector<8xf32>
    %69 = vector.shape_cast %68 : vector<8xf32> to vector<8x1xf32>
    %70 = tpu.reciprocal %69 {approx = true} : vector<8x1xf32> -> vector<8x1xf32>
    %71 = vector.broadcast %70 : vector<8x1xf32> to vector<8x8xf32>
    %72 = arith.mulf %67, %71 : vector<8x8xf32>
    %cst_23 = arith.constant dense<0.000000e+00> : vector<8x8xf32>
    %73 = tpu.matmul %72, %58, %cst_23 {dimension_numbers = #tpu.dot_dimension_numbers<[1], [0], [0], [1], [0, 0, 1, 1], [], []>} : vector<8x8xf32>, vector<8x8xf32>, vector<8x8xf32> -> vector<8x8xf32>
    %74 = vector.extract_strided_slice %2 {offsets = [0, 24], sizes = [8, 8], strides = [1, 1]} : vector<8x32xf32> to vector<8x8xf32>
    %75 = vector.extract_strided_slice %3 {offsets = [0, 24], sizes = [8, 8], strides = [1, 1]} : vector<8x32xf32> to vector<8x8xf32>
    %76 = vector.extract_strided_slice %4 {offsets = [0, 24], sizes = [8, 8], strides = [1, 1]} : vector<8x32xf32> to vector<8x8xf32>
    %cst_24 = arith.constant dense<0.000000e+00> : vector<8x8xf32>
    %77 = tpu.matmul %74, %75, %cst_24 {dimension_numbers = #tpu.dot_dimension_numbers<[1], [1], [0], [0], [0, 0, 1, 0], [], []>} : vector<8x8xf32>, vector<8x8xf32>, vector<8x8xf32> -> vector<8x8xf32>
    %cst_25 = arith.constant 0.353553385 : f32
    %78 = vector.broadcast %cst_25 : f32 to vector<8x8xf32>
    %79 = arith.mulf %77, %78 : vector<8x8xf32>
    %80 = arith.addf %79, %19 : vector<8x8xf32>
    %cst_26 = arith.constant dense<0xFF800000> : vector<8xf32>
    %81 = vector.multi_reduction <maximumf>, %80, %cst_26 [1] : vector<8x8xf32> to vector<8xf32>
    %82 = vector.shape_cast %81 : vector<8xf32> to vector<8x1xf32>
    %83 = vector.broadcast %82 : vector<8x1xf32> to vector<8x8xf32>
    %84 = arith.subf %80, %83 : vector<8x8xf32>
    %85 = math.exp %84 : vector<8x8xf32>
    %cst_27 = arith.constant dense<0.000000e+00> : vector<8xf32>
    %86 = vector.multi_reduction <add>, %85, %cst_27 [1] : vector<8x8xf32> to vector<8xf32>
    %87 = vector.shape_cast %86 : vector<8xf32> to vector<8x1xf32>
    %88 = tpu.reciprocal %87 {approx = true} : vector<8x1xf32> -> vector<8x1xf32>
    %89 = vector.broadcast %88 : vector<8x1xf32> to vector<8x8xf32>
    %90 = arith.mulf %85, %89 : vector<8x8xf32>
    %cst_28 = arith.constant dense<0.000000e+00> : vector<8x8xf32>
    %91 = tpu.matmul %90, %76, %cst_28 {dimension_numbers = #tpu.dot_dimension_numbers<[1], [0], [0], [1], [0, 0, 1, 1], [], []>} : vector<8x8xf32>, vector<8x8xf32>, vector<8x8xf32> -> vector<8x8xf32>
    %92 = tpu.concatenate %37, %55, %73, %91 in 1 : vector<8x8xf32>, vector<8x8xf32>, vector<8x8xf32>, vector<8x8xf32> -> vector<8x32xf32>
    %c0_29 = arith.constant 0 : index
    %c0_30 = arith.constant 0 : index
    %c0_31 = arith.constant 0 : index
    %93 = vector.load %arg3[%c0_29, %c0_30, %c0_31] : memref<1x8x32xf32, #tpu.memory_space<vmem>>, vector<1x8x32xf32>
    %94 = vector.shape_cast %93 : vector<1x8x32xf32> to vector<8x32xf32>
    %95 = vector.shape_cast %92 : vector<8x32xf32> to vector<1x8x32xf32>
    tpu.vector_store %arg3[%c0_29, %c0_30, %c0_31], %95 {strides = array<i32>} : memref<1x8x32xf32, #tpu.memory_space<vmem>>, vector<1x8x32xf32>,
    return
  }
  func.func @transform_0(%arg0: i32) -> (i32, i32, i32) {
    %c0_i32 = arith.constant 0 : i32
    %c0_i32_0 = arith.constant 0 : i32
    %c0_i32_1 = arith.constant 0 : i32
    return %arg0, %c0_i32, %c0_i32_0 : i32, i32, i32
  }
  func.func @transform_1(%arg0: i32) -> (i32, i32, i32) {
    %c0_i32 = arith.constant 0 : i32
    %c0_i32_0 = arith.constant 0 : i32
    %c0_i32_1 = arith.constant 0 : i32
    return %arg0, %c0_i32, %c0_i32_0 : i32, i32, i32
  }
  func.func @transform_2(%arg0: i32) -> (i32, i32, i32) {
    %c0_i32 = arith.constant 0 : i32
    %c0_i32_0 = arith.constant 0 : i32
    %c0_i32_1 = arith.constant 0 : i32
    return %arg0, %c0_i32, %c0_i32_0 : i32, i32, i32
  }
}

module attributes {stable_mosaic.version = 11 : i64} {
  func.func @_cross_attn_kernel(%arg0: i32, %arg1: memref<1x8x32xf32, #tpu.memory_space<vmem>>, %arg2: memref<1x8x64xf32, #tpu.memory_space<vmem>>, %arg3: memref<1x1x8xf32, #tpu.memory_space<vmem>>, %arg4: memref<1x8x32xf32, #tpu.memory_space<vmem>>) attributes {dimension_semantics = [#tpu.dimension_semantics<parallel>], iteration_bounds = array<i64: 2>, scalar_prefetch = 0 : i64, scratch_operands = 0 : i64, tpu.core_type = #tpu.core_type<tc>, window_params = [{transform_indices = @transform_0, window_bounds = array<i64: 1, 8, 32>}, {transform_indices = @transform_1, window_bounds = array<i64: 1, 8, 64>}, {transform_indices = @transform_2, window_bounds = array<i64: 1, 1, 8>}, {transform_indices = @transform_3, window_bounds = array<i64: 1, 8, 32>}]} {
    %c0 = arith.constant 0 : index
    %c0_0 = arith.constant 0 : index
    %c0_1 = arith.constant 0 : index
    %0 = vector.load %arg1[%c0, %c0_0, %c0_1] : memref<1x8x32xf32, #tpu.memory_space<vmem>>, vector<1x8x32xf32>
    %1 = vector.shape_cast %0 : vector<1x8x32xf32> to vector<8x32xf32>
    %c0_2 = arith.constant 0 : index
    %c0_3 = arith.constant 0 : index
    %c0_4 = arith.constant 0 : index
    %2 = vector.load %arg2[%c0_2, %c0_3, %c0_4] : memref<1x8x64xf32, #tpu.memory_space<vmem>>, vector<1x8x64xf32>
    %3 = vector.shape_cast %2 : vector<1x8x64xf32> to vector<8x64xf32>
    %4 = vector.extract_strided_slice %3 {offsets = [0, 0], sizes = [8, 32], strides = [1, 1]} : vector<8x64xf32> to vector<8x32xf32>
    %5 = vector.extract_strided_slice %3 {offsets = [0, 32], sizes = [8, 32], strides = [1, 1]} : vector<8x64xf32> to vector<8x32xf32>
    %c0_5 = arith.constant 0 : index
    %c0_6 = arith.constant 0 : index
    %c0_7 = arith.constant 0 : index
    %6 = vector.load %arg3[%c0_5, %c0_6, %c0_7] : memref<1x1x8xf32, #tpu.memory_space<vmem>>, vector<1x1x8xf32>
    %7 = vector.shape_cast %6 : vector<1x1x8xf32> to vector<1x8xf32>
    %cst = arith.constant 0.000000e+00 : f32
    %8 = vector.broadcast %cst : f32 to vector<1x8xf32>
    %9 = arith.cmpf ogt, %7, %8 : vector<1x8xf32>
    %cst_8 = arith.constant -1.000000e+09 : f32
    %cst_9 = arith.constant 0.000000e+00 : f32
    %10 = vector.broadcast %cst_8 : f32 to vector<1x8xf32>
    %11 = vector.broadcast %cst_9 : f32 to vector<1x8xf32>
    %12 = arith.select %9, %10, %11 : vector<1x8xi1>, vector<1x8xf32>
    %13 = vector.extract_strided_slice %1 {offsets = [0, 0], sizes = [8, 8], strides = [1, 1]} : vector<8x32xf32> to vector<8x8xf32>
    %14 = vector.extract_strided_slice %4 {offsets = [0, 0], sizes = [8, 8], strides = [1, 1]} : vector<8x32xf32> to vector<8x8xf32>
    %15 = vector.extract_strided_slice %5 {offsets = [0, 0], sizes = [8, 8], strides = [1, 1]} : vector<8x32xf32> to vector<8x8xf32>
    %cst_10 = arith.constant dense<0.000000e+00> : vector<8x8xf32>
    %16 = tpu.matmul %13, %14, %cst_10 {dimension_numbers = #tpu.dot_dimension_numbers<[1], [1], [0], [0], [0, 0, 1, 0], [], []>} : vector<8x8xf32>, vector<8x8xf32>, vector<8x8xf32> -> vector<8x8xf32>
    %cst_11 = arith.constant 0.353553385 : f32
    %17 = vector.broadcast %cst_11 : f32 to vector<8x8xf32>
    %18 = arith.mulf %16, %17 : vector<8x8xf32>
    %19 = vector.broadcast %12 : vector<1x8xf32> to vector<8x8xf32>
    %20 = arith.addf %18, %19 : vector<8x8xf32>
    %cst_12 = arith.constant dense<0xFF800000> : vector<8xf32>
    %21 = vector.multi_reduction <maximumf>, %20, %cst_12 [1] : vector<8x8xf32> to vector<8xf32>
    %22 = vector.shape_cast %21 : vector<8xf32> to vector<8x1xf32>
    %23 = vector.broadcast %22 : vector<8x1xf32> to vector<8x8xf32>
    %24 = arith.subf %20, %23 : vector<8x8xf32>
    %25 = math.exp %24 : vector<8x8xf32>
    %cst_13 = arith.constant dense<0.000000e+00> : vector<8xf32>
    %26 = vector.multi_reduction <add>, %25, %cst_13 [1] : vector<8x8xf32> to vector<8xf32>
    %27 = vector.shape_cast %26 : vector<8xf32> to vector<8x1xf32>
    %28 = tpu.reciprocal %27 {approx = true} : vector<8x1xf32> -> vector<8x1xf32>
    %29 = vector.broadcast %28 : vector<8x1xf32> to vector<8x8xf32>
    %30 = arith.mulf %25, %29 : vector<8x8xf32>
    %cst_14 = arith.constant dense<0.000000e+00> : vector<8x8xf32>
    %31 = tpu.matmul %30, %15, %cst_14 {dimension_numbers = #tpu.dot_dimension_numbers<[1], [0], [0], [1], [0, 0, 1, 1], [], []>} : vector<8x8xf32>, vector<8x8xf32>, vector<8x8xf32> -> vector<8x8xf32>
    %32 = vector.extract_strided_slice %1 {offsets = [0, 8], sizes = [8, 8], strides = [1, 1]} : vector<8x32xf32> to vector<8x8xf32>
    %33 = vector.extract_strided_slice %4 {offsets = [0, 8], sizes = [8, 8], strides = [1, 1]} : vector<8x32xf32> to vector<8x8xf32>
    %34 = vector.extract_strided_slice %5 {offsets = [0, 8], sizes = [8, 8], strides = [1, 1]} : vector<8x32xf32> to vector<8x8xf32>
    %cst_15 = arith.constant dense<0.000000e+00> : vector<8x8xf32>
    %35 = tpu.matmul %32, %33, %cst_15 {dimension_numbers = #tpu.dot_dimension_numbers<[1], [1], [0], [0], [0, 0, 1, 0], [], []>} : vector<8x8xf32>, vector<8x8xf32>, vector<8x8xf32> -> vector<8x8xf32>
    %cst_16 = arith.constant 0.353553385 : f32
    %36 = vector.broadcast %cst_16 : f32 to vector<8x8xf32>
    %37 = arith.mulf %35, %36 : vector<8x8xf32>
    %38 = vector.broadcast %12 : vector<1x8xf32> to vector<8x8xf32>
    %39 = arith.addf %37, %38 : vector<8x8xf32>
    %cst_17 = arith.constant dense<0xFF800000> : vector<8xf32>
    %40 = vector.multi_reduction <maximumf>, %39, %cst_17 [1] : vector<8x8xf32> to vector<8xf32>
    %41 = vector.shape_cast %40 : vector<8xf32> to vector<8x1xf32>
    %42 = vector.broadcast %41 : vector<8x1xf32> to vector<8x8xf32>
    %43 = arith.subf %39, %42 : vector<8x8xf32>
    %44 = math.exp %43 : vector<8x8xf32>
    %cst_18 = arith.constant dense<0.000000e+00> : vector<8xf32>
    %45 = vector.multi_reduction <add>, %44, %cst_18 [1] : vector<8x8xf32> to vector<8xf32>
    %46 = vector.shape_cast %45 : vector<8xf32> to vector<8x1xf32>
    %47 = tpu.reciprocal %46 {approx = true} : vector<8x1xf32> -> vector<8x1xf32>
    %48 = vector.broadcast %47 : vector<8x1xf32> to vector<8x8xf32>
    %49 = arith.mulf %44, %48 : vector<8x8xf32>
    %cst_19 = arith.constant dense<0.000000e+00> : vector<8x8xf32>
    %50 = tpu.matmul %49, %34, %cst_19 {dimension_numbers = #tpu.dot_dimension_numbers<[1], [0], [0], [1], [0, 0, 1, 1], [], []>} : vector<8x8xf32>, vector<8x8xf32>, vector<8x8xf32> -> vector<8x8xf32>
    %51 = vector.extract_strided_slice %1 {offsets = [0, 16], sizes = [8, 8], strides = [1, 1]} : vector<8x32xf32> to vector<8x8xf32>
    %52 = vector.extract_strided_slice %4 {offsets = [0, 16], sizes = [8, 8], strides = [1, 1]} : vector<8x32xf32> to vector<8x8xf32>
    %53 = vector.extract_strided_slice %5 {offsets = [0, 16], sizes = [8, 8], strides = [1, 1]} : vector<8x32xf32> to vector<8x8xf32>
    %cst_20 = arith.constant dense<0.000000e+00> : vector<8x8xf32>
    %54 = tpu.matmul %51, %52, %cst_20 {dimension_numbers = #tpu.dot_dimension_numbers<[1], [1], [0], [0], [0, 0, 1, 0], [], []>} : vector<8x8xf32>, vector<8x8xf32>, vector<8x8xf32> -> vector<8x8xf32>
    %cst_21 = arith.constant 0.353553385 : f32
    %55 = vector.broadcast %cst_21 : f32 to vector<8x8xf32>
    %56 = arith.mulf %54, %55 : vector<8x8xf32>
    %57 = vector.broadcast %12 : vector<1x8xf32> to vector<8x8xf32>
    %58 = arith.addf %56, %57 : vector<8x8xf32>
    %cst_22 = arith.constant dense<0xFF800000> : vector<8xf32>
    %59 = vector.multi_reduction <maximumf>, %58, %cst_22 [1] : vector<8x8xf32> to vector<8xf32>
    %60 = vector.shape_cast %59 : vector<8xf32> to vector<8x1xf32>
    %61 = vector.broadcast %60 : vector<8x1xf32> to vector<8x8xf32>
    %62 = arith.subf %58, %61 : vector<8x8xf32>
    %63 = math.exp %62 : vector<8x8xf32>
    %cst_23 = arith.constant dense<0.000000e+00> : vector<8xf32>
    %64 = vector.multi_reduction <add>, %63, %cst_23 [1] : vector<8x8xf32> to vector<8xf32>
    %65 = vector.shape_cast %64 : vector<8xf32> to vector<8x1xf32>
    %66 = tpu.reciprocal %65 {approx = true} : vector<8x1xf32> -> vector<8x1xf32>
    %67 = vector.broadcast %66 : vector<8x1xf32> to vector<8x8xf32>
    %68 = arith.mulf %63, %67 : vector<8x8xf32>
    %cst_24 = arith.constant dense<0.000000e+00> : vector<8x8xf32>
    %69 = tpu.matmul %68, %53, %cst_24 {dimension_numbers = #tpu.dot_dimension_numbers<[1], [0], [0], [1], [0, 0, 1, 1], [], []>} : vector<8x8xf32>, vector<8x8xf32>, vector<8x8xf32> -> vector<8x8xf32>
    %70 = vector.extract_strided_slice %1 {offsets = [0, 24], sizes = [8, 8], strides = [1, 1]} : vector<8x32xf32> to vector<8x8xf32>
    %71 = vector.extract_strided_slice %4 {offsets = [0, 24], sizes = [8, 8], strides = [1, 1]} : vector<8x32xf32> to vector<8x8xf32>
    %72 = vector.extract_strided_slice %5 {offsets = [0, 24], sizes = [8, 8], strides = [1, 1]} : vector<8x32xf32> to vector<8x8xf32>
    %cst_25 = arith.constant dense<0.000000e+00> : vector<8x8xf32>
    %73 = tpu.matmul %70, %71, %cst_25 {dimension_numbers = #tpu.dot_dimension_numbers<[1], [1], [0], [0], [0, 0, 1, 0], [], []>} : vector<8x8xf32>, vector<8x8xf32>, vector<8x8xf32> -> vector<8x8xf32>
    %cst_26 = arith.constant 0.353553385 : f32
    %74 = vector.broadcast %cst_26 : f32 to vector<8x8xf32>
    %75 = arith.mulf %73, %74 : vector<8x8xf32>
    %76 = vector.broadcast %12 : vector<1x8xf32> to vector<8x8xf32>
    %77 = arith.addf %75, %76 : vector<8x8xf32>
    %cst_27 = arith.constant dense<0xFF800000> : vector<8xf32>
    %78 = vector.multi_reduction <maximumf>, %77, %cst_27 [1] : vector<8x8xf32> to vector<8xf32>
    %79 = vector.shape_cast %78 : vector<8xf32> to vector<8x1xf32>
    %80 = vector.broadcast %79 : vector<8x1xf32> to vector<8x8xf32>
    %81 = arith.subf %77, %80 : vector<8x8xf32>
    %82 = math.exp %81 : vector<8x8xf32>
    %cst_28 = arith.constant dense<0.000000e+00> : vector<8xf32>
    %83 = vector.multi_reduction <add>, %82, %cst_28 [1] : vector<8x8xf32> to vector<8xf32>
    %84 = vector.shape_cast %83 : vector<8xf32> to vector<8x1xf32>
    %85 = tpu.reciprocal %84 {approx = true} : vector<8x1xf32> -> vector<8x1xf32>
    %86 = vector.broadcast %85 : vector<8x1xf32> to vector<8x8xf32>
    %87 = arith.mulf %82, %86 : vector<8x8xf32>
    %cst_29 = arith.constant dense<0.000000e+00> : vector<8x8xf32>
    %88 = tpu.matmul %87, %72, %cst_29 {dimension_numbers = #tpu.dot_dimension_numbers<[1], [0], [0], [1], [0, 0, 1, 1], [], []>} : vector<8x8xf32>, vector<8x8xf32>, vector<8x8xf32> -> vector<8x8xf32>
    %89 = tpu.concatenate %31, %50, %69, %88 in 1 : vector<8x8xf32>, vector<8x8xf32>, vector<8x8xf32>, vector<8x8xf32> -> vector<8x32xf32>
    %c0_30 = arith.constant 0 : index
    %c0_31 = arith.constant 0 : index
    %c0_32 = arith.constant 0 : index
    %90 = vector.load %arg4[%c0_30, %c0_31, %c0_32] : memref<1x8x32xf32, #tpu.memory_space<vmem>>, vector<1x8x32xf32>
    %91 = vector.shape_cast %90 : vector<1x8x32xf32> to vector<8x32xf32>
    %92 = vector.shape_cast %89 : vector<8x32xf32> to vector<1x8x32xf32>
    tpu.vector_store %arg4[%c0_30, %c0_31, %c0_32], %92 {strides = array<i32>} : memref<1x8x32xf32, #tpu.memory_space<vmem>>, vector<1x8x32xf32>,
    return
  }
  func.func @transform_0(%arg0: i32) -> (i32, i32, i32) {
    %c0_i32 = arith.constant 0 : i32
    %c0_i32_0 = arith.constant 0 : i32
    %c0_i32_1 = arith.constant 0 : i32
    return %arg0, %c0_i32, %c0_i32_0 : i32, i32, i32
  }
  func.func @transform_1(%arg0: i32) -> (i32, i32, i32) {
    %c0_i32 = arith.constant 0 : i32
    %c0_i32_0 = arith.constant 0 : i32
    %c0_i32_1 = arith.constant 0 : i32
    return %arg0, %c0_i32, %c0_i32_0 : i32, i32, i32
  }
  func.func @transform_2(%arg0: i32) -> (i32, i32, i32) {
    %c0_i32 = arith.constant 0 : i32
    %c0_i32_0 = arith.constant 0 : i32
    %c0_i32_1 = arith.constant 0 : i32
    return %arg0, %c0_i32, %c0_i32_0 : i32, i32, i32
  }
  func.func @transform_3(%arg0: i32) -> (i32, i32, i32) {
    %c0_i32 = arith.constant 0 : i32
    %c0_i32_0 = arith.constant 0 : i32
    %c0_i32_1 = arith.constant 0 : i32
    return %arg0, %c0_i32, %c0_i32_0 : i32, i32, i32
  }
}

module attributes {stable_mosaic.version = 11 : i64} {
  func.func @_linear_kernel(%arg0: i32, %arg1: i32, %arg2: i32, %arg3: memref<16x32xf32, #tpu.memory_space<vmem>>, %arg4: memref<32x60xf32, #tpu.memory_space<vmem>>, %arg5: memref<1x60xf32, #tpu.memory_space<vmem>>, %arg6: memref<16x60xf32, #tpu.memory_space<vmem>>, %arg7: memref<16x60xf32, #tpu.memory_space<vmem>>) attributes {dimension_semantics = [#tpu.dimension_semantics<parallel>, #tpu.dimension_semantics<parallel>, #tpu.dimension_semantics<arbitrary>], iteration_bounds = array<i64: 1, 1, 1>, scalar_prefetch = 0 : i64, scratch_operands = 1 : i64, tpu.core_type = #tpu.core_type<tc>, window_params = [{transform_indices = @transform_0, window_bounds = array<i64: 16, 32>}, {transform_indices = @transform_1, window_bounds = array<i64: 32, 60>}, {transform_indices = @transform_2, window_bounds = array<i64: 1, 60>}, {transform_indices = @transform_3, window_bounds = array<i64: 16, 60>}]} {
    %c0_i32 = arith.constant 0 : i32
    %0 = arith.cmpi eq, %arg2, %c0_i32 : i32
    %1 = arith.extui %0 : i1 to i32
    %c0_i32_0 = arith.constant 0 : i32
    %2 = arith.cmpi ne, %1, %c0_i32_0 : i32
    scf.if %2 {
      %cst_10 = arith.constant 0.000000e+00 : f32
      %12 = vector.broadcast %cst_10 : f32 to vector<16x60xf32>
      %c0_11 = arith.constant 0 : index
      %c0_12 = arith.constant 0 : index
      %13 = vector.load %arg7[%c0_11, %c0_12] : memref<16x60xf32, #tpu.memory_space<vmem>>, vector<16x60xf32>
      tpu.vector_store %arg7[%c0_11, %c0_12], %12 {strides = array<i32>} : memref<16x60xf32, #tpu.memory_space<vmem>>, vector<16x60xf32>,
    } else {
    }
    %c0 = arith.constant 0 : index
    %c0_1 = arith.constant 0 : index
    %3 = vector.load %arg7[%c0, %c0_1] : memref<16x60xf32, #tpu.memory_space<vmem>>, vector<16x60xf32>
    %c0_2 = arith.constant 0 : index
    %c0_3 = arith.constant 0 : index
    %4 = vector.load %arg3[%c0_2, %c0_3] : memref<16x32xf32, #tpu.memory_space<vmem>>, vector<16x32xf32>
    %c0_4 = arith.constant 0 : index
    %c0_5 = arith.constant 0 : index
    %5 = vector.load %arg4[%c0_4, %c0_5] : memref<32x60xf32, #tpu.memory_space<vmem>>, vector<32x60xf32>
    %cst = arith.constant dense<0.000000e+00> : vector<16x60xf32>
    %6 = tpu.matmul %4, %5, %cst {dimension_numbers = #tpu.dot_dimension_numbers<[1], [0], [0], [1], [0, 0, 1, 1], [], []>} : vector<16x32xf32>, vector<32x60xf32>, vector<16x60xf32> -> vector<16x60xf32>
    %7 = arith.addf %3, %6 : vector<16x60xf32>
    %c0_6 = arith.constant 0 : index
    %c0_7 = arith.constant 0 : index
    %8 = vector.load %arg7[%c0_6, %c0_7] : memref<16x60xf32, #tpu.memory_space<vmem>>, vector<16x60xf32>
    tpu.vector_store %arg7[%c0_6, %c0_7], %7 {strides = array<i32>} : memref<16x60xf32, #tpu.memory_space<vmem>>, vector<16x60xf32>,
    %c0_i32_8 = arith.constant 0 : i32
    %9 = arith.cmpi eq, %arg2, %c0_i32_8 : i32
    %10 = arith.extui %9 : i1 to i32
    %c0_i32_9 = arith.constant 0 : i32
    %11 = arith.cmpi ne, %10, %c0_i32_9 : i32
    scf.if %11 {
      %c0_10 = arith.constant 0 : index
      %c0_11 = arith.constant 0 : index
      %12 = vector.load %arg7[%c0_10, %c0_11] : memref<16x60xf32, #tpu.memory_space<vmem>>, vector<16x60xf32>
      %c0_12 = arith.constant 0 : index
      %c0_13 = arith.constant 0 : index
      %13 = vector.load %arg5[%c0_12, %c0_13] : memref<1x60xf32, #tpu.memory_space<vmem>>, vector<1x60xf32>
      %14 = vector.broadcast %13 : vector<1x60xf32> to vector<16x60xf32>
      %15 = arith.addf %12, %14 : vector<16x60xf32>
      %c0_14 = arith.constant 0 : index
      %c0_15 = arith.constant 0 : index
      %16 = vector.load %arg6[%c0_14, %c0_15] : memref<16x60xf32, #tpu.memory_space<vmem>>, vector<16x60xf32>
      tpu.vector_store %arg6[%c0_14, %c0_15], %15 {strides = array<i32>} : memref<16x60xf32, #tpu.memory_space<vmem>>, vector<16x60xf32>,
    } else {
    }
    return
  }
  func.func @transform_0(%arg0: i32, %arg1: i32, %arg2: i32) -> (i32, i32) {
    %c0_i32 = arith.constant 0 : i32
    return %arg0, %arg2 : i32, i32
  }
  func.func @transform_1(%arg0: i32, %arg1: i32, %arg2: i32) -> (i32, i32) {
    %c0_i32 = arith.constant 0 : i32
    return %arg2, %arg1 : i32, i32
  }
  func.func @transform_2(%arg0: i32, %arg1: i32, %arg2: i32) -> (i32, i32) {
    %c0_i32 = arith.constant 0 : i32
    %c0_i32_0 = arith.constant 0 : i32
    return %c0_i32, %arg1 : i32, i32
  }
  func.func @transform_3(%arg0: i32, %arg1: i32, %arg2: i32) -> (i32, i32) {
    %c0_i32 = arith.constant 0 : i32
    return %arg0, %arg1 : i32, i32
  }
}

</mosaic_0001>

<llo_original>
// kernel: seq2seq_forward.37
$region0: #{seq2seq_forward.37}
  #allocation0 [shape = 'u32[]', space=smem, size = 0x4, offset = 0x4, fixed_abs, tag = 'smem constant byte address 0x4 - core index']
  #allocation1 [shape = 'u32[144,128]{1,0:T(1,128)}', space=vmem, size = 0x12000, scoped, tag = 'internal scratch']
  #allocation2 [shape = 'f32[16,32]{1,0:T(8,128)}', space=vmem, size = 0x2000, scoped, tag = 'scratch operand']
  %s0 = inlined_call_operand.vmem [shape: f32[16,32], index: 0, kind: input, shape index: {}]
  %s1 = inlined_call_operand.vmem [shape: f32[32,32], index: 1, kind: input, shape index: {}]
  %s2 = inlined_call_operand.vmem [shape: f32[1,32], index: 2, kind: input, shape index: {}]
  %s3 = inlined_call_operand.vmem [shape: f32[16,32], index: 3, kind: output, shape index: {}]
  %s4 = sld [smem:[#allocation0]]
  $region30: #{seq2seq_forward.37} parent=0
    _
  %s6 = ssub.s32 1, %s4
  %s7 = scalar_select 0, %s6, %s4
  // Predicated region
  $region2: #{seq2seq_forward.37} parent=0 // pred_check
    _
  $region3: #{seq2seq_forward.37} parent=0 // pred_check_branch
    %9 = sbr.rel (0) target = $region5
  $region4: #{seq2seq_forward.37} parent=0 // pred_region
    _
  $region5: #{seq2seq_forward.37} parent=0 // pred_fallthru
    _
  // Predicated region
  $region6: #{seq2seq_forward.37} parent=0 // pred_check
    _
  $region7: #{seq2seq_forward.37} parent=0 // pred_check_branch
    %11 = sbr.rel (0) target = $region9
  $region8: #{seq2seq_forward.37} parent=0 // pred_region
    _
  $region9: #{seq2seq_forward.37} parent=0 // pred_fallthru
    _
  // Predicated region
  $region10: #{seq2seq_forward.37} parent=0 // pred_check
    _
  $region11: #{seq2seq_forward.37} parent=0 // pred_check_branch
    %13 = sbr.rel (0) target = $region13
  $region12: #{seq2seq_forward.37} parent=0 // pred_region
    _
  $region13: #{seq2seq_forward.37} parent=0 // pred_fallthru
    _
  %p14 = scmp.eq.s32.totalorder 0, 0
  // Predicated region
  $region14: #{seq2seq_forward.37} parent=0 // pred_check
    %p15 = pneg %p14
  $region15: #{seq2seq_forward.37} parent=0 // pred_check_branch
    %17 = sbr.rel (%p15) target = $region17
  $region16: #{seq2seq_forward.37} parent=0 // pred_region
    %vm18 = vcmask 261120
    %19 = vst.msk [vmem:[#allocation2] sm:$0xff] %vm18, 0.0
    %20 = vst.msk [vmem:[#allocation2 + $0x8] sm:$0xff] %vm18, 0.0
  $region17: #{seq2seq_forward.37} parent=0 // pred_fallthru
    _
  %v21 = vld [vmem:[#allocation2] sm:$0xff]
  %v22 = vld [vmem:[#allocation2 + $0x8] sm:$0xff]
  %v23 = vld [vmem:[%s0] sm:$0xff]
  %v24 = vld [vmem:[%s0 + $0x8] sm:$0xff]
  %v25 = vld [vmem:[%s1] sm:$0xff]
  %v26 = vld [vmem:[%s1 + $0x8] sm:$0xff]
  %v27 = vld [vmem:[%s1 + $0x10] sm:$0xff]
  %v28 = vld [vmem:[%s1 + $0x18] sm:$0xff]
  %vm29 = vcmask 261120
  %v31 = vsel %vm29, %v23, 0
  %v34 = vsel %vm29, %v24, 0
  %36 = vmatprep.subr.mxu0 0.0
  %37 = vmatpush1.msra.mxu0 %v25
  %38 = vmatprep.subr.mxu0 0.0
  %39 = vmatpush1.msra.mxu0 %v26
  %40 = vmatprep.subr.mxu0 0.0
  %41 = vmatpush1.msra.mxu0 %v27
  %42 = vmatprep.subr.mxu0 0.0
  %43 = vmatpush1.msra.mxu0 %v28
  %44 = vmatprep.subr.mxu0 0.0
  %45 = vmatpush1.msra.mxu0 0.0
  %46 = vmatprep.subr.mxu0 0.0
  %47 = vmatpush1.msra.mxu0 0.0
  %48 = vmatprep.subr.mxu0 0.0
  %49 = vmatpush1.msra.mxu0 0.0
  %50 = vmatprep.subr.mxu0 0.0
  %51 = vmatpush1.msra.mxu0 0.0
  %52 = vmatprep.subr.mxu0 0.0
  %53 = vmatpush1.msra.mxu0 0.0
  %54 = vmatprep.subr.mxu0 0.0
  %55 = vmatpush1.msra.mxu0 0.0
  %56 = vmatprep.subr.mxu0 0.0
  %57 = vmatpush1.msra.mxu0 0.0
  %58 = vmatprep.subr.mxu0 0.0
  %59 = vmatpush1.msra.mxu0 0.0
  %60 = vmatprep.subr.mxu0 0.0
  %61 = vmatpush1.msra.mxu0 0.0
  %62 = vmatprep.subr.mxu0 0.0
  %63 = vmatpush1.msra.mxu0 0.0
  %64 = vmatprep.subr.mxu0 0.0
  %65 = vmatpush1.msra.mxu0 0.0
  %66 = vmatprep.subr.mxu0 0.0
  %67 = vmatpush1.msra.mxu0 0.0
  %68 = vmatprep.subr.mxu0 0.0
  %69 = vmatpush1.msra.mxu0 0.0
  %70 = vmatprep.subr.mxu0 0.0
  %71 = vmatpush1.msra.mxu0 0.0
  %72 = vmatprep.subr.mxu0 0.0
  %73 = vmatpush1.msra.mxu0 0.0
  %74 = vmatprep.subr.mxu0 0.0
  %75 = vmatpush1.msra.mxu0 0.0
  %76 = vmatprep.subr.mxu0 0.0
  %77 = vmatpush1.msra.mxu0 0.0
  %78 = vmatprep.subr.mxu0 0.0
  %79 = vmatpush1.msra.mxu0 0.0
  %80 = vmatprep.subr.mxu0 0.0
  %81 = vmatpush1.msra.mxu0 0.0
  %82 = vmatprep.subr.mxu0 0.0
  %83 = vmatpush1.msra.mxu0 0.0
  %84 = vmatprep.subr.mxu0 0.0
  %85 = vmatpush1.msra.mxu0 0.0
  %86 = vmatprep.subr.mxu0 0.0
  %87 = vmatpush1.msra.mxu0 0.0
  %88 = vmatprep.subr.mxu0 0.0
  %89 = vmatpush1.msra.mxu0 0.0
  %90 = vmatprep.subr.mxu0 0.0
  %91 = vmatpush1.msra.mxu0 0.0
  %92 = vmatprep.subr.mxu0 0.0
  %93 = vmatpush1.msra.mxu0 0.0
  %94 = vmatprep.subr.mxu0 0.0
  %95 = vmatpush1.msra.mxu0 0.0
  %96 = vmatprep.subr.mxu0 0.0
  %97 = vmatpush1.msra.mxu0 0.0
  %98 = vmatprep.subr.mxu0 0.0
  %99 = vmatpush1.msra.mxu0 0.0
  %100 = vmatprep.mubr.f32.mxu0 0.0
  %101 = vmatmul.mubr.f32.gmra.mrb[0].mxu0 %v31
  %v102 = vpop.f32.mrb[0].mxu0
  %v103 = vadd.f32 0.0, %v102
  %v104 = vpop.f32.mrb[0].mxu0
  %105 = vmatprep.mubr.f32.mxu0 0.0
  %106 = vmatmul.mubr.f32.gmra.mrb[0].mxu0 %v34
  %v107 = vpop.f32.mrb[0].mxu0
  %v108 = vadd.f32 0.0, %v107
  %v109 = vpop.f32.mrb[0].mxu0
  %110 = vdwg.mxu0
  %v111 = vadd.f32 %v21, %v103
  %v112 = vadd.f32 %v22, %v108
  %113 = vst.msk [vmem:[#allocation2] sm:$0xff] %vm29, %v111
  %114 = vst.msk [vmem:[#allocation2 + $0x8] sm:$0xff] %vm29, %v112
  // Predicated region
  $region18: #{seq2seq_forward.37} parent=0 // pred_check
    %p115 = pneg %p14
  $region19: #{seq2seq_forward.37} parent=0 // pred_check_branch
    %117 = sbr.rel (%p115) target = $region21
  $region20: #{seq2seq_forward.37} parent=0 // pred_region
    %v118 = vld [vmem:[#allocation2] sm:$0xff]
    %v119 = vld [vmem:[#allocation2 + $0x8] sm:$0xff]
    %v120 = vld [vmem:[%s2] sm:$0x1]
    %v122 = vlaneseq
    %v123 = vshrl.u32 %v122, 7
    %v124 = vsub.s32 0, %v123
    %v125 = vrot.slane %v120, %v124
    %v127 = vadd.f32 %v118, %v125
    %v128 = vadd.f32 %v119, %v125
    %129 = vst.msk [vmem:[%s3] sm:$0xff] %vm29, %v127
    %130 = vst.msk [vmem:[%s3 + $0x8] sm:$0xff] %vm29, %v128
  $region21: #{seq2seq_forward.37} parent=0 // pred_fallthru
    _
  // Predicated region
  $region22: #{seq2seq_forward.37} parent=0 // pred_check
    _
  $region23: #{seq2seq_forward.37} parent=0 // pred_check_branch
    %132 = sbr.rel (0) target = $region25
  $region24: #{seq2seq_forward.37} parent=0 // pred_region
    _
  $region25: #{seq2seq_forward.37} parent=0 // pred_fallthru
    _
  // Predicated region
  $region26: #{seq2seq_forward.37} parent=0 // pred_check
    _
  $region27: #{seq2seq_forward.37} parent=0 // pred_check_branch
    %134 = sbr.rel (0) target = $region29
  $region28: #{seq2seq_forward.37} parent=0 // pred_region
    _
  $region29: #{seq2seq_forward.37} parent=0 // pred_fallthru
    _

// kernel: seq2seq_forward.38
$region0: #{seq2seq_forward.38}
  #allocation0 [shape = 'u32[]', space=smem, size = 0x4, offset = 0x4, fixed_abs, tag = 'smem constant byte address 0x4 - core index']
  #allocation1 [shape = 'u32[144,128]{1,0:T(1,128)}', space=vmem, size = 0x12000, scoped, tag = 'internal scratch']
  %s0 = inlined_call_operand.vmem [shape: f32[16,32], index: 0, kind: input, shape index: {}]
  %s1 = inlined_call_operand.vmem [shape: f32[16,32], index: 1, kind: input, shape index: {}]
  %s2 = inlined_call_operand.vmem [shape: f32[1,32], index: 2, kind: input, shape index: {}]
  %s3 = inlined_call_operand.vmem [shape: f32[1,32], index: 3, kind: input, shape index: {}]
  %s4 = inlined_call_operand.vmem [shape: f32[16,32], index: 4, kind: output, shape index: {}]
  %s5 = sld [smem:[#allocation0]]
  $region26: #{seq2seq_forward.38} parent=0
    _
  %s7 = ssub.s32 1, %s5
  %s8 = scalar_select 0, %s7, %s5
  // Predicated region
  $region2: #{seq2seq_forward.38} parent=0 // pred_check
    _
  $region3: #{seq2seq_forward.38} parent=0 // pred_check_branch
    %10 = sbr.rel (0) target = $region5
  $region4: #{seq2seq_forward.38} parent=0 // pred_region
    _
  $region5: #{seq2seq_forward.38} parent=0 // pred_fallthru
    _
  // Predicated region
  $region6: #{seq2seq_forward.38} parent=0 // pred_check
    _
  $region7: #{seq2seq_forward.38} parent=0 // pred_check_branch
    %12 = sbr.rel (0) target = $region9
  $region8: #{seq2seq_forward.38} parent=0 // pred_region
    _
  $region9: #{seq2seq_forward.38} parent=0 // pred_fallthru
    _
  // Predicated region
  $region10: #{seq2seq_forward.38} parent=0 // pred_check
    _
  $region11: #{seq2seq_forward.38} parent=0 // pred_check_branch
    %14 = sbr.rel (0) target = $region13
  $region12: #{seq2seq_forward.38} parent=0 // pred_region
    _
  $region13: #{seq2seq_forward.38} parent=0 // pred_fallthru
    _
  // Predicated region
  $region14: #{seq2seq_forward.38} parent=0 // pred_check
    _
  $region15: #{seq2seq_forward.38} parent=0 // pred_check_branch
    %16 = sbr.rel (0) target = $region17
  $region16: #{seq2seq_forward.38} parent=0 // pred_region
    _
  $region17: #{seq2seq_forward.38} parent=0 // pred_fallthru
    _
  %v17 = vld [vmem:[%s0] sm:$0xff]
  %v18 = vld [vmem:[%s0 + $0x8] sm:$0xff]
  %v19 = vld [vmem:[%s1] sm:$0xff]
  %v20 = vld [vmem:[%s1 + $0x8] sm:$0xff]
  %v21 = vadd.f32 %v17, %v19
  %v22 = vadd.f32 %v18, %v20
  %vm23 = vcmask 261120
  %v24 = vsel %vm23, %v21, 0.0
  %25 = vadd.xlane.f32.xlu0 %v24
  %v26 = vpop.xlane.xlu0 %25
  %v27 = vsel %vm23, %v22, 0.0
  %28 = vadd.xlane.f32.xlu0 %v27
  %v29 = vpop.xlane.xlu0 %28
  %v30 = vrcp.pop 32.0
  %v31 = vmul.f32 %v26, %v30
  %v32 = vmul.f32 %v29, %v30
  %v33 = vmul.f32 %v21, %v21
  %v34 = vmul.f32 %v22, %v22
  %v35 = vsel %vm23, %v33, 0.0
  %36 = vadd.xlane.f32.xlu0 %v35
  %v37 = vpop.xlane.xlu0 %36
  %v38 = vsel %vm23, %v34, 0.0
  %39 = vadd.xlane.f32.xlu0 %v38
  %v40 = vpop.xlane.xlu0 %39
  %v41 = vmul.f32 %v37, %v30
  %v42 = vmul.f32 %v40, %v30
  %v43 = vmul.f32 %v31, %v31
  %v44 = vmul.f32 %v32, %v32
  %v45 = vsub.f32 %v41, %v43
  %v46 = vsub.f32 %v42, %v44
  %v47 = vsub.f32 %v21, %v31
  %v48 = vsub.f32 %v22, %v32
  %v49 = vadd.f32 %v45, 1e-05
  %v50 = vadd.f32 %v46, 1e-05
  %v51 = vrsqrt.pop %v49
  %v52 = vrsqrt.pop %v50
  %v53 = vmul.f32 %v47, %v51
  %v54 = vmul.f32 %v48, %v52
  %v55 = vld [vmem:[%s2] sm:$0x1]
  %v57 = vlaneseq
  %v58 = vshrl.u32 %v57, 7
  %v59 = vsub.s32 0, %v58
  %v60 = vrot.slane %v55, %v59
  %v62 = vmul.f32 %v53, %v60
  %v63 = vmul.f32 %v54, %v60
  %v64 = vld [vmem:[%s3] sm:$0x1]
  %v66 = vlaneseq
  %v67 = vshrl.u32 %v66, 7
  %v68 = vsub.s32 0, %v67
  %v69 = vrot.slane %v64, %v68
  %v71 = vadd.f32 %v62, %v69
  %v72 = vadd.f32 %v63, %v69
  %73 = vst.msk [vmem:[%s4] sm:$0xff] %vm23, %v71
  %74 = vst.msk [vmem:[%s4 + $0x8] sm:$0xff] %vm23, %v72
  // Predicated region
  $region18: #{seq2seq_forward.38} parent=0 // pred_check
    _
  $region19: #{seq2seq_forward.38} parent=0 // pred_check_branch
    %76 = sbr.rel (0) target = $region21
  $region20: #{seq2seq_forward.38} parent=0 // pred_region
    _
  $region21: #{seq2seq_forward.38} parent=0 // pred_fallthru
    _
  // Predicated region
  $region22: #{seq2seq_forward.38} parent=0 // pred_check
    _
  $region23: #{seq2seq_forward.38} parent=0 // pred_check_branch
    %78 = sbr.rel (0) target = $region25
  $region24: #{seq2seq_forward.38} parent=0 // pred_region
    _
  $region25: #{seq2seq_forward.38} parent=0 // pred_fallthru
    _

// kernel: seq2seq_forward.35
$region0: #{seq2seq_forward.35}
  #allocation0 [shape = 'u32[]', space=smem, size = 0x4, offset = 0x4, fixed_abs, tag = 'smem constant byte address 0x4 - core index']
  #allocation1 [shape = 'u32[144,128]{1,0:T(1,128)}', space=vmem, size = 0x12000, scoped, tag = 'internal scratch']
  #allocation2 [shape = 'f32[16,96]{1,0:T(8,128)}', space=vmem, size = 0x2000, scoped, tag = 'scratch operand']
  %s0 = inlined_call_operand.vmem [shape: f32[16,32], index: 0, kind: input, shape index: {}]
  %s1 = inlined_call_operand.vmem [shape: f32[32,96], index: 1, kind: input, shape index: {}]
  %s2 = inlined_call_operand.vmem [shape: f32[1,96], index: 2, kind: input, shape index: {}]
  %s3 = inlined_call_operand.vmem [shape: f32[16,96], index: 3, kind: output, shape index: {}]
  %s4 = sld [smem:[#allocation0]]
  $region30: #{seq2seq_forward.35} parent=0
    _
  %s6 = ssub.s32 1, %s4
  %s7 = scalar_select 0, %s6, %s4
  // Predicated region
  $region2: #{seq2seq_forward.35} parent=0 // pred_check
    _
  $region3: #{seq2seq_forward.35} parent=0 // pred_check_branch
    %9 = sbr.rel (0) target = $region5
  $region4: #{seq2seq_forward.35} parent=0 // pred_region
    _
  $region5: #{seq2seq_forward.35} parent=0 // pred_fallthru
    _
  // Predicated region
  $region6: #{seq2seq_forward.35} parent=0 // pred_check
    _
  $region7: #{seq2seq_forward.35} parent=0 // pred_check_branch
    %11 = sbr.rel (0) target = $region9
  $region8: #{seq2seq_forward.35} parent=0 // pred_region
    _
  $region9: #{seq2seq_forward.35} parent=0 // pred_fallthru
    _
  // Predicated region
  $region10: #{seq2seq_forward.35} parent=0 // pred_check
    _
  $region11: #{seq2seq_forward.35} parent=0 // pred_check_branch
    %13 = sbr.rel (0) target = $region13
  $region12: #{seq2seq_forward.35} parent=0 // pred_region
    _
  $region13: #{seq2seq_forward.35} parent=0 // pred_fallthru
    _
  %p14 = scmp.eq.s32.totalorder 0, 0
  // Predicated region
  $region14: #{seq2seq_forward.35} parent=0 // pred_check
    %p15 = pneg %p14
  $region15: #{seq2seq_forward.35} parent=0 // pred_check_branch
    %17 = sbr.rel (%p15) target = $region17
  $region16: #{seq2seq_forward.35} parent=0 // pred_region
    %vm18 = vcmask 785408
    %19 = vst.msk [vmem:[#allocation2] sm:$0xff] %vm18, 0.0
    %20 = vst.msk [vmem:[#allocation2 + $0x8] sm:$0xff] %vm18, 0.0
  $region17: #{seq2seq_forward.35} parent=0 // pred_fallthru
    _
  %v21 = vld [vmem:[#allocation2] sm:$0xff]
  %v22 = vld [vmem:[#allocation2 + $0x8] sm:$0xff]
  %v23 = vld [vmem:[%s0] sm:$0xff]
  %v24 = vld [vmem:[%s0 + $0x8] sm:$0xff]
  %v25 = vld [vmem:[%s1] sm:$0xff]
  %v26 = vld [vmem:[%s1 + $0x8] sm:$0xff]
  %v27 = vld [vmem:[%s1 + $0x10] sm:$0xff]
  %v28 = vld [vmem:[%s1 + $0x18] sm:$0xff]
  %vm29 = vcmask 261120
  %v31 = vsel %vm29, %v23, 0
  %v34 = vsel %vm29, %v24, 0
  %36 = vmatprep.subr.mxu0 0.0
  %37 = vmatpush1.msra.mxu0 %v25
  %38 = vmatprep.subr.mxu0 0.0
  %39 = vmatpush1.msra.mxu0 %v26
  %40 = vmatprep.subr.mxu0 0.0
  %41 = vmatpush1.msra.mxu0 %v27
  %42 = vmatprep.subr.mxu0 0.0
  %43 = vmatpush1.msra.mxu0 %v28
  %44 = vmatprep.subr.mxu0 0.0
  %45 = vmatpush1.msra.mxu0 0.0
  %46 = vmatprep.subr.mxu0 0.0
  %47 = vmatpush1.msra.mxu0 0.0
  %48 = vmatprep.subr.mxu0 0.0
  %49 = vmatpush1.msra.mxu0 0.0
  %50 = vmatprep.subr.mxu0 0.0
  %51 = vmatpush1.msra.mxu0 0.0
  %52 = vmatprep.subr.mxu0 0.0
  %53 = vmatpush1.msra.mxu0 0.0
  %54 = vmatprep.subr.mxu0 0.0
  %55 = vmatpush1.msra.mxu0 0.0
  %56 = vmatprep.subr.mxu0 0.0
  %57 = vmatpush1.msra.mxu0 0.0
  %58 = vmatprep.subr.mxu0 0.0
  %59 = vmatpush1.msra.mxu0 0.0
  %60 = vmatprep.subr.mxu0 0.0
  %61 = vmatpush1.msra.mxu0 0.0
  %62 = vmatprep.subr.mxu0 0.0
  %63 = vmatpush1.msra.mxu0 0.0
  %64 = vmatprep.subr.mxu0 0.0
  %65 = vmatpush1.msra.mxu0 0.0
  %66 = vmatprep.subr.mxu0 0.0
  %67 = vmatpush1.msra.mxu0 0.0
  %68 = vmatprep.subr.mxu0 0.0
  %69 = vmatpush1.msra.mxu0 0.0
  %70 = vmatprep.subr.mxu0 0.0
  %71 = vmatpush1.msra.mxu0 0.0
  %72 = vmatprep.subr.mxu0 0.0
  %73 = vmatpush1.msra.mxu0 0.0
  %74 = vmatprep.subr.mxu0 0.0
  %75 = vmatpush1.msra.mxu0 0.0
  %76 = vmatprep.subr.mxu0 0.0
  %77 = vmatpush1.msra.mxu0 0.0
  %78 = vmatprep.subr.mxu0 0.0
  %79 = vmatpush1.msra.mxu0 0.0
  %80 = vmatprep.subr.mxu0 0.0
  %81 = vmatpush1.msra.mxu0 0.0
  %82 = vmatprep.subr.mxu0 0.0
  %83 = vmatpush1.msra.mxu0 0.0
  %84 = vmatprep.subr.mxu0 0.0
  %85 = vmatpush1.msra.mxu0 0.0
  %86 = vmatprep.subr.mxu0 0.0
  %87 = vmatpush1.msra.mxu0 0.0
  %88 = vmatprep.subr.mxu0 0.0
  %89 = vmatpush1.msra.mxu0 0.0
  %90 = vmatprep.subr.mxu0 0.0
  %91 = vmatpush1.msra.mxu0 0.0
  %92 = vmatprep.subr.mxu0 0.0
  %93 = vmatpush1.msra.mxu0 0.0
  %94 = vmatprep.subr.mxu0 0.0
  %95 = vmatpush1.msra.mxu0 0.0
  %96 = vmatprep.subr.mxu0 0.0
  %97 = vmatpush1.msra.mxu0 0.0
  %98 = vmatprep.subr.mxu0 0.0
  %99 = vmatpush1.msra.mxu0 0.0
  %100 = vmatprep.mubr.f32.mxu0 0.0
  %101 = vmatmul.mubr.f32.gmra.mrb[0].mxu0 %v31
  %v102 = vpop.f32.mrb[0].mxu0
  %v103 = vadd.f32 0.0, %v102
  %v104 = vpop.f32.mrb[0].mxu0
  %105 = vmatprep.mubr.f32.mxu0 0.0
  %106 = vmatmul.mubr.f32.gmra.mrb[0].mxu0 %v34
  %v107 = vpop.f32.mrb[0].mxu0
  %v108 = vadd.f32 0.0, %v107
  %v109 = vpop.f32.mrb[0].mxu0
  %110 = vdwg.mxu0
  %v111 = vadd.f32 %v21, %v103
  %v112 = vadd.f32 %v22, %v108
  %vm113 = vcmask 785408
  %114 = vst.msk [vmem:[#allocation2] sm:$0xff] %vm113, %v111
  %115 = vst.msk [vmem:[#allocation2 + $0x8] sm:$0xff] %vm113, %v112
  // Predicated region
  $region18: #{seq2seq_forward.35} parent=0 // pred_check
    %p116 = pneg %p14
  $region19: #{seq2seq_forward.35} parent=0 // pred_check_branch
    %118 = sbr.rel (%p116) target = $region21
  $region20: #{seq2seq_forward.35} parent=0 // pred_region
    %v119 = vld [vmem:[#allocation2] sm:$0xff]
    %v120 = vld [vmem:[#allocation2 + $0x8] sm:$0xff]
    %v121 = vld [vmem:[%s2] sm:$0x1]
    %v123 = vlaneseq
    %v124 = vshrl.u32 %v123, 7
    %v125 = vsub.s32 0, %v124
    %v126 = vrot.slane %v121, %v125
    %v128 = vadd.f32 %v119, %v126
    %v129 = vadd.f32 %v120, %v126
    %130 = vst.msk [vmem:[%s3] sm:$0xff] %vm113, %v128
    %131 = vst.msk [vmem:[%s3 + $0x8] sm:$0xff] %vm113, %v129
  $region21: #{seq2seq_forward.35} parent=0 // pred_fallthru
    _
  // Predicated region
  $region22: #{seq2seq_forward.35} parent=0 // pred_check
    _
  $region23: #{seq2seq_forward.35} parent=0 // pred_check_branch
    %133 = sbr.rel (0) target = $region25
  $region24: #{seq2seq_forward.35} parent=0 // pred_region
    _
  $region25: #{seq2seq_forward.35} parent=0 // pred_fallthru
    _
  // Predicated region
  $region26: #{seq2seq_forward.35} parent=0 // pred_check
    _
  $region27: #{seq2seq_forward.35} parent=0 // pred_check_branch
    %135 = sbr.rel (0) target = $region29
  $region28: #{seq2seq_forward.35} parent=0 // pred_region
    _
  $region29: #{seq2seq_forward.35} parent=0 // pred_fallthru
    _

// kernel: seq2seq_forward.36
$region0: #{seq2seq_forward.36}
  #allocation0 [shape = 'u32[]', space=smem, size = 0x4, offset = 0x4, fixed_abs, tag = 'smem constant byte address 0x4 - core index']
  #allocation1 [shape = 'u32[144,128]{1,0:T(1,128)}', space=vmem, size = 0x12000, scoped, tag = 'internal scratch']
  %s0 = inlined_call_operand.vmem [shape: f32[2,8,96], index: 0, kind: input, shape index: {}]
  %s1 = inlined_call_operand.vmem [shape: f32[2,1,8], index: 1, kind: input, shape index: {}]
  %s2 = inlined_call_operand.vmem [shape: f32[2,8,32], index: 2, kind: output, shape index: {}]
  %s3 = sld [smem:[#allocation0]]
  $region41: #{seq2seq_forward.36} parent=0
    _
  %s5 = ssub.s32 1, %s3
  %s6 = scalar_select 0, %s5, %s3
  loop: start=0, step=1, limit=4
  $region2: #{seq2seq_forward.36} parent=0 // loop_pre_header
    _
  $region3: #{seq2seq_forward.36} parent=0 // loop_header
    %s8 = sphi 0, %s12
    %p9 = scmp.ge.s32.totalorder %s8, 4
    %s18 = sphi 0, %s20
    %s21 = sphi 0, %s18
    %s22 = sphi 0, %s21
    %s38 = sphi 0, %s22
    %s44 = sphi 0, %s46
    %s47 = sphi 0, %s44
    %s48 = sphi 0, %s47
    %s64 = sphi 0, %s48
    %s70 = sphi 0, %s72
    %s73 = sphi 0, %s70
    %s74 = sphi 0, %s73
    %s90 = sphi 0, %s74
  $region4: #{seq2seq_forward.36} parent=0 // loop_header_branch
    %11 = sbr.rel (%p9) target = $region8
  $region5: #{seq2seq_forward.36} parent=0 // loop_body
    %s13 = ssub.s32 %s8, 1
    %s14 = ssub.s32 %s8, 2
    %s15 = sadd.s32 %s8, 1
    %s16 = ssub.s32 %s8, %s15
    %p17 = scmp.eq.s32.totalorder %s16, 0
    %s19 = sadd.s32 %s18, 1
    %s20 = scalar_select %p17, %s18, %s19
    %p23 = pneg %p17
    %p24 = scmp.eq.s32.totalorder %s8, 1
    %p25 = por %p23, %p24
    %p26 = scmp.ne.s32.totalorder %s18, %s21
    %p27 = scmp.eq.s32.totalorder %s8, 0
    %p28 = por %p26, %p27
    %p29 = scmp.ne.s32.totalorder %s18, %s21
    %p30 = scmp.eq.s32.totalorder %s13, 1
    %p31 = por %p29, %p30
    %p32 = scmp.ne.s32.totalorder %s21, %s22
    %p33 = scmp.eq.s32.totalorder %s13, 0
    %p34 = por %p32, %p33
    %p35 = scmp.ne.s32.totalorder %s21, %s22
    %p36 = scmp.eq.s32.totalorder %s14, 1
    %p37 = por %p35, %p36
    %p39 = scmp.ne.s32.totalorder %s22, %s38
    %p40 = scmp.eq.s32.totalorder %s14, 0
    %p41 = por %p39, %p40
    %s42 = ssub.s32 %s8, %s15
    %p43 = scmp.eq.s32.totalorder %s42, 0
    %s45 = sadd.s32 %s44, 1
    %s46 = scalar_select %p43, %s44, %s45
    %p49 = pneg %p43
    %p50 = scmp.eq.s32.totalorder %s8, 1
    %p51 = por %p49, %p50
    %p52 = scmp.ne.s32.totalorder %s44, %s47
    %p53 = scmp.eq.s32.totalorder %s8, 0
    %p54 = por %p52, %p53
    %p55 = scmp.ne.s32.totalorder %s44, %s47
    %p56 = scmp.eq.s32.totalorder %s13, 1
    %p57 = por %p55, %p56
    %p58 = scmp.ne.s32.totalorder %s47, %s48
    %p59 = scmp.eq.s32.totalorder %s13, 0
    %p60 = por %p58, %p59
    %p61 = scmp.ne.s32.totalorder %s47, %s48
    %p62 = scmp.eq.s32.totalorder %s14, 1
    %p63 = por %p61, %p62
    %p65 = scmp.ne.s32.totalorder %s48, %s64
    %p66 = scmp.eq.s32.totalorder %s14, 0
    %p67 = por %p65, %p66
    %s68 = ssub.s32 %s8, %s15
    %p69 = scmp.eq.s32.totalorder %s68, 0
    %s71 = sadd.s32 %s70, 1
    %s72 = scalar_select %p69, %s70, %s71
    %p75 = pneg %p69
    %p76 = scmp.eq.s32.totalorder %s8, 1
    %p77 = por %p75, %p76
    %p78 = scmp.ne.s32.totalorder %s70, %s73
    %p79 = scmp.eq.s32.totalorder %s8, 0
    %p80 = por %p78, %p79
    %p81 = scmp.ne.s32.totalorder %s70, %s73
    %p82 = scmp.eq.s32.totalorder %s13, 1
    %p83 = por %p81, %p82
    %p84 = scmp.ne.s32.totalorder %s73, %s74
    %p85 = scmp.eq.s32.totalorder %s13, 0
    %p86 = por %p84, %p85
    %p87 = scmp.ne.s32.totalorder %s73, %s74
    %p88 = scmp.eq.s32.totalorder %s14, 1
    %p89 = por %p87, %p88
    %p91 = scmp.ne.s32.totalorder %s74, %s90
    %p92 = scmp.eq.s32.totalorder %s14, 0
    %p93 = por %p91, %p92
    %p94 = scmp.le.s32.totalorder 1, %s8
    %p95 = scmp.lt.s32.totalorder %s8, 3
    %p96 = pnand %p94, %p95
    %p97 = pneg %p96
    // Predicated region
    $region9: #{seq2seq_forward.36} parent=5 // pred_check
      _
    $region10: #{seq2seq_forward.36} parent=5 // pred_check_branch
      %99 = sbr.rel (%p96) target = $region12
    $region11: #{seq2seq_forward.36} parent=5 // pred_region
      %s100 = ssub.s32 %s8, 1
    $region12: #{seq2seq_forward.36} parent=5 // pred_fallthru
      _
    %p101 = scmp.lt.s32.totalorder %s8, 2
    // Predicated region
    $region13: #{seq2seq_forward.36} parent=5 // pred_check
      %p102 = pneg %p101
    $region14: #{seq2seq_forward.36} parent=5 // pred_check_branch
      %104 = sbr.rel (%p102) target = $region16
    $region15: #{seq2seq_forward.36} parent=5 // pred_region
      // Predicated region
      $region17: #{seq2seq_forward.36} parent=15 // pred_check
        %p105 = pneg %p28
      $region18: #{seq2seq_forward.36} parent=15 // pred_check_branch
        %107 = sbr.rel (%p105) target = $region20
      $region19: #{seq2seq_forward.36} parent=15 // pred_region
        %p108 = scmp.lt.s32.totalorder %s8, 1
        %s109 = scalar_select %p108, %s8, 1
        %s110 = smul.addr %s109, 8
        %s111 = scalar_lea.vmem %s0, %s110
      $region20: #{seq2seq_forward.36} parent=15 // pred_fallthru
        _
      // Predicated region
      $region21: #{seq2seq_forward.36} parent=15 // pred_check
        %p112 = pneg %p54
      $region22: #{seq2seq_forward.36} parent=15 // pred_check_branch
        %114 = sbr.rel (%p112) target = $region24
      $region23: #{seq2seq_forward.36} parent=15 // pred_region
        %p115 = scmp.lt.s32.totalorder %s8, 1
        %s116 = scalar_select %p115, %s8, 1
        %s117 = scalar_lea.vmem %s1, %s116
      $region24: #{seq2seq_forward.36} parent=15 // pred_fallthru
        _
    $region16: #{seq2seq_forward.36} parent=5 // pred_fallthru
      _
    %p118 = scmp.le.s32.totalorder 1, %s8
    %p119 = scmp.lt.s32.totalorder %s8, 3
    %p120 = pnand %p118, %p119
    %p121 = pneg %p120
    // Predicated region
    $region25: #{seq2seq_forward.36} parent=5 // pred_check
      _
    $region26: #{seq2seq_forward.36} parent=5 // pred_check_branch
      %123 = sbr.rel (%p120) target = $region28
    $region27: #{seq2seq_forward.36} parent=5 // pred_region
      %s124 = ssub.s32 %s8, 1
      %p125 = scmp.lt.s32.totalorder %s13, 1
      %s126 = scalar_select %p125, %s13, 1
      %s127 = smul.addr %s126, 8
      %s128 = scalar_lea.vmem %s0, %s127
      %p129 = pneg %p34
      %p130 = pneg %p31
      %p131 = scmp.lt.s32.totalorder %s13, 1
      %s132 = scalar_select %p131, %s13, 1
      %s133 = scalar_lea.vmem %s1, %s132
      %p134 = pneg %p60
      %p135 = pneg %p57
      %p136 = pneg %p86
      %p137 = pneg %p83
      %p138 = scmp.lt.s32.totalorder %s13, 1
      %s139 = scalar_select %p138, %s13, 1
      %s140 = smul.addr %s139, 8
      %s141 = scalar_lea.vmem %s2, %s140
      %p142 = scmp.lt.s32.totalorder %s13, 1
      %s143 = scalar_select %p142, %s13, 1
      %s144 = smul.addr %s143, 8
      %s145 = scalar_lea.vmem %s0, %s144
      %p146 = scmp.lt.s32.totalorder %s13, 1
      %s147 = scalar_select %p146, %s13, 1
      %s148 = scalar_lea.vmem %s1, %s147
      %p149 = scmp.lt.s32.totalorder %s13, 1
      %s150 = scalar_select %p149, %s13, 1
      %s151 = smul.addr %s150, 8
      %s152 = scalar_lea.vmem %s2, %s151
      %v153 = vld [vmem:[%s145] sm:$0xff]
      %v154 = vld [vmem:[%s148] sm:$0x1]
      %vm155 = vcmp.gt.f32.partialorder %v154, 0.0
      %v156 = vsel %vm155, -1e+09, 0.0
      %158 = vrot.lane.b32.xlu0 %v153, 96
      %v159 = vpop.permute.xlu0 %158
      %vm160 = vcmask 64512
      %v161 = vsel %vm160, %v153, 0
      %v163 = vsel %vm160, %v159, 0
      %165 = vmatprep.subr.mxu0 0.0
      %166 = vmatpush1.xpose.msra.mxu0 %v163
      %167 = vmatprep.subr.mxu0 0.0
      %168 = vmatpush1.xpose.msra.mxu0 0.0
      %169 = vmatprep.subr.mxu0 0.0
      %170 = vmatpush1.xpose.msra.mxu0 0.0
      %171 = vmatprep.subr.mxu0 0.0
      %172 = vmatpush1.xpose.msra.mxu0 0.0
      %173 = vmatprep.subr.mxu0 0.0
      %174 = vmatpush1.xpose.msra.mxu0 0.0
      %175 = vmatprep.subr.mxu0 0.0
      %176 = vmatpush1.xpose.msra.mxu0 0.0
      %177 = vmatprep.subr.mxu0 0.0
      %178 = vmatpush1.xpose.msra.mxu0 0.0
      %179 = vmatprep.subr.mxu0 0.0
      %180 = vmatpush1.xpose.msra.mxu0 0.0
      %181 = vmatprep.subr.mxu0 0.0
      %182 = vmatpush1.xpose.msra.mxu0 0.0
      %183 = vmatprep.subr.mxu0 0.0
      %184 = vmatpush1.xpose.msra.mxu0 0.0
      %185 = vmatprep.subr.mxu0 0.0
      %186 = vmatpush1.xpose.msra.mxu0 0.0
      %187 = vmatprep.subr.mxu0 0.0
      %188 = vmatpush1.xpose.msra.mxu0 0.0
      %189 = vmatprep.subr.mxu0 0.0
      %190 = vmatpush1.xpose.msra.mxu0 0.0
      %191 = vmatprep.subr.mxu0 0.0
      %192 = vmatpush1.xpose.msra.mxu0 0.0
      %193 = vmatprep.subr.mxu0 0.0
      %194 = vmatpush1.xpose.msra.mxu0 0.0
      %195 = vmatprep.subr.mxu0 0.0
      %196 = vmatpush1.xpose.msra.mxu0 0.0
      %197 = vmatprep.subr.mxu0 0.0
      %198 = vmatpush1.xpose.msra.mxu0 0.0
      %199 = vmatprep.subr.mxu0 0.0
      %200 = vmatpush1.xpose.msra.mxu0 0.0
      %201 = vmatprep.subr.mxu0 0.0
      %202 = vmatpush1.xpose.msra.mxu0 0.0
      %203 = vmatprep.subr.mxu0 0.0
      %204 = vmatpush1.xpose.msra.mxu0 0.0
      %205 = vmatprep.subr.mxu0 0.0
      %206 = vmatpush1.xpose.msra.mxu0 0.0
      %207 = vmatprep.subr.mxu0 0.0
      %208 = vmatpush1.xpose.msra.mxu0 0.0
      %209 = vmatprep.subr.mxu0 0.0
      %210 = vmatpush1.xpose.msra.mxu0 0.0
      %211 = vmatprep.subr.mxu0 0.0
      %212 = vmatpush1.xpose.msra.mxu0 0.0
      %213 = vmatprep.subr.mxu0 0.0
      %214 = vmatpush1.xpose.msra.mxu0 0.0
      %215 = vmatprep.subr.mxu0 0.0
      %216 = vmatpush1.xpose.msra.mxu0 0.0
      %217 = vmatprep.subr.mxu0 0.0
      %218 = vmatpush1.xpose.msra.mxu0 0.0
      %219 = vmatprep.subr.mxu0 0.0
      %220 = vmatpush1.xpose.msra.mxu0 0.0
      %221 = vmatprep.subr.mxu0 0.0
      %222 = vmatpush1.xpose.msra.mxu0 0.0
      %223 = vmatprep.subr.mxu0 0.0
      %224 = vmatpush1.xpose.msra.mxu0 0.0
      %225 = vmatprep.subr.mxu0 0.0
      %226 = vmatpush1.xpose.msra.mxu0 0.0
      %227 = vmatprep.subr.mxu0 0.0
      %228 = vmatpush1.xpose.msra.mxu0 0.0
      %229 = vmatprep.mubr.f32.mxu0 0.0
      %230 = vmatmul.mubr.f32.gmra.mrb[0].mxu0 %v161
      %v231 = vpop.f32.mrb[0].mxu0
      %v232 = vadd.f32 0.0, %v231
      %v233 = vpop.f32.mrb[0].mxu0
      %234 = vdwg.mxu0
      %v235 = vmul.f32 %v232, 0.35355338
      %v237 = vlaneseq
      %v238 = vshrl.u32 %v237, 7
      %v239 = vsub.s32 0, %v238
      %v240 = vrot.slane %v156, %v239
      %v242 = vadd.f32 %v235, %v240
      %v243 = vsel %vm160, %v242, -inf
      %244 = vmax.xlane.f32.xlu0 %v243
      %v245 = vpop.xlane.xlu0 %244
      %v246 = vsub.f32 %v242, %v245
      %v247 = vmul.f32 %v246, 1.442695
      %v248 = vpow.pop %v247
      %v249 = vsel %vm160, %v248, 0.0
      %250 = vadd.xlane.f32.xlu0 %v249
      %v251 = vpop.xlane.xlu0 %250
      %v252 = vrcp.pop %v251
      %v253 = vmul.f32 %v248, %v252
      %254 = vrot.lane.b32.xlu0 %v153, 64
      %v255 = vpop.permute.xlu0 %254
      %v258 = vsel %vm160, %v253, 0
      %260 = vmatprep.subr.mxu0 0.0
      %261 = vmatpush1.msra.mxu0 %v255
      %262 = vmatprep.subr.mxu0 0.0
      %263 = vmatpush1.msra.mxu0 0.0
      %264 = vmatprep.subr.mxu0 0.0
      %265 = vmatpush1.msra.mxu0 0.0
      %266 = vmatprep.subr.mxu0 0.0
      %267 = vmatpush1.msra.mxu0 0.0
      %268 = vmatprep.subr.mxu0 0.0
      %269 = vmatpush1.msra.mxu0 0.0
      %270 = vmatprep.subr.mxu0 0.0
      %271 = vmatpush1.msra.mxu0 0.0
      %272 = vmatprep.subr.mxu0 0.0
      %273 = vmatpush1.msra.mxu0 0.0
      %274 = vmatprep.subr.mxu0 0.0
      %275 = vmatpush1.msra.mxu0 0.0
      %276 = vmatprep.subr.mxu0 0.0
      %277 = vmatpush1.msra.mxu0 0.0
      %278 = vmatprep.subr.mxu0 0.0
      %279 = vmatpush1.msra.mxu0 0.0
      %280 = vmatprep.subr.mxu0 0.0
      %281 = vmatpush1.msra.mxu0 0.0
      %282 = vmatprep.subr.mxu0 0.0
      %283 = vmatpush1.msra.mxu0 0.0
      %284 = vmatprep.subr.mxu0 0.0
      %285 = vmatpush1.msra.mxu0 0.0
      %286 = vmatprep.subr.mxu0 0.0
      %287 = vmatpush1.msra.mxu0 0.0
      %288 = vmatprep.subr.mxu0 0.0
      %289 = vmatpush1.msra.mxu0 0.0
      %290 = vmatprep.subr.mxu0 0.0
      %291 = vmatpush1.msra.mxu0 0.0
      %292 = vmatprep.subr.mxu0 0.0
      %293 = vmatpush1.msra.mxu0 0.0
      %294 = vmatprep.subr.mxu0 0.0
      %295 = vmatpush1.msra.mxu0 0.0
      %296 = vmatprep.subr.mxu0 0.0
      %297 = vmatpush1.msra.mxu0 0.0
      %298 = vmatprep.subr.mxu0 0.0
      %299 = vmatpush1.msra.mxu0 0.0
      %300 = vmatprep.subr.mxu0 0.0
      %301 = vmatpush1.msra.mxu0 0.0
      %302 = vmatprep.subr.mxu0 0.0
      %303 = vmatpush1.msra.mxu0 0.0
      %304 = vmatprep.subr.mxu0 0.0
      %305 = vmatpush1.msra.mxu0 0.0
      %306 = vmatprep.subr.mxu0 0.0
      %307 = vmatpush1.msra.mxu0 0.0
      %308 = vmatprep.subr.mxu0 0.0
      %309 = vmatpush1.msra.mxu0 0.0
      %310 = vmatprep.subr.mxu0 0.0
      %311 = vmatpush1.msra.mxu0 0.0
      %312 = vmatprep.subr.mxu0 0.0
      %313 = vmatpush1.msra.mxu0 0.0
      %314 = vmatprep.subr.mxu0 0.0
      %315 = vmatpush1.msra.mxu0 0.0
      %316 = vmatprep.subr.mxu0 0.0
      %317 = vmatpush1.msra.mxu0 0.0
      %318 = vmatprep.subr.mxu0 0.0
      %319 = vmatpush1.msra.mxu0 0.0
      %320 = vmatprep.subr.mxu0 0.0
      %321 = vmatpush1.msra.mxu0 0.0
      %322 = vmatprep.subr.mxu0 0.0
      %323 = vmatpush1.msra.mxu0 0.0
      %324 = vmatprep.mubr.f32.mxu0 0.0
      %325 = vmatmul.mubr.f32.gmra.mrb[0].mxu0 %v258
      %v326 = vpop.f32.mrb[0].mxu0
      %v327 = vadd.f32 0.0, %v326
      %v328 = vpop.f32.mrb[0].mxu0
      %329 = vdwg.mxu0
      %330 = vrot.lane.b32.xlu0 %v153, 120
      %v331 = vpop.permute.xlu0 %330
      %332 = vrot.lane.b32.xlu0 %v153, 88
      %v333 = vpop.permute.xlu0 %332
      %v334 = vsel %vm160, %v331, 0
      %v336 = vsel %vm160, %v333, 0
      %338 = vmatprep.subr.mxu0 0.0
      %339 = vmatpush1.xpose.msra.mxu0 %v336
      %340 = vmatprep.subr.mxu0 0.0
      %341 = vmatpush1.xpose.msra.mxu0 0.0
      %342 = vmatprep.subr.mxu0 0.0
      %343 = vmatpush1.xpose.msra.mxu0 0.0
      %344 = vmatprep.subr.mxu0 0.0
      %345 = vmatpush1.xpose.msra.mxu0 0.0
      %346 = vmatprep.subr.mxu0 0.0
      %347 = vmatpush1.xpose.msra.mxu0 0.0
      %348 = vmatprep.subr.mxu0 0.0
      %349 = vmatpush1.xpose.msra.mxu0 0.0
      %350 = vmatprep.subr.mxu0 0.0
      %351 = vmatpush1.xpose.msra.mxu0 0.0
      %352 = vmatprep.subr.mxu0 0.0
      %353 = vmatpush1.xpose.msra.mxu0 0.0
      %354 = vmatprep.subr.mxu0 0.0
      %355 = vmatpush1.xpose.msra.mxu0 0.0
      %356 = vmatprep.subr.mxu0 0.0
      %357 = vmatpush1.xpose.msra.mxu0 0.0
      %358 = vmatprep.subr.mxu0 0.0
      %359 = vmatpush1.xpose.msra.mxu0 0.0
      %360 = vmatprep.subr.mxu0 0.0
      %361 = vmatpush1.xpose.msra.mxu0 0.0
      %362 = vmatprep.subr.mxu0 0.0
      %363 = vmatpush1.xpose.msra.mxu0 0.0
      %364 = vmatprep.subr.mxu0 0.0
      %365 = vmatpush1.xpose.msra.mxu0 0.0
      %366 = vmatprep.subr.mxu0 0.0
      %367 = vmatpush1.xpose.msra.mxu0 0.0
      %368 = vmatprep.subr.mxu0 0.0
      %369 = vmatpush1.xpose.msra.mxu0 0.0
      %370 = vmatprep.subr.mxu0 0.0
      %371 = vmatpush1.xpose.msra.mxu0 0.0
      %372 = vmatprep.subr.mxu0 0.0
      %373 = vmatpush1.xpose.msra.mxu0 0.0
      %374 = vmatprep.subr.mxu0 0.0
      %375 = vmatpush1.xpose.msra.mxu0 0.0
      %376 = vmatprep.subr.mxu0 0.0
      %377 = vmatpush1.xpose.msra.mxu0 0.0
      %378 = vmatprep.subr.mxu0 0.0
      %379 = vmatpush1.xpose.msra.mxu0 0.0
      %380 = vmatprep.subr.mxu0 0.0
      %381 = vmatpush1.xpose.msra.mxu0 0.0
      %382 = vmatprep.subr.mxu0 0.0
      %383 = vmatpush1.xpose.msra.mxu0 0.0
      %384 = vmatprep.subr.mxu0 0.0
      %385 = vmatpush1.xpose.msra.mxu0 0.0
      %386 = vmatprep.subr.mxu0 0.0
      %387 = vmatpush1.xpose.msra.mxu0 0.0
      %388 = vmatprep.subr.mxu0 0.0
      %389 = vmatpush1.xpose.msra.mxu0 0.0
      %390 = vmatprep.subr.mxu0 0.0
      %391 = vmatpush1.xpose.msra.mxu0 0.0
      %392 = vmatprep.subr.mxu0 0.0
      %393 = vmatpush1.xpose.msra.mxu0 0.0
      %394 = vmatprep.subr.mxu0 0.0
      %395 = vmatpush1.xpose.msra.mxu0 0.0
      %396 = vmatprep.subr.mxu0 0.0
      %397 = vmatpush1.xpose.msra.mxu0 0.0
      %398 = vmatprep.subr.mxu0 0.0
      %399 = vmatpush1.xpose.msra.mxu0 0.0
      %400 = vmatprep.subr.mxu0 0.0
      %401 = vmatpush1.xpose.msra.mxu0 0.0
      %402 = vmatprep.mubr.f32.mxu0 0.0
      %403 = vmatmul.mubr.f32.gmra.mrb[0].mxu0 %v334
      %v404 = vpop.f32.mrb[0].mxu0
      %v405 = vadd.f32 0.0, %v404
      %v406 = vpop.f32.mrb[0].mxu0
      %407 = vdwg.mxu0
      %v408 = vmul.f32 %v405, 0.35355338
      %v409 = vadd.f32 %v408, %v240
      %v410 = vsel %vm160, %v409, -inf
      %411 = vmax.xlane.f32.xlu0 %v410
      %v412 = vpop.xlane.xlu0 %411
      %v413 = vsub.f32 %v409, %v412
      %v414 = vmul.f32 %v413, 1.442695
      %v415 = vpow.pop %v414
      %v416 = vsel %vm160, %v415, 0.0
      %417 = vadd.xlane.f32.xlu0 %v416
      %v418 = vpop.xlane.xlu0 %417
      %v419 = vrcp.pop %v418
      %v420 = vmul.f32 %v415, %v419
      %421 = vrot.lane.b32.xlu0 %v153, 56
      %v422 = vpop.permute.xlu0 %421
      %v425 = vsel %vm160, %v420, 0
      %427 = vmatprep.subr.mxu0 0.0
      %428 = vmatpush1.msra.mxu0 %v422
      %429 = vmatprep.subr.mxu0 0.0
      %430 = vmatpush1.msra.mxu0 0.0
      %431 = vmatprep.subr.mxu0 0.0
      %432 = vmatpush1.msra.mxu0 0.0
      %433 = vmatprep.subr.mxu0 0.0
      %434 = vmatpush1.msra.mxu0 0.0
      %435 = vmatprep.subr.mxu0 0.0
      %436 = vmatpush1.msra.mxu0 0.0
      %437 = vmatprep.subr.mxu0 0.0
      %438 = vmatpush1.msra.mxu0 0.0
      %439 = vmatprep.subr.mxu0 0.0
      %440 = vmatpush1.msra.mxu0 0.0
      %441 = vmatprep.subr.mxu0 0.0
      %442 = vmatpush1.msra.mxu0 0.0
      %443 = vmatprep.subr.mxu0 0.0
      %444 = vmatpush1.msra.mxu0 0.0
      %445 = vmatprep.subr.mxu0 0.0
      %446 = vmatpush1.msra.mxu0 0.0
      %447 = vmatprep.subr.mxu0 0.0
      %448 = vmatpush1.msra.mxu0 0.0
      %449 = vmatprep.subr.mxu0 0.0
      %450 = vmatpush1.msra.mxu0 0.0
      %451 = vmatprep.subr.mxu0 0.0
      %452 = vmatpush1.msra.mxu0 0.0
      %453 = vmatprep.subr.mxu0 0.0
      %454 = vmatpush1.msra.mxu0 0.0
      %455 = vmatprep.subr.mxu0 0.0
      %456 = vmatpush1.msra.mxu0 0.0
      %457 = vmatprep.subr.mxu0 0.0
      %458 = vmatpush1.msra.mxu0 0.0
      %459 = vmatprep.subr.mxu0 0.0
      %460 = vmatpush1.msra.mxu0 0.0
      %461 = vmatprep.subr.mxu0 0.0
      %462 = vmatpush1.msra.mxu0 0.0
      %463 = vmatprep.subr.mxu0 0.0
      %464 = vmatpush1.msra.mxu0 0.0
      %465 = vmatprep.subr.mxu0 0.0
      %466 = vmatpush1.msra.mxu0 0.0
      %467 = vmatprep.subr.mxu0 0.0
      %468 = vmatpush1.msra.mxu0 0.0
      %469 = vmatprep.subr.mxu0 0.0
      %470 = vmatpush1.msra.mxu0 0.0
      %471 = vmatprep.subr.mxu0 0.0
      %472 = vmatpush1.msra.mxu0 0.0
      %473 = vmatprep.subr.mxu0 0.0
      %474 = vmatpush1.msra.mxu0 0.0
      %475 = vmatprep.subr.mxu0 0.0
      %476 = vmatpush1.msra.mxu0 0.0
      %477 = vmatprep.subr.mxu0 0.0
      %478 = vmatpush1.msra.mxu0 0.0
      %479 = vmatprep.subr.mxu0 0.0
      %480 = vmatpush1.msra.mxu0 0.0
      %481 = vmatprep.subr.mxu0 0.0
      %482 = vmatpush1.msra.mxu0 0.0
      %483 = vmatprep.subr.mxu0 0.0
      %484 = vmatpush1.msra.mxu0 0.0
      %485 = vmatprep.subr.mxu0 0.0
      %486 = vmatpush1.msra.mxu0 0.0
      %487 = vmatprep.subr.mxu0 0.0
      %488 = vmatpush1.msra.mxu0 0.0
      %489 = vmatprep.subr.mxu0 0.0
      %490 = vmatpush1.msra.mxu0 0.0
      %491 = vmatprep.mubr.f32.mxu0 0.0
      %492 = vmatmul.mubr.f32.gmra.mrb[0].mxu0 %v425
      %v493 = vpop.f32.mrb[0].mxu0
      %v494 = vadd.f32 0.0, %v493
      %v495 = vpop.f32.mrb[0].mxu0
      %496 = vdwg.mxu0
      %497 = vrot.lane.b32.xlu0 %v153, 112
      %v498 = vpop.permute.xlu0 %497
      %499 = vrot.lane.b32.xlu0 %v153, 80
      %v500 = vpop.permute.xlu0 %499
      %v501 = vsel %vm160, %v498, 0
      %v503 = vsel %vm160, %v500, 0
      %505 = vmatprep.subr.mxu0 0.0
      %506 = vmatpush1.xpose.msra.mxu0 %v503
      %507 = vmatprep.subr.mxu0 0.0
      %508 = vmatpush1.xpose.msra.mxu0 0.0
      %509 = vmatprep.subr.mxu0 0.0
      %510 = vmatpush1.xpose.msra.mxu0 0.0
      %511 = vmatprep.subr.mxu0 0.0
      %512 = vmatpush1.xpose.msra.mxu0 0.0
      %513 = vmatprep.subr.mxu0 0.0
      %514 = vmatpush1.xpose.msra.mxu0 0.0
      %515 = vmatprep.subr.mxu0 0.0
      %516 = vmatpush1.xpose.msra.mxu0 0.0
      %517 = vmatprep.subr.mxu0 0.0
      %518 = vmatpush1.xpose.msra.mxu0 0.0
      %519 = vmatprep.subr.mxu0 0.0
      %520 = vmatpush1.xpose.msra.mxu0 0.0
      %521 = vmatprep.subr.mxu0 0.0
      %522 = vmatpush1.xpose.msra.mxu0 0.0
      %523 = vmatprep.subr.mxu0 0.0
      %524 = vmatpush1.xpose.msra.mxu0 0.0
      %525 = vmatprep.subr.mxu0 0.0
      %526 = vmatpush1.xpose.msra.mxu0 0.0
      %527 = vmatprep.subr.mxu0 0.0
      %528 = vmatpush1.xpose.msra.mxu0 0.0
      %529 = vmatprep.subr.mxu0 0.0
      %530 = vmatpush1.xpose.msra.mxu0 0.0
      %531 = vmatprep.subr.mxu0 0.0
      %532 = vmatpush1.xpose.msra.mxu0 0.0
      %533 = vmatprep.subr.mxu0 0.0
      %534 = vmatpush1.xpose.msra.mxu0 0.0
      %535 = vmatprep.subr.mxu0 0.0
      %536 = vmatpush1.xpose.msra.mxu0 0.0
      %537 = vmatprep.subr.mxu0 0.0
      %538 = vmatpush1.xpose.msra.mxu0 0.0
      %539 = vmatprep.subr.mxu0 0.0
      %540 = vmatpush1.xpose.msra.mxu0 0.0
      %541 = vmatprep.subr.mxu0 0.0
      %542 = vmatpush1.xpose.msra.mxu0 0.0
      %543 = vmatprep.subr.mxu0 0.0
      %544 = vmatpush1.xpose.msra.mxu0 0.0
      %545 = vmatprep.subr.mxu0 0.0
      %546 = vmatpush1.xpose.msra.mxu0 0.0
      %547 = vmatprep.subr.mxu0 0.0
      %548 = vmatpush1.xpose.msra.mxu0 0.0
      %549 = vmatprep.subr.mxu0 0.0
      %550 = vmatpush1.xpose.msra.mxu0 0.0
      %551 = vmatprep.subr.mxu0 0.0
      %552 = vmatpush1.xpose.msra.mxu0 0.0
      %553 = vmatprep.subr.mxu0 0.0
      %554 = vmatpush1.xpose.msra.mxu0 0.0
      %555 = vmatprep.subr.mxu0 0.0
      %556 = vmatpush1.xpose.msra.mxu0 0.0
      %557 = vmatprep.subr.mxu0 0.0
      %558 = vmatpush1.xpose.msra.mxu0 0.0
      %559 = vmatprep.subr.mxu0 0.0
      %560 = vmatpush1.xpose.msra.mxu0 0.0
      %561 = vmatprep.subr.mxu0 0.0
      %562 = vmatpush1.xpose.msra.mxu0 0.0
      %563 = vmatprep.subr.mxu0 0.0
      %564 = vmatpush1.xpose.msra.mxu0 0.0
      %565 = vmatprep.subr.mxu0 0.0
      %566 = vmatpush1.xpose.msra.mxu0 0.0
      %567 = vmatprep.subr.mxu0 0.0
      %568 = vmatpush1.xpose.msra.mxu0 0.0
      %569 = vmatprep.mubr.f32.mxu0 0.0
      %570 = vmatmul.mubr.f32.gmra.mrb[0].mxu0 %v501
      %v571 = vpop.f32.mrb[0].mxu0
      %v572 = vadd.f32 0.0, %v571
      %v573 = vpop.f32.mrb[0].mxu0
      %574 = vdwg.mxu0
      %v575 = vmul.f32 %v572, 0.35355338
      %v576 = vadd.f32 %v575, %v240
      %v577 = vsel %vm160, %v576, -inf
      %578 = vmax.xlane.f32.xlu0 %v577
      %v579 = vpop.xlane.xlu0 %578
      %v580 = vsub.f32 %v576, %v579
      %v581 = vmul.f32 %v580, 1.442695
      %v582 = vpow.pop %v581
      %v583 = vsel %vm160, %v582, 0.0
      %584 = vadd.xlane.f32.xlu0 %v583
      %v585 = vpop.xlane.xlu0 %584
      %v586 = vrcp.pop %v585
      %v587 = vmul.f32 %v582, %v586
      %588 = vrot.lane.b32.xlu0 %v153, 48
      %v589 = vpop.permute.xlu0 %588
      %v592 = vsel %vm160, %v587, 0
      %594 = vmatprep.subr.mxu0 0.0
      %595 = vmatpush1.msra.mxu0 %v589
      %596 = vmatprep.subr.mxu0 0.0
      %597 = vmatpush1.msra.mxu0 0.0
      %598 = vmatprep.subr.mxu0 0.0
      %599 = vmatpush1.msra.mxu0 0.0
      %600 = vmatprep.subr.mxu0 0.0
      %601 = vmatpush1.msra.mxu0 0.0
      %602 = vmatprep.subr.mxu0 0.0
      %603 = vmatpush1.msra.mxu0 0.0
      %604 = vmatprep.subr.mxu0 0.0
      %605 = vmatpush1.msra.mxu0 0.0
      %606 = vmatprep.subr.mxu0 0.0
      %607 = vmatpush1.msra.mxu0 0.0
      %608 = vmatprep.subr.mxu0 0.0
      %609 = vmatpush1.msra.mxu0 0.0
      %610 = vmatprep.subr.mxu0 0.0
      %611 = vmatpush1.msra.mxu0 0.0
      %612 = vmatprep.subr.mxu0 0.0
      %613 = vmatpush1.msra.mxu0 0.0
      %614 = vmatprep.subr.mxu0 0.0
      %615 = vmatpush1.msra.mxu0 0.0
      %616 = vmatprep.subr.mxu0 0.0
      %617 = vmatpush1.msra.mxu0 0.0
      %618 = vmatprep.subr.mxu0 0.0
      %619 = vmatpush1.msra.mxu0 0.0
      %620 = vmatprep.subr.mxu0 0.0
      %621 = vmatpush1.msra.mxu0 0.0
      %622 = vmatprep.subr.mxu0 0.0
      %623 = vmatpush1.msra.mxu0 0.0
      %624 = vmatprep.subr.mxu0 0.0
      %625 = vmatpush1.msra.mxu0 0.0
      %626 = vmatprep.subr.mxu0 0.0
      %627 = vmatpush1.msra.mxu0 0.0
      %628 = vmatprep.subr.mxu0 0.0
      %629 = vmatpush1.msra.mxu0 0.0
      %630 = vmatprep.subr.mxu0 0.0
      %631 = vmatpush1.msra.mxu0 0.0
      %632 = vmatprep.subr.mxu0 0.0
      %633 = vmatpush1.msra.mxu0 0.0
      %634 = vmatprep.subr.mxu0 0.0
      %635 = vmatpush1.msra.mxu0 0.0
      %636 = vmatprep.subr.mxu0 0.0
      %637 = vmatpush1.msra.mxu0 0.0
      %638 = vmatprep.subr.mxu0 0.0
      %639 = vmatpush1.msra.mxu0 0.0
      %640 = vmatprep.subr.mxu0 0.0
      %641 = vmatpush1.msra.mxu0 0.0
      %642 = vmatprep.subr.mxu0 0.0
      %643 = vmatpush1.msra.mxu0 0.0
      %644 = vmatprep.subr.mxu0 0.0
      %645 = vmatpush1.msra.mxu0 0.0
      %646 = vmatprep.subr.mxu0 0.0
      %647 = vmatpush1.msra.mxu0 0.0
      %648 = vmatprep.subr.mxu0 0.0
      %649 = vmatpush1.msra.mxu0 0.0
      %650 = vmatprep.subr.mxu0 0.0
      %651 = vmatpush1.msra.mxu0 0.0
      %652 = vmatprep.subr.mxu0 0.0
      %653 = vmatpush1.msra.mxu0 0.0
      %654 = vmatprep.subr.mxu0 0.0
      %655 = vmatpush1.msra.mxu0 0.0
      %656 = vmatprep.subr.mxu0 0.0
      %657 = vmatpush1.msra.mxu0 0.0
      %658 = vmatprep.mubr.f32.mxu0 0.0
      %659 = vmatmul.mubr.f32.gmra.mrb[0].mxu0 %v592
      %v660 = vpop.f32.mrb[0].mxu0
      %v661 = vadd.f32 0.0, %v660
      %v662 = vpop.f32.mrb[0].mxu0
      %663 = vdwg.mxu0
      %664 = vrot.lane.b32.xlu0 %v153, 104
      %v665 = vpop.permute.xlu0 %664
      %666 = vrot.lane.b32.xlu0 %v153, 72
      %v667 = vpop.permute.xlu0 %666
      %v668 = vsel %vm160, %v665, 0
      %v670 = vsel %vm160, %v667, 0
      %672 = vmatprep.subr.mxu0 0.0
      %673 = vmatpush1.xpose.msra.mxu0 %v670
      %674 = vmatprep.subr.mxu0 0.0
      %675 = vmatpush1.xpose.msra.mxu0 0.0
      %676 = vmatprep.subr.mxu0 0.0
      %677 = vmatpush1.xpose.msra.mxu0 0.0
      %678 = vmatprep.subr.mxu0 0.0
      %679 = vmatpush1.xpose.msra.mxu0 0.0
      %680 = vmatprep.subr.mxu0 0.0
      %681 = vmatpush1.xpose.msra.mxu0 0.0
      %682 = vmatprep.subr.mxu0 0.0
      %683 = vmatpush1.xpose.msra.mxu0 0.0
      %684 = vmatprep.subr.mxu0 0.0
      %685 = vmatpush1.xpose.msra.mxu0 0.0
      %686 = vmatprep.subr.mxu0 0.0
      %687 = vmatpush1.xpose.msra.mxu0 0.0
      %688 = vmatprep.subr.mxu0 0.0
      %689 = vmatpush1.xpose.msra.mxu0 0.0
      %690 = vmatprep.subr.mxu0 0.0
      %691 = vmatpush1.xpose.msra.mxu0 0.0
      %692 = vmatprep.subr.mxu0 0.0
      %693 = vmatpush1.xpose.msra.mxu0 0.0
      %694 = vmatprep.subr.mxu0 0.0
      %695 = vmatpush1.xpose.msra.mxu0 0.0
      %696 = vmatprep.subr.mxu0 0.0
      %697 = vmatpush1.xpose.msra.mxu0 0.0
      %698 = vmatprep.subr.mxu0 0.0
      %699 = vmatpush1.xpose.msra.mxu0 0.0
      %700 = vmatprep.subr.mxu0 0.0
      %701 = vmatpush1.xpose.msra.mxu0 0.0
      %702 = vmatprep.subr.mxu0 0.0
      %703 = vmatpush1.xpose.msra.mxu0 0.0
      %704 = vmatprep.subr.mxu0 0.0
      %705 = vmatpush1.xpose.msra.mxu0 0.0
      %706 = vmatprep.subr.mxu0 0.0
      %707 = vmatpush1.xpose.msra.mxu0 0.0
      %708 = vmatprep.subr.mxu0 0.0
      %709 = vmatpush1.xpose.msra.mxu0 0.0
      %710 = vmatprep.subr.mxu0 0.0
      %711 = vmatpush1.xpose.msra.mxu0 0.0
      %712 = vmatprep.subr.mxu0 0.0
      %713 = vmatpush1.xpose.msra.mxu0 0.0
      %714 = vmatprep.subr.mxu0 0.0
      %715 = vmatpush1.xpose.msra.mxu0 0.0
      %716 = vmatprep.subr.mxu0 0.0
      %717 = vmatpush1.xpose.msra.mxu0 0.0
      %718 = vmatprep.subr.mxu0 0.0
      %719 = vmatpush1.xpose.msra.mxu0 0.0
      %720 = vmatprep.subr.mxu0 0.0
      %721 = vmatpush1.xpose.msra.mxu0 0.0
      %722 = vmatprep.subr.mxu0 0.0
      %723 = vmatpush1.xpose.msra.mxu0 0.0
      %724 = vmatprep.subr.mxu0 0.0
      %725 = vmatpush1.xpose.msra.mxu0 0.0
      %726 = vmatprep.subr.mxu0 0.0
      %727 = vmatpush1.xpose.msra.mxu0 0.0
      %728 = vmatprep.subr.mxu0 0.0
      %729 = vmatpush1.xpose.msra.mxu0 0.0
      %730 = vmatprep.subr.mxu0 0.0
      %731 = vmatpush1.xpose.msra.mxu0 0.0
      %732 = vmatprep.subr.mxu0 0.0
      %733 = vmatpush1.xpose.msra.mxu0 0.0
      %734 = vmatprep.subr.mxu0 0.0
      %735 = vmatpush1.xpose.msra.mxu0 0.0
      %736 = vmatprep.mubr.f32.mxu0 0.0
      %737 = vmatmul.mubr.f32.gmra.mrb[0].mxu0 %v668
      %v738 = vpop.f32.mrb[0].mxu0
      %v739 = vadd.f32 0.0, %v738
      %v740 = vpop.f32.mrb[0].mxu0
      %741 = vdwg.mxu0
      %v742 = vmul.f32 %v739, 0.35355338
      %v743 = vadd.f32 %v742, %v240
      %v744 = vsel %vm160, %v743, -inf
      %745 = vmax.xlane.f32.xlu0 %v744
      %v746 = vpop.xlane.xlu0 %745
      %v747 = vsub.f32 %v743, %v746
      %v748 = vmul.f32 %v747, 1.442695
      %v749 = vpow.pop %v748
      %v750 = vsel %vm160, %v749, 0.0
      %751 = vadd.xlane.f32.xlu0 %v750
      %v752 = vpop.xlane.xlu0 %751
      %v753 = vrcp.pop %v752
      %v754 = vmul.f32 %v749, %v753
      %755 = vrot.lane.b32.xlu0 %v153, 40
      %v756 = vpop.permute.xlu0 %755
      %v759 = vsel %vm160, %v754, 0
      %761 = vmatprep.subr.mxu0 0.0
      %762 = vmatpush1.msra.mxu0 %v756
      %763 = vmatprep.subr.mxu0 0.0
      %764 = vmatpush1.msra.mxu0 0.0
      %765 = vmatprep.subr.mxu0 0.0
      %766 = vmatpush1.msra.mxu0 0.0
      %767 = vmatprep.subr.mxu0 0.0
      %768 = vmatpush1.msra.mxu0 0.0
      %769 = vmatprep.subr.mxu0 0.0
      %770 = vmatpush1.msra.mxu0 0.0
      %771 = vmatprep.subr.mxu0 0.0
      %772 = vmatpush1.msra.mxu0 0.0
      %773 = vmatprep.subr.mxu0 0.0
      %774 = vmatpush1.msra.mxu0 0.0
      %775 = vmatprep.subr.mxu0 0.0
      %776 = vmatpush1.msra.mxu0 0.0
      %777 = vmatprep.subr.mxu0 0.0
      %778 = vmatpush1.msra.mxu0 0.0
      %779 = vmatprep.subr.mxu0 0.0
      %780 = vmatpush1.msra.mxu0 0.0
      %781 = vmatprep.subr.mxu0 0.0
      %782 = vmatpush1.msra.mxu0 0.0
      %783 = vmatprep.subr.mxu0 0.0
      %784 = vmatpush1.msra.mxu0 0.0
      %785 = vmatprep.subr.mxu0 0.0
      %786 = vmatpush1.msra.mxu0 0.0
      %787 = vmatprep.subr.mxu0 0.0
      %788 = vmatpush1.msra.mxu0 0.0
      %789 = vmatprep.subr.mxu0 0.0
      %790 = vmatpush1.msra.mxu0 0.0
      %791 = vmatprep.subr.mxu0 0.0
      %792 = vmatpush1.msra.mxu0 0.0
      %793 = vmatprep.subr.mxu0 0.0
      %794 = vmatpush1.msra.mxu0 0.0
      %795 = vmatprep.subr.mxu0 0.0
      %796 = vmatpush1.msra.mxu0 0.0
      %797 = vmatprep.subr.mxu0 0.0
      %798 = vmatpush1.msra.mxu0 0.0
      %799 = vmatprep.subr.mxu0 0.0
      %800 = vmatpush1.msra.mxu0 0.0
      %801 = vmatprep.subr.mxu0 0.0
      %802 = vmatpush1.msra.mxu0 0.0
      %803 = vmatprep.subr.mxu0 0.0
      %804 = vmatpush1.msra.mxu0 0.0
      %805 = vmatprep.subr.mxu0 0.0
      %806 = vmatpush1.msra.mxu0 0.0
      %807 = vmatprep.subr.mxu0 0.0
      %808 = vmatpush1.msra.mxu0 0.0
      %809 = vmatprep.subr.mxu0 0.0
      %810 = vmatpush1.msra.mxu0 0.0
      %811 = vmatprep.subr.mxu0 0.0
      %812 = vmatpush1.msra.mxu0 0.0
      %813 = vmatprep.subr.mxu0 0.0
      %814 = vmatpush1.msra.mxu0 0.0
      %815 = vmatprep.subr.mxu0 0.0
      %816 = vmatpush1.msra.mxu0 0.0
      %817 = vmatprep.subr.mxu0 0.0
      %818 = vmatpush1.msra.mxu0 0.0
      %819 = vmatprep.subr.mxu0 0.0
      %820 = vmatpush1.msra.mxu0 0.0
      %821 = vmatprep.subr.mxu0 0.0
      %822 = vmatpush1.msra.mxu0 0.0
      %823 = vmatprep.subr.mxu0 0.0
      %824 = vmatpush1.msra.mxu0 0.0
      %825 = vmatprep.mubr.f32.mxu0 0.0
      %826 = vmatmul.mubr.f32.gmra.mrb[0].mxu0 %v759
      %v827 = vpop.f32.mrb[0].mxu0
      %v828 = vadd.f32 0.0, %v827
      %v829 = vpop.f32.mrb[0].mxu0
      %830 = vdwg.mxu0
      %832 = vrot.lane.b32.xlu0 %v494, 8
      %v833 = vpop.permute.xlu0 %832
      %836 = vrot.lane.b32.xlu0 %v661, 16
      %v837 = vpop.permute.xlu0 %836
      %840 = vrot.lane.b32.xlu0 %v828, 24
      %v841 = vpop.permute.xlu0 %840
      %v843 = vsel %vm160, %v327, %v833
      %vm844 = vcmask 130048
      %v845 = vsel %vm844, %v843, %v837
      %vm846 = vcmask 195584
      %v847 = vsel %vm846, %v845, %v841
      %vm848 = vcmask 261120
      %849 = vst.msk [vmem:[%s152] sm:$0xff] %vm848, %v847
      %p850 = scmp.lt.s32.totalorder %s13, 1
      %s851 = scalar_select %p850, %s13, 1
      %s852 = smul.addr %s851, 8
      %s853 = scalar_lea.vmem %s2, %s852
      // Predicated region
      $region29: #{seq2seq_forward.36} parent=27 // pred_check
        %p854 = pneg %p83
      $region30: #{seq2seq_forward.36} parent=27 // pred_check_branch
        %856 = sbr.rel (%p854) target = $region32
      $region31: #{seq2seq_forward.36} parent=27 // pred_region
        _
      $region32: #{seq2seq_forward.36} parent=27 // pred_fallthru
        _
    $region28: #{seq2seq_forward.36} parent=5 // pred_fallthru
      _
    %p857 = scmp.le.s32.totalorder 2, %s8
    // Predicated region
    $region33: #{seq2seq_forward.36} parent=5 // pred_check
      %p858 = pneg %p857
    $region34: #{seq2seq_forward.36} parent=5 // pred_check_branch
      %860 = sbr.rel (%p858) target = $region36
    $region35: #{seq2seq_forward.36} parent=5 // pred_region
      %s861 = ssub.s32 %s8, 2
      // Predicated region
      $region37: #{seq2seq_forward.36} parent=35 // pred_check
        %p862 = pneg %p89
      $region38: #{seq2seq_forward.36} parent=35 // pred_check_branch
        %864 = sbr.rel (%p862) target = $region40
      $region39: #{seq2seq_forward.36} parent=35 // pred_region
        %p865 = scmp.lt.s32.totalorder %s14, 1
        %s866 = scalar_select %p865, %s14, 1
        %s867 = smul.addr %s866, 8
        %s868 = scalar_lea.vmem %s2, %s867
      $region40: #{seq2seq_forward.36} parent=35 // pred_fallthru
        _
    $region36: #{seq2seq_forward.36} parent=5 // pred_fallthru
      _
  $region6: #{seq2seq_forward.36} parent=0 // loop_footer
    %s12 = sadd.s32 1, %s8
  $region7: #{seq2seq_forward.36} parent=0 // loop_footer_branch
    %7 = sbr.rel target = $region3
  $region8: #{seq2seq_forward.36} parent=0 // loop_exit
    _

// kernel: seq2seq_forward.52
$region0: #{seq2seq_forward.52}
  #allocation0 [shape = 'u32[]', space=smem, size = 0x4, offset = 0x4, fixed_abs, tag = 'smem constant byte address 0x4 - core index']
  #allocation1 [shape = 'u32[144,128]{1,0:T(1,128)}', space=vmem, size = 0x12000, scoped, tag = 'internal scratch']
  #allocation2 [shape = 'f32[16,64]{1,0:T(8,128)}', space=vmem, size = 0x2000, scoped, tag = 'scratch operand']
  %s0 = inlined_call_operand.vmem [shape: f32[16,32], index: 0, kind: input, shape index: {}]
  %s1 = inlined_call_operand.vmem [shape: f32[32,64], index: 1, kind: input, shape index: {}]
  %s2 = inlined_call_operand.vmem [shape: f32[1,64], index: 2, kind: input, shape index: {}]
  %s3 = inlined_call_operand.vmem [shape: f32[16,64], index: 3, kind: output, shape index: {}]
  %s4 = sld [smem:[#allocation0]]
  $region30: #{seq2seq_forward.52} parent=0
    _
  %s6 = ssub.s32 1, %s4
  %s7 = scalar_select 0, %s6, %s4
  // Predicated region
  $region2: #{seq2seq_forward.52} parent=0 // pred_check
    _
  $region3: #{seq2seq_forward.52} parent=0 // pred_check_branch
    %9 = sbr.rel (0) target = $region5
  $region4: #{seq2seq_forward.52} parent=0 // pred_region
    _
  $region5: #{seq2seq_forward.52} parent=0 // pred_fallthru
    _
  // Predicated region
  $region6: #{seq2seq_forward.52} parent=0 // pred_check
    _
  $region7: #{seq2seq_forward.52} parent=0 // pred_check_branch
    %11 = sbr.rel (0) target = $region9
  $region8: #{seq2seq_forward.52} parent=0 // pred_region
    _
  $region9: #{seq2seq_forward.52} parent=0 // pred_fallthru
    _
  // Predicated region
  $region10: #{seq2seq_forward.52} parent=0 // pred_check
    _
  $region11: #{seq2seq_forward.52} parent=0 // pred_check_branch
    %13 = sbr.rel (0) target = $region13
  $region12: #{seq2seq_forward.52} parent=0 // pred_region
    _
  $region13: #{seq2seq_forward.52} parent=0 // pred_fallthru
    _
  %p14 = scmp.eq.s32.totalorder 0, 0
  // Predicated region
  $region14: #{seq2seq_forward.52} parent=0 // pred_check
    %p15 = pneg %p14
  $region15: #{seq2seq_forward.52} parent=0 // pred_check_branch
    %17 = sbr.rel (%p15) target = $region17
  $region16: #{seq2seq_forward.52} parent=0 // pred_region
    %vm18 = vcmask 523264
    %19 = vst.msk [vmem:[#allocation2] sm:$0xff] %vm18, 0.0
    %20 = vst.msk [vmem:[#allocation2 + $0x8] sm:$0xff] %vm18, 0.0
  $region17: #{seq2seq_forward.52} parent=0 // pred_fallthru
    _
  %v21 = vld [vmem:[#allocation2] sm:$0xff]
  %v22 = vld [vmem:[#allocation2 + $0x8] sm:$0xff]
  %v23 = vld [vmem:[%s0] sm:$0xff]
  %v24 = vld [vmem:[%s0 + $0x8] sm:$0xff]
  %v25 = vld [vmem:[%s1] sm:$0xff]
  %v26 = vld [vmem:[%s1 + $0x8] sm:$0xff]
  %v27 = vld [vmem:[%s1 + $0x10] sm:$0xff]
  %v28 = vld [vmem:[%s1 + $0x18] sm:$0xff]
  %vm29 = vcmask 261120
  %v31 = vsel %vm29, %v23, 0
  %v34 = vsel %vm29, %v24, 0
  %36 = vmatprep.subr.mxu0 0.0
  %37 = vmatpush1.msra.mxu0 %v25
  %38 = vmatprep.subr.mxu0 0.0
  %39 = vmatpush1.msra.mxu0 %v26
  %40 = vmatprep.subr.mxu0 0.0
  %41 = vmatpush1.msra.mxu0 %v27
  %42 = vmatprep.subr.mxu0 0.0
  %43 = vmatpush1.msra.mxu0 %v28
  %44 = vmatprep.subr.mxu0 0.0
  %45 = vmatpush1.msra.mxu0 0.0
  %46 = vmatprep.subr.mxu0 0.0
  %47 = vmatpush1.msra.mxu0 0.0
  %48 = vmatprep.subr.mxu0 0.0
  %49 = vmatpush1.msra.mxu0 0.0
  %50 = vmatprep.subr.mxu0 0.0
  %51 = vmatpush1.msra.mxu0 0.0
  %52 = vmatprep.subr.mxu0 0.0
  %53 = vmatpush1.msra.mxu0 0.0
  %54 = vmatprep.subr.mxu0 0.0
  %55 = vmatpush1.msra.mxu0 0.0
  %56 = vmatprep.subr.mxu0 0.0
  %57 = vmatpush1.msra.mxu0 0.0
  %58 = vmatprep.subr.mxu0 0.0
  %59 = vmatpush1.msra.mxu0 0.0
  %60 = vmatprep.subr.mxu0 0.0
  %61 = vmatpush1.msra.mxu0 0.0
  %62 = vmatprep.subr.mxu0 0.0
  %63 = vmatpush1.msra.mxu0 0.0
  %64 = vmatprep.subr.mxu0 0.0
  %65 = vmatpush1.msra.mxu0 0.0
  %66 = vmatprep.subr.mxu0 0.0
  %67 = vmatpush1.msra.mxu0 0.0
  %68 = vmatprep.subr.mxu0 0.0
  %69 = vmatpush1.msra.mxu0 0.0
  %70 = vmatprep.subr.mxu0 0.0
  %71 = vmatpush1.msra.mxu0 0.0
  %72 = vmatprep.subr.mxu0 0.0
  %73 = vmatpush1.msra.mxu0 0.0
  %74 = vmatprep.subr.mxu0 0.0
  %75 = vmatpush1.msra.mxu0 0.0
  %76 = vmatprep.subr.mxu0 0.0
  %77 = vmatpush1.msra.mxu0 0.0
  %78 = vmatprep.subr.mxu0 0.0
  %79 = vmatpush1.msra.mxu0 0.0
  %80 = vmatprep.subr.mxu0 0.0
  %81 = vmatpush1.msra.mxu0 0.0
  %82 = vmatprep.subr.mxu0 0.0
  %83 = vmatpush1.msra.mxu0 0.0
  %84 = vmatprep.subr.mxu0 0.0
  %85 = vmatpush1.msra.mxu0 0.0
  %86 = vmatprep.subr.mxu0 0.0
  %87 = vmatpush1.msra.mxu0 0.0
  %88 = vmatprep.subr.mxu0 0.0
  %89 = vmatpush1.msra.mxu0 0.0
  %90 = vmatprep.subr.mxu0 0.0
  %91 = vmatpush1.msra.mxu0 0.0
  %92 = vmatprep.subr.mxu0 0.0
  %93 = vmatpush1.msra.mxu0 0.0
  %94 = vmatprep.subr.mxu0 0.0
  %95 = vmatpush1.msra.mxu0 0.0
  %96 = vmatprep.subr.mxu0 0.0
  %97 = vmatpush1.msra.mxu0 0.0
  %98 = vmatprep.subr.mxu0 0.0
  %99 = vmatpush1.msra.mxu0 0.0
  %100 = vmatprep.mubr.f32.mxu0 0.0
  %101 = vmatmul.mubr.f32.gmra.mrb[0].mxu0 %v31
  %v102 = vpop.f32.mrb[0].mxu0
  %v103 = vadd.f32 0.0, %v102
  %v104 = vpop.f32.mrb[0].mxu0
  %105 = vmatprep.mubr.f32.mxu0 0.0
  %106 = vmatmul.mubr.f32.gmra.mrb[0].mxu0 %v34
  %v107 = vpop.f32.mrb[0].mxu0
  %v108 = vadd.f32 0.0, %v107
  %v109 = vpop.f32.mrb[0].mxu0
  %110 = vdwg.mxu0
  %v111 = vadd.f32 %v21, %v103
  %v112 = vadd.f32 %v22, %v108
  %vm113 = vcmask 523264
  %114 = vst.msk [vmem:[#allocation2] sm:$0xff] %vm113, %v111
  %115 = vst.msk [vmem:[#allocation2 + $0x8] sm:$0xff] %vm113, %v112
  // Predicated region
  $region18: #{seq2seq_forward.52} parent=0 // pred_check
    %p116 = pneg %p14
  $region19: #{seq2seq_forward.52} parent=0 // pred_check_branch
    %118 = sbr.rel (%p116) target = $region21
  $region20: #{seq2seq_forward.52} parent=0 // pred_region
    %v119 = vld [vmem:[#allocation2] sm:$0xff]
    %v120 = vld [vmem:[#allocation2 + $0x8] sm:$0xff]
    %v121 = vld [vmem:[%s2] sm:$0x1]
    %v123 = vlaneseq
    %v124 = vshrl.u32 %v123, 7
    %v125 = vsub.s32 0, %v124
    %v126 = vrot.slane %v121, %v125
    %v128 = vadd.f32 %v119, %v126
    %v129 = vadd.f32 %v120, %v126
    %130 = vst.msk [vmem:[%s3] sm:$0xff] %vm113, %v128
    %131 = vst.msk [vmem:[%s3 + $0x8] sm:$0xff] %vm113, %v129
  $region21: #{seq2seq_forward.52} parent=0 // pred_fallthru
    _
  // Predicated region
  $region22: #{seq2seq_forward.52} parent=0 // pred_check
    _
  $region23: #{seq2seq_forward.52} parent=0 // pred_check_branch
    %133 = sbr.rel (0) target = $region25
  $region24: #{seq2seq_forward.52} parent=0 // pred_region
    _
  $region25: #{seq2seq_forward.52} parent=0 // pred_fallthru
    _
  // Predicated region
  $region26: #{seq2seq_forward.52} parent=0 // pred_check
    _
  $region27: #{seq2seq_forward.52} parent=0 // pred_check_branch
    %135 = sbr.rel (0) target = $region29
  $region28: #{seq2seq_forward.52} parent=0 // pred_region
    _
  $region29: #{seq2seq_forward.52} parent=0 // pred_fallthru
    _

// kernel: seq2seq_forward.39
$region0: #{seq2seq_forward.39}
  #allocation0 [shape = 'u32[]', space=smem, size = 0x4, offset = 0x4, fixed_abs, tag = 'smem constant byte address 0x4 - core index']
  #allocation1 [shape = 'u32[144,128]{1,0:T(1,128)}', space=vmem, size = 0x12000, scoped, tag = 'internal scratch']
  %s0 = inlined_call_operand.vmem [shape: f32[16,32], index: 0, kind: input, shape index: {}]
  %s1 = inlined_call_operand.vmem [shape: f32[32,128], index: 1, kind: input, shape index: {}]
  %s2 = inlined_call_operand.vmem [shape: f32[1,128], index: 2, kind: input, shape index: {}]
  %s3 = inlined_call_operand.vmem [shape: f32[128,32], index: 3, kind: input, shape index: {}]
  %s4 = inlined_call_operand.vmem [shape: f32[1,32], index: 4, kind: input, shape index: {}]
  %s5 = inlined_call_operand.vmem [shape: f32[16,32], index: 5, kind: output, shape index: {}]
  %s6 = sld [smem:[#allocation0]]
  $region30: #{seq2seq_forward.39} parent=0
    _
  %s8 = ssub.s32 1, %s6
  %s9 = scalar_select 0, %s8, %s6
  // Predicated region
  $region2: #{seq2seq_forward.39} parent=0 // pred_check
    _
  $region3: #{seq2seq_forward.39} parent=0 // pred_check_branch
    %11 = sbr.rel (0) target = $region5
  $region4: #{seq2seq_forward.39} parent=0 // pred_region
    _
  $region5: #{seq2seq_forward.39} parent=0 // pred_fallthru
    _
  // Predicated region
  $region6: #{seq2seq_forward.39} parent=0 // pred_check
    _
  $region7: #{seq2seq_forward.39} parent=0 // pred_check_branch
    %13 = sbr.rel (0) target = $region9
  $region8: #{seq2seq_forward.39} parent=0 // pred_region
    _
  $region9: #{seq2seq_forward.39} parent=0 // pred_fallthru
    _
  // Predicated region
  $region10: #{seq2seq_forward.39} parent=0 // pred_check
    _
  $region11: #{seq2seq_forward.39} parent=0 // pred_check_branch
    %15 = sbr.rel (0) target = $region13
  $region12: #{seq2seq_forward.39} parent=0 // pred_region
    _
  $region13: #{seq2seq_forward.39} parent=0 // pred_fallthru
    _
  // Predicated region
  $region14: #{seq2seq_forward.39} parent=0 // pred_check
    _
  $region15: #{seq2seq_forward.39} parent=0 // pred_check_branch
    %17 = sbr.rel (0) target = $region17
  $region16: #{seq2seq_forward.39} parent=0 // pred_region
    _
  $region17: #{seq2seq_forward.39} parent=0 // pred_fallthru
    _
  // Predicated region
  $region18: #{seq2seq_forward.39} parent=0 // pred_check
    _
  $region19: #{seq2seq_forward.39} parent=0 // pred_check_branch
    %19 = sbr.rel (0) target = $region21
  $region20: #{seq2seq_forward.39} parent=0 // pred_region
    _
  $region21: #{seq2seq_forward.39} parent=0 // pred_fallthru
    _
  %v20 = vld [vmem:[%s0] sm:$0xff]
  %v21 = vld [vmem:[%s0 + $0x8] sm:$0xff]
  %v22 = vld [vmem:[%s1] sm:$0xff]
  %v23 = vld [vmem:[%s1 + $0x8] sm:$0xff]
  %v24 = vld [vmem:[%s1 + $0x10] sm:$0xff]
  %v25 = vld [vmem:[%s1 + $0x18] sm:$0xff]
  %v26 = vld [vmem:[%s2] sm:$0x1]
  %v28 = vlaneseq
  %v29 = vshrl.u32 %v28, 7
  %v30 = vsub.s32 0, %v29
  %v31 = vrot.slane %v26, %v30
  %vm33 = vcmask 261120
  %v35 = vsel %vm33, %v20, 0
  %v38 = vsel %vm33, %v21, 0
  %40 = vmatprep.subr.mxu0 0.0
  %41 = vmatpush1.msra.mxu0 %v22
  %42 = vmatprep.subr.mxu0 0.0
  %43 = vmatpush1.msra.mxu0 %v23
  %44 = vmatprep.subr.mxu0 0.0
  %45 = vmatpush1.msra.mxu0 %v24
  %46 = vmatprep.subr.mxu0 0.0
  %47 = vmatpush1.msra.mxu0 %v25
  %48 = vmatprep.subr.mxu0 0.0
  %49 = vmatpush1.msra.mxu0 0.0
  %50 = vmatprep.subr.mxu0 0.0
  %51 = vmatpush1.msra.mxu0 0.0
  %52 = vmatprep.subr.mxu0 0.0
  %53 = vmatpush1.msra.mxu0 0.0
  %54 = vmatprep.subr.mxu0 0.0
  %55 = vmatpush1.msra.mxu0 0.0
  %56 = vmatprep.subr.mxu0 0.0
  %57 = vmatpush1.msra.mxu0 0.0
  %58 = vmatprep.subr.mxu0 0.0
  %59 = vmatpush1.msra.mxu0 0.0
  %60 = vmatprep.subr.mxu0 0.0
  %61 = vmatpush1.msra.mxu0 0.0
  %62 = vmatprep.subr.mxu0 0.0
  %63 = vmatpush1.msra.mxu0 0.0
  %64 = vmatprep.subr.mxu0 0.0
  %65 = vmatpush1.msra.mxu0 0.0
  %66 = vmatprep.subr.mxu0 0.0
  %67 = vmatpush1.msra.mxu0 0.0
  %68 = vmatprep.subr.mxu0 0.0
  %69 = vmatpush1.msra.mxu0 0.0
  %70 = vmatprep.subr.mxu0 0.0
  %71 = vmatpush1.msra.mxu0 0.0
  %72 = vmatprep.subr.mxu0 0.0
  %73 = vmatpush1.msra.mxu0 0.0
  %74 = vmatprep.subr.mxu0 0.0
  %75 = vmatpush1.msra.mxu0 0.0
  %76 = vmatprep.subr.mxu0 0.0
  %77 = vmatpush1.msra.mxu0 0.0
  %78 = vmatprep.subr.mxu0 0.0
  %79 = vmatpush1.msra.mxu0 0.0
  %80 = vmatprep.subr.mxu0 0.0
  %81 = vmatpush1.msra.mxu0 0.0
  %82 = vmatprep.subr.mxu0 0.0
  %83 = vmatpush1.msra.mxu0 0.0
  %84 = vmatprep.subr.mxu0 0.0
  %85 = vmatpush1.msra.mxu0 0.0
  %86 = vmatprep.subr.mxu0 0.0
  %87 = vmatpush1.msra.mxu0 0.0
  %88 = vmatprep.subr.mxu0 0.0
  %89 = vmatpush1.msra.mxu0 0.0
  %90 = vmatprep.subr.mxu0 0.0
  %91 = vmatpush1.msra.mxu0 0.0
  %92 = vmatprep.subr.mxu0 0.0
  %93 = vmatpush1.msra.mxu0 0.0
  %94 = vmatprep.subr.mxu0 0.0
  %95 = vmatpush1.msra.mxu0 0.0
  %96 = vmatprep.subr.mxu0 0.0
  %97 = vmatpush1.msra.mxu0 0.0
  %98 = vmatprep.subr.mxu0 0.0
  %99 = vmatpush1.msra.mxu0 0.0
  %100 = vmatprep.subr.mxu0 0.0
  %101 = vmatpush1.msra.mxu0 0.0
  %102 = vmatprep.subr.mxu0 0.0
  %103 = vmatpush1.msra.mxu0 0.0
  %104 = vmatprep.mubr.f32.mxu0 0.0
  %105 = vmatmul.mubr.f32.gmra.mrb[0].mxu0 %v35
  %v106 = vpop.f32.mrb[0].mxu0
  %v107 = vadd.f32 %v31, %v106
  %v108 = vpop.f32.mrb[0].mxu0
  %109 = vmatprep.mubr.f32.mxu0 0.0
  %110 = vmatmul.mubr.f32.gmra.mrb[0].mxu0 %v38
  %v111 = vpop.f32.mrb[0].mxu0
  %v112 = vadd.f32 %v31, %v111
  %v113 = vpop.f32.mrb[0].mxu0
  %114 = vdwg.mxu0
  %v115 = vmax.f32 %v107, 0.0
  %v116 = vmax.f32 %v112, 0.0
  %v117 = vld [vmem:[%s3] sm:$0xff]
  %v118 = vld [vmem:[%s3 + $0x8] sm:$0xff]
  %v119 = vld [vmem:[%s3 + $0x10] sm:$0xff]
  %v120 = vld [vmem:[%s3 + $0x18] sm:$0xff]
  %v121 = vld [vmem:[%s3 + $0x20] sm:$0xff]
  %v122 = vld [vmem:[%s3 + $0x28] sm:$0xff]
  %v123 = vld [vmem:[%s3 + $0x30] sm:$0xff]
  %v124 = vld [vmem:[%s3 + $0x38] sm:$0xff]
  %v125 = vld [vmem:[%s3 + $0x40] sm:$0xff]
  %v126 = vld [vmem:[%s3 + $0x48] sm:$0xff]
  %v127 = vld [vmem:[%s3 + $0x50] sm:$0xff]
  %v128 = vld [vmem:[%s3 + $0x58] sm:$0xff]
  %v129 = vld [vmem:[%s3 + $0x60] sm:$0xff]
  %v130 = vld [vmem:[%s3 + $0x68] sm:$0xff]
  %v131 = vld [vmem:[%s3 + $0x70] sm:$0xff]
  %v132 = vld [vmem:[%s3 + $0x78] sm:$0xff]
  %v133 = vld [vmem:[%s4] sm:$0x1]
  %v135 = vlaneseq
  %v136 = vshrl.u32 %v135, 7
  %v137 = vsub.s32 0, %v136
  %v138 = vrot.slane %v133, %v137
  %140 = vmatprep.subr.mxu0 0.0
  %141 = vmatpush1.msra.mxu0 %v117
  %142 = vmatprep.subr.mxu0 0.0
  %143 = vmatpush1.msra.mxu0 %v118
  %144 = vmatprep.subr.mxu0 0.0
  %145 = vmatpush1.msra.mxu0 %v119
  %146 = vmatprep.subr.mxu0 0.0
  %147 = vmatpush1.msra.mxu0 %v120
  %148 = vmatprep.subr.mxu0 0.0
  %149 = vmatpush1.msra.mxu0 %v121
  %150 = vmatprep.subr.mxu0 0.0
  %151 = vmatpush1.msra.mxu0 %v122
  %152 = vmatprep.subr.mxu0 0.0
  %153 = vmatpush1.msra.mxu0 %v123
  %154 = vmatprep.subr.mxu0 0.0
  %155 = vmatpush1.msra.mxu0 %v124
  %156 = vmatprep.subr.mxu0 0.0
  %157 = vmatpush1.msra.mxu0 %v125
  %158 = vmatprep.subr.mxu0 0.0
  %159 = vmatpush1.msra.mxu0 %v126
  %160 = vmatprep.subr.mxu0 0.0
  %161 = vmatpush1.msra.mxu0 %v127
  %162 = vmatprep.subr.mxu0 0.0
  %163 = vmatpush1.msra.mxu0 %v128
  %164 = vmatprep.subr.mxu0 0.0
  %165 = vmatpush1.msra.mxu0 %v129
  %166 = vmatprep.subr.mxu0 0.0
  %167 = vmatpush1.msra.mxu0 %v130
  %168 = vmatprep.subr.mxu0 0.0
  %169 = vmatpush1.msra.mxu0 %v131
  %170 = vmatprep.subr.mxu0 0.0
  %171 = vmatpush1.msra.mxu0 %v132
  %172 = vmatprep.subr.mxu0 0.0
  %173 = vmatpush1.msra.mxu0 0.0
  %174 = vmatprep.subr.mxu0 0.0
  %175 = vmatpush1.msra.mxu0 0.0
  %176 = vmatprep.subr.mxu0 0.0
  %177 = vmatpush1.msra.mxu0 0.0
  %178 = vmatprep.subr.mxu0 0.0
  %179 = vmatpush1.msra.mxu0 0.0
  %180 = vmatprep.subr.mxu0 0.0
  %181 = vmatpush1.msra.mxu0 0.0
  %182 = vmatprep.subr.mxu0 0.0
  %183 = vmatpush1.msra.mxu0 0.0
  %184 = vmatprep.subr.mxu0 0.0
  %185 = vmatpush1.msra.mxu0 0.0
  %186 = vmatprep.subr.mxu0 0.0
  %187 = vmatpush1.msra.mxu0 0.0
  %188 = vmatprep.subr.mxu0 0.0
  %189 = vmatpush1.msra.mxu0 0.0
  %190 = vmatprep.subr.mxu0 0.0
  %191 = vmatpush1.msra.mxu0 0.0
  %192 = vmatprep.subr.mxu0 0.0
  %193 = vmatpush1.msra.mxu0 0.0
  %194 = vmatprep.subr.mxu0 0.0
  %195 = vmatpush1.msra.mxu0 0.0
  %196 = vmatprep.subr.mxu0 0.0
  %197 = vmatpush1.msra.mxu0 0.0
  %198 = vmatprep.subr.mxu0 0.0
  %199 = vmatpush1.msra.mxu0 0.0
  %200 = vmatprep.subr.mxu0 0.0
  %201 = vmatpush1.msra.mxu0 0.0
  %202 = vmatprep.subr.mxu0 0.0
  %203 = vmatpush1.msra.mxu0 0.0
  %204 = vmatprep.mubr.f32.mxu0 0.0
  %205 = vmatmul.mubr.f32.gmra.mrb[0].mxu0 %v115
  %v206 = vpop.f32.mrb[0].mxu0
  %v207 = vadd.f32 %v138, %v206
  %v208 = vpop.f32.mrb[0].mxu0
  %209 = vmatprep.mubr.f32.mxu0 0.0
  %210 = vmatmul.mubr.f32.gmra.mrb[0].mxu0 %v116
  %v211 = vpop.f32.mrb[0].mxu0
  %v212 = vadd.f32 %v138, %v211
  %v213 = vpop.f32.mrb[0].mxu0
  %214 = vdwg.mxu0
  %215 = vst.msk [vmem:[%s5] sm:$0xff] %vm33, %v207
  %216 = vst.msk [vmem:[%s5 + $0x8] sm:$0xff] %vm33, %v212
  // Predicated region
  $region22: #{seq2seq_forward.39} parent=0 // pred_check
    _
  $region23: #{seq2seq_forward.39} parent=0 // pred_check_branch
    %218 = sbr.rel (0) target = $region25
  $region24: #{seq2seq_forward.39} parent=0 // pred_region
    _
  $region25: #{seq2seq_forward.39} parent=0 // pred_fallthru
    _
  // Predicated region
  $region26: #{seq2seq_forward.39} parent=0 // pred_check
    _
  $region27: #{seq2seq_forward.39} parent=0 // pred_check_branch
    %220 = sbr.rel (0) target = $region29
  $region28: #{seq2seq_forward.39} parent=0 // pred_region
    _
  $region29: #{seq2seq_forward.39} parent=0 // pred_fallthru
    _

// kernel: seq2seq_forward.48
$region0: #{seq2seq_forward.48}
  #allocation0 [shape = 'u32[]', space=smem, size = 0x4, offset = 0x4, fixed_abs, tag = 'smem constant byte address 0x4 - core index']
  #allocation1 [shape = 'u32[144,128]{1,0:T(1,128)}', space=vmem, size = 0x12000, scoped, tag = 'internal scratch']
  %s0 = inlined_call_operand.vmem [shape: f32[2,8,96], index: 0, kind: input, shape index: {}]
  %s1 = inlined_call_operand.vmem [shape: f32[2,1,8], index: 1, kind: input, shape index: {}]
  %s2 = inlined_call_operand.vmem [shape: f32[2,8,32], index: 2, kind: output, shape index: {}]
  %s3 = sld [smem:[#allocation0]]
  $region41: #{seq2seq_forward.48} parent=0
    _
  %s5 = ssub.s32 1, %s3
  %s6 = scalar_select 0, %s5, %s3
  loop: start=0, step=1, limit=4
  $region2: #{seq2seq_forward.48} parent=0 // loop_pre_header
    _
  $region3: #{seq2seq_forward.48} parent=0 // loop_header
    %s8 = sphi 0, %s12
    %p9 = scmp.ge.s32.totalorder %s8, 4
    %s18 = sphi 0, %s20
    %s21 = sphi 0, %s18
    %s22 = sphi 0, %s21
    %s38 = sphi 0, %s22
    %s44 = sphi 0, %s46
    %s47 = sphi 0, %s44
    %s48 = sphi 0, %s47
    %s64 = sphi 0, %s48
    %s70 = sphi 0, %s72
    %s73 = sphi 0, %s70
    %s74 = sphi 0, %s73
    %s90 = sphi 0, %s74
  $region4: #{seq2seq_forward.48} parent=0 // loop_header_branch
    %11 = sbr.rel (%p9) target = $region8
  $region5: #{seq2seq_forward.48} parent=0 // loop_body
    %s13 = ssub.s32 %s8, 1
    %s14 = ssub.s32 %s8, 2
    %s15 = sadd.s32 %s8, 1
    %s16 = ssub.s32 %s8, %s15
    %p17 = scmp.eq.s32.totalorder %s16, 0
    %s19 = sadd.s32 %s18, 1
    %s20 = scalar_select %p17, %s18, %s19
    %p23 = pneg %p17
    %p24 = scmp.eq.s32.totalorder %s8, 1
    %p25 = por %p23, %p24
    %p26 = scmp.ne.s32.totalorder %s18, %s21
    %p27 = scmp.eq.s32.totalorder %s8, 0
    %p28 = por %p26, %p27
    %p29 = scmp.ne.s32.totalorder %s18, %s21
    %p30 = scmp.eq.s32.totalorder %s13, 1
    %p31 = por %p29, %p30
    %p32 = scmp.ne.s32.totalorder %s21, %s22
    %p33 = scmp.eq.s32.totalorder %s13, 0
    %p34 = por %p32, %p33
    %p35 = scmp.ne.s32.totalorder %s21, %s22
    %p36 = scmp.eq.s32.totalorder %s14, 1
    %p37 = por %p35, %p36
    %p39 = scmp.ne.s32.totalorder %s22, %s38
    %p40 = scmp.eq.s32.totalorder %s14, 0
    %p41 = por %p39, %p40
    %s42 = ssub.s32 %s8, %s15
    %p43 = scmp.eq.s32.totalorder %s42, 0
    %s45 = sadd.s32 %s44, 1
    %s46 = scalar_select %p43, %s44, %s45
    %p49 = pneg %p43
    %p50 = scmp.eq.s32.totalorder %s8, 1
    %p51 = por %p49, %p50
    %p52 = scmp.ne.s32.totalorder %s44, %s47
    %p53 = scmp.eq.s32.totalorder %s8, 0
    %p54 = por %p52, %p53
    %p55 = scmp.ne.s32.totalorder %s44, %s47
    %p56 = scmp.eq.s32.totalorder %s13, 1
    %p57 = por %p55, %p56
    %p58 = scmp.ne.s32.totalorder %s47, %s48
    %p59 = scmp.eq.s32.totalorder %s13, 0
    %p60 = por %p58, %p59
    %p61 = scmp.ne.s32.totalorder %s47, %s48
    %p62 = scmp.eq.s32.totalorder %s14, 1
    %p63 = por %p61, %p62
    %p65 = scmp.ne.s32.totalorder %s48, %s64
    %p66 = scmp.eq.s32.totalorder %s14, 0
    %p67 = por %p65, %p66
    %s68 = ssub.s32 %s8, %s15
    %p69 = scmp.eq.s32.totalorder %s68, 0
    %s71 = sadd.s32 %s70, 1
    %s72 = scalar_select %p69, %s70, %s71
    %p75 = pneg %p69
    %p76 = scmp.eq.s32.totalorder %s8, 1
    %p77 = por %p75, %p76
    %p78 = scmp.ne.s32.totalorder %s70, %s73
    %p79 = scmp.eq.s32.totalorder %s8, 0
    %p80 = por %p78, %p79
    %p81 = scmp.ne.s32.totalorder %s70, %s73
    %p82 = scmp.eq.s32.totalorder %s13, 1
    %p83 = por %p81, %p82
    %p84 = scmp.ne.s32.totalorder %s73, %s74
    %p85 = scmp.eq.s32.totalorder %s13, 0
    %p86 = por %p84, %p85
    %p87 = scmp.ne.s32.totalorder %s73, %s74
    %p88 = scmp.eq.s32.totalorder %s14, 1
    %p89 = por %p87, %p88
    %p91 = scmp.ne.s32.totalorder %s74, %s90
    %p92 = scmp.eq.s32.totalorder %s14, 0
    %p93 = por %p91, %p92
    %p94 = scmp.le.s32.totalorder 1, %s8
    %p95 = scmp.lt.s32.totalorder %s8, 3
    %p96 = pnand %p94, %p95
    %p97 = pneg %p96
    // Predicated region
    $region9: #{seq2seq_forward.48} parent=5 // pred_check
      _
    $region10: #{seq2seq_forward.48} parent=5 // pred_check_branch
      %99 = sbr.rel (%p96) target = $region12
    $region11: #{seq2seq_forward.48} parent=5 // pred_region
      %s100 = ssub.s32 %s8, 1
    $region12: #{seq2seq_forward.48} parent=5 // pred_fallthru
      _
    %p101 = scmp.lt.s32.totalorder %s8, 2
    // Predicated region
    $region13: #{seq2seq_forward.48} parent=5 // pred_check
      %p102 = pneg %p101
    $region14: #{seq2seq_forward.48} parent=5 // pred_check_branch
      %104 = sbr.rel (%p102) target = $region16
    $region15: #{seq2seq_forward.48} parent=5 // pred_region
      // Predicated region
      $region17: #{seq2seq_forward.48} parent=15 // pred_check
        %p105 = pneg %p28
      $region18: #{seq2seq_forward.48} parent=15 // pred_check_branch
        %107 = sbr.rel (%p105) target = $region20
      $region19: #{seq2seq_forward.48} parent=15 // pred_region
        %p108 = scmp.lt.s32.totalorder %s8, 1
        %s109 = scalar_select %p108, %s8, 1
        %s110 = smul.addr %s109, 8
        %s111 = scalar_lea.vmem %s0, %s110
      $region20: #{seq2seq_forward.48} parent=15 // pred_fallthru
        _
      // Predicated region
      $region21: #{seq2seq_forward.48} parent=15 // pred_check
        %p112 = pneg %p54
      $region22: #{seq2seq_forward.48} parent=15 // pred_check_branch
        %114 = sbr.rel (%p112) target = $region24
      $region23: #{seq2seq_forward.48} parent=15 // pred_region
        %p115 = scmp.lt.s32.totalorder %s8, 1
        %s116 = scalar_select %p115, %s8, 1
        %s117 = scalar_lea.vmem %s1, %s116
      $region24: #{seq2seq_forward.48} parent=15 // pred_fallthru
        _
    $region16: #{seq2seq_forward.48} parent=5 // pred_fallthru
      _
    %p118 = scmp.le.s32.totalorder 1, %s8
    %p119 = scmp.lt.s32.totalorder %s8, 3
    %p120 = pnand %p118, %p119
    %p121 = pneg %p120
    // Predicated region
    $region25: #{seq2seq_forward.48} parent=5 // pred_check
      _
    $region26: #{seq2seq_forward.48} parent=5 // pred_check_branch
      %123 = sbr.rel (%p120) target = $region28
    $region27: #{seq2seq_forward.48} parent=5 // pred_region
      %s124 = ssub.s32 %s8, 1
      %p125 = scmp.lt.s32.totalorder %s13, 1
      %s126 = scalar_select %p125, %s13, 1
      %s127 = smul.addr %s126, 8
      %s128 = scalar_lea.vmem %s0, %s127
      %p129 = pneg %p34
      %p130 = pneg %p31
      %p131 = scmp.lt.s32.totalorder %s13, 1
      %s132 = scalar_select %p131, %s13, 1
      %s133 = scalar_lea.vmem %s1, %s132
      %p134 = pneg %p60
      %p135 = pneg %p57
      %p136 = pneg %p86
      %p137 = pneg %p83
      %p138 = scmp.lt.s32.totalorder %s13, 1
      %s139 = scalar_select %p138, %s13, 1
      %s140 = smul.addr %s139, 8
      %s141 = scalar_lea.vmem %s2, %s140
      %p142 = scmp.lt.s32.totalorder %s13, 1
      %s143 = scalar_select %p142, %s13, 1
      %s144 = smul.addr %s143, 8
      %s145 = scalar_lea.vmem %s0, %s144
      %p146 = scmp.lt.s32.totalorder %s13, 1
      %s147 = scalar_select %p146, %s13, 1
      %s148 = scalar_lea.vmem %s1, %s147
      %p149 = scmp.lt.s32.totalorder %s13, 1
      %s150 = scalar_select %p149, %s13, 1
      %s151 = smul.addr %s150, 8
      %s152 = scalar_lea.vmem %s2, %s151
      %v153 = vld [vmem:[%s145] sm:$0xff]
      %v154 = vld [vmem:[%s148] sm:$0x1]
      %vm155 = vcmp.gt.f32.partialorder %v154, 0.0
      %v156 = vsel %vm155, -1e+09, 0.0
      %v157 = vlaneseq
      %v158 = vshrl.u32 %v157, 7
      %v159 = vlaneseq
      %v160 = vand.u32 %v159, 127
      %vm161 = vcmp.gt.s32.totalorder %v160, %v158
      %v162 = vsel %vm161, -1e+09, 0.0
      %v164 = vlaneseq
      %v165 = vshrl.u32 %v164, 7
      %v166 = vsub.s32 0, %v165
      %v167 = vrot.slane %v156, %v166
      %v169 = vadd.f32 %v167, %v162
      %171 = vrot.lane.b32.xlu0 %v153, 96
      %v172 = vpop.permute.xlu0 %171
      %vm173 = vcmask 64512
      %v174 = vsel %vm173, %v153, 0
      %v176 = vsel %vm173, %v172, 0
      %178 = vmatprep.subr.mxu0 0.0
      %179 = vmatpush1.xpose.msra.mxu0 %v176
      %180 = vmatprep.subr.mxu0 0.0
      %181 = vmatpush1.xpose.msra.mxu0 0.0
      %182 = vmatprep.subr.mxu0 0.0
      %183 = vmatpush1.xpose.msra.mxu0 0.0
      %184 = vmatprep.subr.mxu0 0.0
      %185 = vmatpush1.xpose.msra.mxu0 0.0
      %186 = vmatprep.subr.mxu0 0.0
      %187 = vmatpush1.xpose.msra.mxu0 0.0
      %188 = vmatprep.subr.mxu0 0.0
      %189 = vmatpush1.xpose.msra.mxu0 0.0
      %190 = vmatprep.subr.mxu0 0.0
      %191 = vmatpush1.xpose.msra.mxu0 0.0
      %192 = vmatprep.subr.mxu0 0.0
      %193 = vmatpush1.xpose.msra.mxu0 0.0
      %194 = vmatprep.subr.mxu0 0.0
      %195 = vmatpush1.xpose.msra.mxu0 0.0
      %196 = vmatprep.subr.mxu0 0.0
      %197 = vmatpush1.xpose.msra.mxu0 0.0
      %198 = vmatprep.subr.mxu0 0.0
      %199 = vmatpush1.xpose.msra.mxu0 0.0
      %200 = vmatprep.subr.mxu0 0.0
      %201 = vmatpush1.xpose.msra.mxu0 0.0
      %202 = vmatprep.subr.mxu0 0.0
      %203 = vmatpush1.xpose.msra.mxu0 0.0
      %204 = vmatprep.subr.mxu0 0.0
      %205 = vmatpush1.xpose.msra.mxu0 0.0
      %206 = vmatprep.subr.mxu0 0.0
      %207 = vmatpush1.xpose.msra.mxu0 0.0
      %208 = vmatprep.subr.mxu0 0.0
      %209 = vmatpush1.xpose.msra.mxu0 0.0
      %210 = vmatprep.subr.mxu0 0.0
      %211 = vmatpush1.xpose.msra.mxu0 0.0
      %212 = vmatprep.subr.mxu0 0.0
      %213 = vmatpush1.xpose.msra.mxu0 0.0
      %214 = vmatprep.subr.mxu0 0.0
      %215 = vmatpush1.xpose.msra.mxu0 0.0
      %216 = vmatprep.subr.mxu0 0.0
      %217 = vmatpush1.xpose.msra.mxu0 0.0
      %218 = vmatprep.subr.mxu0 0.0
      %219 = vmatpush1.xpose.msra.mxu0 0.0
      %220 = vmatprep.subr.mxu0 0.0
      %221 = vmatpush1.xpose.msra.mxu0 0.0
      %222 = vmatprep.subr.mxu0 0.0
      %223 = vmatpush1.xpose.msra.mxu0 0.0
      %224 = vmatprep.subr.mxu0 0.0
      %225 = vmatpush1.xpose.msra.mxu0 0.0
      %226 = vmatprep.subr.mxu0 0.0
      %227 = vmatpush1.xpose.msra.mxu0 0.0
      %228 = vmatprep.subr.mxu0 0.0
      %229 = vmatpush1.xpose.msra.mxu0 0.0
      %230 = vmatprep.subr.mxu0 0.0
      %231 = vmatpush1.xpose.msra.mxu0 0.0
      %232 = vmatprep.subr.mxu0 0.0
      %233 = vmatpush1.xpose.msra.mxu0 0.0
      %234 = vmatprep.subr.mxu0 0.0
      %235 = vmatpush1.xpose.msra.mxu0 0.0
      %236 = vmatprep.subr.mxu0 0.0
      %237 = vmatpush1.xpose.msra.mxu0 0.0
      %238 = vmatprep.subr.mxu0 0.0
      %239 = vmatpush1.xpose.msra.mxu0 0.0
      %240 = vmatprep.subr.mxu0 0.0
      %241 = vmatpush1.xpose.msra.mxu0 0.0
      %242 = vmatprep.mubr.f32.mxu0 0.0
      %243 = vmatmul.mubr.f32.gmra.mrb[0].mxu0 %v174
      %v244 = vpop.f32.mrb[0].mxu0
      %v245 = vadd.f32 0.0, %v244
      %v246 = vpop.f32.mrb[0].mxu0
      %247 = vdwg.mxu0
      %v248 = vmul.f32 %v245, 0.35355338
      %v249 = vadd.f32 %v248, %v169
      %v250 = vsel %vm173, %v249, -inf
      %251 = vmax.xlane.f32.xlu0 %v250
      %v252 = vpop.xlane.xlu0 %251
      %v253 = vsub.f32 %v249, %v252
      %v254 = vmul.f32 %v253, 1.442695
      %v255 = vpow.pop %v254
      %v256 = vsel %vm173, %v255, 0.0
      %257 = vadd.xlane.f32.xlu0 %v256
      %v258 = vpop.xlane.xlu0 %257
      %v259 = vrcp.pop %v258
      %v260 = vmul.f32 %v255, %v259
      %261 = vrot.lane.b32.xlu0 %v153, 64
      %v262 = vpop.permute.xlu0 %261
      %v265 = vsel %vm173, %v260, 0
      %267 = vmatprep.subr.mxu0 0.0
      %268 = vmatpush1.msra.mxu0 %v262
      %269 = vmatprep.subr.mxu0 0.0
      %270 = vmatpush1.msra.mxu0 0.0
      %271 = vmatprep.subr.mxu0 0.0
      %272 = vmatpush1.msra.mxu0 0.0
      %273 = vmatprep.subr.mxu0 0.0
      %274 = vmatpush1.msra.mxu0 0.0
      %275 = vmatprep.subr.mxu0 0.0
      %276 = vmatpush1.msra.mxu0 0.0
      %277 = vmatprep.subr.mxu0 0.0
      %278 = vmatpush1.msra.mxu0 0.0
      %279 = vmatprep.subr.mxu0 0.0
      %280 = vmatpush1.msra.mxu0 0.0
      %281 = vmatprep.subr.mxu0 0.0
      %282 = vmatpush1.msra.mxu0 0.0
      %283 = vmatprep.subr.mxu0 0.0
      %284 = vmatpush1.msra.mxu0 0.0
      %285 = vmatprep.subr.mxu0 0.0
      %286 = vmatpush1.msra.mxu0 0.0
      %287 = vmatprep.subr.mxu0 0.0
      %288 = vmatpush1.msra.mxu0 0.0
      %289 = vmatprep.subr.mxu0 0.0
      %290 = vmatpush1.msra.mxu0 0.0
      %291 = vmatprep.subr.mxu0 0.0
      %292 = vmatpush1.msra.mxu0 0.0
      %293 = vmatprep.subr.mxu0 0.0
      %294 = vmatpush1.msra.mxu0 0.0
      %295 = vmatprep.subr.mxu0 0.0
      %296 = vmatpush1.msra.mxu0 0.0
      %297 = vmatprep.subr.mxu0 0.0
      %298 = vmatpush1.msra.mxu0 0.0
      %299 = vmatprep.subr.mxu0 0.0
      %300 = vmatpush1.msra.mxu0 0.0
      %301 = vmatprep.subr.mxu0 0.0
      %302 = vmatpush1.msra.mxu0 0.0
      %303 = vmatprep.subr.mxu0 0.0
      %304 = vmatpush1.msra.mxu0 0.0
      %305 = vmatprep.subr.mxu0 0.0
      %306 = vmatpush1.msra.mxu0 0.0
      %307 = vmatprep.subr.mxu0 0.0
      %308 = vmatpush1.msra.mxu0 0.0
      %309 = vmatprep.subr.mxu0 0.0
      %310 = vmatpush1.msra.mxu0 0.0
      %311 = vmatprep.subr.mxu0 0.0
      %312 = vmatpush1.msra.mxu0 0.0
      %313 = vmatprep.subr.mxu0 0.0
      %314 = vmatpush1.msra.mxu0 0.0
      %315 = vmatprep.subr.mxu0 0.0
      %316 = vmatpush1.msra.mxu0 0.0
      %317 = vmatprep.subr.mxu0 0.0
      %318 = vmatpush1.msra.mxu0 0.0
      %319 = vmatprep.subr.mxu0 0.0
      %320 = vmatpush1.msra.mxu0 0.0
      %321 = vmatprep.subr.mxu0 0.0
      %322 = vmatpush1.msra.mxu0 0.0
      %323 = vmatprep.subr.mxu0 0.0
      %324 = vmatpush1.msra.mxu0 0.0
      %325 = vmatprep.subr.mxu0 0.0
      %326 = vmatpush1.msra.mxu0 0.0
      %327 = vmatprep.subr.mxu0 0.0
      %328 = vmatpush1.msra.mxu0 0.0
      %329 = vmatprep.subr.mxu0 0.0
      %330 = vmatpush1.msra.mxu0 0.0
      %331 = vmatprep.mubr.f32.mxu0 0.0
      %332 = vmatmul.mubr.f32.gmra.mrb[0].mxu0 %v265
      %v333 = vpop.f32.mrb[0].mxu0
      %v334 = vadd.f32 0.0, %v333
      %v335 = vpop.f32.mrb[0].mxu0
      %336 = vdwg.mxu0
      %337 = vrot.lane.b32.xlu0 %v153, 120
      %v338 = vpop.permute.xlu0 %337
      %339 = vrot.lane.b32.xlu0 %v153, 88
      %v340 = vpop.permute.xlu0 %339
      %v341 = vsel %vm173, %v338, 0
      %v343 = vsel %vm173, %v340, 0
      %345 = vmatprep.subr.mxu0 0.0
      %346 = vmatpush1.xpose.msra.mxu0 %v343
      %347 = vmatprep.subr.mxu0 0.0
      %348 = vmatpush1.xpose.msra.mxu0 0.0
      %349 = vmatprep.subr.mxu0 0.0
      %350 = vmatpush1.xpose.msra.mxu0 0.0
      %351 = vmatprep.subr.mxu0 0.0
      %352 = vmatpush1.xpose.msra.mxu0 0.0
      %353 = vmatprep.subr.mxu0 0.0
      %354 = vmatpush1.xpose.msra.mxu0 0.0
      %355 = vmatprep.subr.mxu0 0.0
      %356 = vmatpush1.xpose.msra.mxu0 0.0
      %357 = vmatprep.subr.mxu0 0.0
      %358 = vmatpush1.xpose.msra.mxu0 0.0
      %359 = vmatprep.subr.mxu0 0.0
      %360 = vmatpush1.xpose.msra.mxu0 0.0
      %361 = vmatprep.subr.mxu0 0.0
      %362 = vmatpush1.xpose.msra.mxu0 0.0
      %363 = vmatprep.subr.mxu0 0.0
      %364 = vmatpush1.xpose.msra.mxu0 0.0
      %365 = vmatprep.subr.mxu0 0.0
      %366 = vmatpush1.xpose.msra.mxu0 0.0
      %367 = vmatprep.subr.mxu0 0.0
      %368 = vmatpush1.xpose.msra.mxu0 0.0
      %369 = vmatprep.subr.mxu0 0.0
      %370 = vmatpush1.xpose.msra.mxu0 0.0
      %371 = vmatprep.subr.mxu0 0.0
      %372 = vmatpush1.xpose.msra.mxu0 0.0
      %373 = vmatprep.subr.mxu0 0.0
      %374 = vmatpush1.xpose.msra.mxu0 0.0
      %375 = vmatprep.subr.mxu0 0.0
      %376 = vmatpush1.xpose.msra.mxu0 0.0
      %377 = vmatprep.subr.mxu0 0.0
      %378 = vmatpush1.xpose.msra.mxu0 0.0
      %379 = vmatprep.subr.mxu0 0.0
      %380 = vmatpush1.xpose.msra.mxu0 0.0
      %381 = vmatprep.subr.mxu0 0.0
      %382 = vmatpush1.xpose.msra.mxu0 0.0
      %383 = vmatprep.subr.mxu0 0.0
      %384 = vmatpush1.xpose.msra.mxu0 0.0
      %385 = vmatprep.subr.mxu0 0.0
      %386 = vmatpush1.xpose.msra.mxu0 0.0
      %387 = vmatprep.subr.mxu0 0.0
      %388 = vmatpush1.xpose.msra.mxu0 0.0
      %389 = vmatprep.subr.mxu0 0.0
      %390 = vmatpush1.xpose.msra.mxu0 0.0
      %391 = vmatprep.subr.mxu0 0.0
      %392 = vmatpush1.xpose.msra.mxu0 0.0
      %393 = vmatprep.subr.mxu0 0.0
      %394 = vmatpush1.xpose.msra.mxu0 0.0
      %395 = vmatprep.subr.mxu0 0.0
      %396 = vmatpush1.xpose.msra.mxu0 0.0
      %397 = vmatprep.subr.mxu0 0.0
      %398 = vmatpush1.xpose.msra.mxu0 0.0
      %399 = vmatprep.subr.mxu0 0.0
      %400 = vmatpush1.xpose.msra.mxu0 0.0
      %401 = vmatprep.subr.mxu0 0.0
      %402 = vmatpush1.xpose.msra.mxu0 0.0
      %403 = vmatprep.subr.mxu0 0.0
      %404 = vmatpush1.xpose.msra.mxu0 0.0
      %405 = vmatprep.subr.mxu0 0.0
      %406 = vmatpush1.xpose.msra.mxu0 0.0
      %407 = vmatprep.subr.mxu0 0.0
      %408 = vmatpush1.xpose.msra.mxu0 0.0
      %409 = vmatprep.mubr.f32.mxu0 0.0
      %410 = vmatmul.mubr.f32.gmra.mrb[0].mxu0 %v341
      %v411 = vpop.f32.mrb[0].mxu0
      %v412 = vadd.f32 0.0, %v411
      %v413 = vpop.f32.mrb[0].mxu0
      %414 = vdwg.mxu0
      %v415 = vmul.f32 %v412, 0.35355338
      %v416 = vadd.f32 %v415, %v169
      %v417 = vsel %vm173, %v416, -inf
      %418 = vmax.xlane.f32.xlu0 %v417
      %v419 = vpop.xlane.xlu0 %418
      %v420 = vsub.f32 %v416, %v419
      %v421 = vmul.f32 %v420, 1.442695
      %v422 = vpow.pop %v421
      %v423 = vsel %vm173, %v422, 0.0
      %424 = vadd.xlane.f32.xlu0 %v423
      %v425 = vpop.xlane.xlu0 %424
      %v426 = vrcp.pop %v425
      %v427 = vmul.f32 %v422, %v426
      %428 = vrot.lane.b32.xlu0 %v153, 56
      %v429 = vpop.permute.xlu0 %428
      %v432 = vsel %vm173, %v427, 0
      %434 = vmatprep.subr.mxu0 0.0
      %435 = vmatpush1.msra.mxu0 %v429
      %436 = vmatprep.subr.mxu0 0.0
      %437 = vmatpush1.msra.mxu0 0.0
      %438 = vmatprep.subr.mxu0 0.0
      %439 = vmatpush1.msra.mxu0 0.0
      %440 = vmatprep.subr.mxu0 0.0
      %441 = vmatpush1.msra.mxu0 0.0
      %442 = vmatprep.subr.mxu0 0.0
      %443 = vmatpush1.msra.mxu0 0.0
      %444 = vmatprep.subr.mxu0 0.0
      %445 = vmatpush1.msra.mxu0 0.0
      %446 = vmatprep.subr.mxu0 0.0
      %447 = vmatpush1.msra.mxu0 0.0
      %448 = vmatprep.subr.mxu0 0.0
      %449 = vmatpush1.msra.mxu0 0.0
      %450 = vmatprep.subr.mxu0 0.0
      %451 = vmatpush1.msra.mxu0 0.0
      %452 = vmatprep.subr.mxu0 0.0
      %453 = vmatpush1.msra.mxu0 0.0
      %454 = vmatprep.subr.mxu0 0.0
      %455 = vmatpush1.msra.mxu0 0.0
      %456 = vmatprep.subr.mxu0 0.0
      %457 = vmatpush1.msra.mxu0 0.0
      %458 = vmatprep.subr.mxu0 0.0
      %459 = vmatpush1.msra.mxu0 0.0
      %460 = vmatprep.subr.mxu0 0.0
      %461 = vmatpush1.msra.mxu0 0.0
      %462 = vmatprep.subr.mxu0 0.0
      %463 = vmatpush1.msra.mxu0 0.0
      %464 = vmatprep.subr.mxu0 0.0
      %465 = vmatpush1.msra.mxu0 0.0
      %466 = vmatprep.subr.mxu0 0.0
      %467 = vmatpush1.msra.mxu0 0.0
      %468 = vmatprep.subr.mxu0 0.0
      %469 = vmatpush1.msra.mxu0 0.0
      %470 = vmatprep.subr.mxu0 0.0
      %471 = vmatpush1.msra.mxu0 0.0
      %472 = vmatprep.subr.mxu0 0.0
      %473 = vmatpush1.msra.mxu0 0.0
      %474 = vmatprep.subr.mxu0 0.0
      %475 = vmatpush1.msra.mxu0 0.0
      %476 = vmatprep.subr.mxu0 0.0
      %477 = vmatpush1.msra.mxu0 0.0
      %478 = vmatprep.subr.mxu0 0.0
      %479 = vmatpush1.msra.mxu0 0.0
      %480 = vmatprep.subr.mxu0 0.0
      %481 = vmatpush1.msra.mxu0 0.0
      %482 = vmatprep.subr.mxu0 0.0
      %483 = vmatpush1.msra.mxu0 0.0
      %484 = vmatprep.subr.mxu0 0.0
      %485 = vmatpush1.msra.mxu0 0.0
      %486 = vmatprep.subr.mxu0 0.0
      %487 = vmatpush1.msra.mxu0 0.0
      %488 = vmatprep.subr.mxu0 0.0
      %489 = vmatpush1.msra.mxu0 0.0
      %490 = vmatprep.subr.mxu0 0.0
      %491 = vmatpush1.msra.mxu0 0.0
      %492 = vmatprep.subr.mxu0 0.0
      %493 = vmatpush1.msra.mxu0 0.0
      %494 = vmatprep.subr.mxu0 0.0
      %495 = vmatpush1.msra.mxu0 0.0
      %496 = vmatprep.subr.mxu0 0.0
      %497 = vmatpush1.msra.mxu0 0.0
      %498 = vmatprep.mubr.f32.mxu0 0.0
      %499 = vmatmul.mubr.f32.gmra.mrb[0].mxu0 %v432
      %v500 = vpop.f32.mrb[0].mxu0
      %v501 = vadd.f32 0.0, %v500
      %v502 = vpop.f32.mrb[0].mxu0
      %503 = vdwg.mxu0
      %504 = vrot.lane.b32.xlu0 %v153, 112
      %v505 = vpop.permute.xlu0 %504
      %506 = vrot.lane.b32.xlu0 %v153, 80
      %v507 = vpop.permute.xlu0 %506
      %v508 = vsel %vm173, %v505, 0
      %v510 = vsel %vm173, %v507, 0
      %512 = vmatprep.subr.mxu0 0.0
      %513 = vmatpush1.xpose.msra.mxu0 %v510
      %514 = vmatprep.subr.mxu0 0.0
      %515 = vmatpush1.xpose.msra.mxu0 0.0
      %516 = vmatprep.subr.mxu0 0.0
      %517 = vmatpush1.xpose.msra.mxu0 0.0
      %518 = vmatprep.subr.mxu0 0.0
      %519 = vmatpush1.xpose.msra.mxu0 0.0
      %520 = vmatprep.subr.mxu0 0.0
      %521 = vmatpush1.xpose.msra.mxu0 0.0
      %522 = vmatprep.subr.mxu0 0.0
      %523 = vmatpush1.xpose.msra.mxu0 0.0
      %524 = vmatprep.subr.mxu0 0.0
      %525 = vmatpush1.xpose.msra.mxu0 0.0
      %526 = vmatprep.subr.mxu0 0.0
      %527 = vmatpush1.xpose.msra.mxu0 0.0
      %528 = vmatprep.subr.mxu0 0.0
      %529 = vmatpush1.xpose.msra.mxu0 0.0
      %530 = vmatprep.subr.mxu0 0.0
      %531 = vmatpush1.xpose.msra.mxu0 0.0
      %532 = vmatprep.subr.mxu0 0.0
      %533 = vmatpush1.xpose.msra.mxu0 0.0
      %534 = vmatprep.subr.mxu0 0.0
      %535 = vmatpush1.xpose.msra.mxu0 0.0
      %536 = vmatprep.subr.mxu0 0.0
      %537 = vmatpush1.xpose.msra.mxu0 0.0
      %538 = vmatprep.subr.mxu0 0.0
      %539 = vmatpush1.xpose.msra.mxu0 0.0
      %540 = vmatprep.subr.mxu0 0.0
      %541 = vmatpush1.xpose.msra.mxu0 0.0
      %542 = vmatprep.subr.mxu0 0.0
      %543 = vmatpush1.xpose.msra.mxu0 0.0
      %544 = vmatprep.subr.mxu0 0.0
      %545 = vmatpush1.xpose.msra.mxu0 0.0
      %546 = vmatprep.subr.mxu0 0.0
      %547 = vmatpush1.xpose.msra.mxu0 0.0
      %548 = vmatprep.subr.mxu0 0.0
      %549 = vmatpush1.xpose.msra.mxu0 0.0
      %550 = vmatprep.subr.mxu0 0.0
      %551 = vmatpush1.xpose.msra.mxu0 0.0
      %552 = vmatprep.subr.mxu0 0.0
      %553 = vmatpush1.xpose.msra.mxu0 0.0
      %554 = vmatprep.subr.mxu0 0.0
      %555 = vmatpush1.xpose.msra.mxu0 0.0
      %556 = vmatprep.subr.mxu0 0.0
      %557 = vmatpush1.xpose.msra.mxu0 0.0
      %558 = vmatprep.subr.mxu0 0.0
      %559 = vmatpush1.xpose.msra.mxu0 0.0
      %560 = vmatprep.subr.mxu0 0.0
      %561 = vmatpush1.xpose.msra.mxu0 0.0
      %562 = vmatprep.subr.mxu0 0.0
      %563 = vmatpush1.xpose.msra.mxu0 0.0
      %564 = vmatprep.subr.mxu0 0.0
      %565 = vmatpush1.xpose.msra.mxu0 0.0
      %566 = vmatprep.subr.mxu0 0.0
      %567 = vmatpush1.xpose.msra.mxu0 0.0
      %568 = vmatprep.subr.mxu0 0.0
      %569 = vmatpush1.xpose.msra.mxu0 0.0
      %570 = vmatprep.subr.mxu0 0.0
      %571 = vmatpush1.xpose.msra.mxu0 0.0
      %572 = vmatprep.subr.mxu0 0.0
      %573 = vmatpush1.xpose.msra.mxu0 0.0
      %574 = vmatprep.subr.mxu0 0.0
      %575 = vmatpush1.xpose.msra.mxu0 0.0
      %576 = vmatprep.mubr.f32.mxu0 0.0
      %577 = vmatmul.mubr.f32.gmra.mrb[0].mxu0 %v508
      %v578 = vpop.f32.mrb[0].mxu0
      %v579 = vadd.f32 0.0, %v578
      %v580 = vpop.f32.mrb[0].mxu0
      %581 = vdwg.mxu0
      %v582 = vmul.f32 %v579, 0.35355338
      %v583 = vadd.f32 %v582, %v169
      %v584 = vsel %vm173, %v583, -inf
      %585 = vmax.xlane.f32.xlu0 %v584
      %v586 = vpop.xlane.xlu0 %585
      %v587 = vsub.f32 %v583, %v586
      %v588 = vmul.f32 %v587, 1.442695
      %v589 = vpow.pop %v588
      %v590 = vsel %vm173, %v589, 0.0
      %591 = vadd.xlane.f32.xlu0 %v590
      %v592 = vpop.xlane.xlu0 %591
      %v593 = vrcp.pop %v592
      %v594 = vmul.f32 %v589, %v593
      %595 = vrot.lane.b32.xlu0 %v153, 48
      %v596 = vpop.permute.xlu0 %595
      %v599 = vsel %vm173, %v594, 0
      %601 = vmatprep.subr.mxu0 0.0
      %602 = vmatpush1.msra.mxu0 %v596
      %603 = vmatprep.subr.mxu0 0.0
      %604 = vmatpush1.msra.mxu0 0.0
      %605 = vmatprep.subr.mxu0 0.0
      %606 = vmatpush1.msra.mxu0 0.0
      %607 = vmatprep.subr.mxu0 0.0
      %608 = vmatpush1.msra.mxu0 0.0
      %609 = vmatprep.subr.mxu0 0.0
      %610 = vmatpush1.msra.mxu0 0.0
      %611 = vmatprep.subr.mxu0 0.0
      %612 = vmatpush1.msra.mxu0 0.0
      %613 = vmatprep.subr.mxu0 0.0
      %614 = vmatpush1.msra.mxu0 0.0
      %615 = vmatprep.subr.mxu0 0.0
      %616 = vmatpush1.msra.mxu0 0.0
      %617 = vmatprep.subr.mxu0 0.0
      %618 = vmatpush1.msra.mxu0 0.0
      %619 = vmatprep.subr.mxu0 0.0
      %620 = vmatpush1.msra.mxu0 0.0
      %621 = vmatprep.subr.mxu0 0.0
      %622 = vmatpush1.msra.mxu0 0.0
      %623 = vmatprep.subr.mxu0 0.0
      %624 = vmatpush1.msra.mxu0 0.0
      %625 = vmatprep.subr.mxu0 0.0
      %626 = vmatpush1.msra.mxu0 0.0
      %627 = vmatprep.subr.mxu0 0.0
      %628 = vmatpush1.msra.mxu0 0.0
      %629 = vmatprep.subr.mxu0 0.0
      %630 = vmatpush1.msra.mxu0 0.0
      %631 = vmatprep.subr.mxu0 0.0
      %632 = vmatpush1.msra.mxu0 0.0
      %633 = vmatprep.subr.mxu0 0.0
      %634 = vmatpush1.msra.mxu0 0.0
      %635 = vmatprep.subr.mxu0 0.0
      %636 = vmatpush1.msra.mxu0 0.0
      %637 = vmatprep.subr.mxu0 0.0
      %638 = vmatpush1.msra.mxu0 0.0
      %639 = vmatprep.subr.mxu0 0.0
      %640 = vmatpush1.msra.mxu0 0.0
      %641 = vmatprep.subr.mxu0 0.0
      %642 = vmatpush1.msra.mxu0 0.0
      %643 = vmatprep.subr.mxu0 0.0
      %644 = vmatpush1.msra.mxu0 0.0
      %645 = vmatprep.subr.mxu0 0.0
      %646 = vmatpush1.msra.mxu0 0.0
      %647 = vmatprep.subr.mxu0 0.0
      %648 = vmatpush1.msra.mxu0 0.0
      %649 = vmatprep.subr.mxu0 0.0
      %650 = vmatpush1.msra.mxu0 0.0
      %651 = vmatprep.subr.mxu0 0.0
      %652 = vmatpush1.msra.mxu0 0.0
      %653 = vmatprep.subr.mxu0 0.0
      %654 = vmatpush1.msra.mxu0 0.0
      %655 = vmatprep.subr.mxu0 0.0
      %656 = vmatpush1.msra.mxu0 0.0
      %657 = vmatprep.subr.mxu0 0.0
      %658 = vmatpush1.msra.mxu0 0.0
      %659 = vmatprep.subr.mxu0 0.0
      %660 = vmatpush1.msra.mxu0 0.0
      %661 = vmatprep.subr.mxu0 0.0
      %662 = vmatpush1.msra.mxu0 0.0
      %663 = vmatprep.subr.mxu0 0.0
      %664 = vmatpush1.msra.mxu0 0.0
      %665 = vmatprep.mubr.f32.mxu0 0.0
      %666 = vmatmul.mubr.f32.gmra.mrb[0].mxu0 %v599
      %v667 = vpop.f32.mrb[0].mxu0
      %v668 = vadd.f32 0.0, %v667
      %v669 = vpop.f32.mrb[0].mxu0
      %670 = vdwg.mxu0
      %671 = vrot.lane.b32.xlu0 %v153, 104
      %v672 = vpop.permute.xlu0 %671
      %673 = vrot.lane.b32.xlu0 %v153, 72
      %v674 = vpop.permute.xlu0 %673
      %v675 = vsel %vm173, %v672, 0
      %v677 = vsel %vm173, %v674, 0
      %679 = vmatprep.subr.mxu0 0.0
      %680 = vmatpush1.xpose.msra.mxu0 %v677
      %681 = vmatprep.subr.mxu0 0.0
      %682 = vmatpush1.xpose.msra.mxu0 0.0
      %683 = vmatprep.subr.mxu0 0.0
      %684 = vmatpush1.xpose.msra.mxu0 0.0
      %685 = vmatprep.subr.mxu0 0.0
      %686 = vmatpush1.xpose.msra.mxu0 0.0
      %687 = vmatprep.subr.mxu0 0.0
      %688 = vmatpush1.xpose.msra.mxu0 0.0
      %689 = vmatprep.subr.mxu0 0.0
      %690 = vmatpush1.xpose.msra.mxu0 0.0
      %691 = vmatprep.subr.mxu0 0.0
      %692 = vmatpush1.xpose.msra.mxu0 0.0
      %693 = vmatprep.subr.mxu0 0.0
      %694 = vmatpush1.xpose.msra.mxu0 0.0
      %695 = vmatprep.subr.mxu0 0.0
      %696 = vmatpush1.xpose.msra.mxu0 0.0
      %697 = vmatprep.subr.mxu0 0.0
      %698 = vmatpush1.xpose.msra.mxu0 0.0
      %699 = vmatprep.subr.mxu0 0.0
      %700 = vmatpush1.xpose.msra.mxu0 0.0
      %701 = vmatprep.subr.mxu0 0.0
      %702 = vmatpush1.xpose.msra.mxu0 0.0
      %703 = vmatprep.subr.mxu0 0.0
      %704 = vmatpush1.xpose.msra.mxu0 0.0
      %705 = vmatprep.subr.mxu0 0.0
      %706 = vmatpush1.xpose.msra.mxu0 0.0
      %707 = vmatprep.subr.mxu0 0.0
      %708 = vmatpush1.xpose.msra.mxu0 0.0
      %709 = vmatprep.subr.mxu0 0.0
      %710 = vmatpush1.xpose.msra.mxu0 0.0
      %711 = vmatprep.subr.mxu0 0.0
      %712 = vmatpush1.xpose.msra.mxu0 0.0
      %713 = vmatprep.subr.mxu0 0.0
      %714 = vmatpush1.xpose.msra.mxu0 0.0
      %715 = vmatprep.subr.mxu0 0.0
      %716 = vmatpush1.xpose.msra.mxu0 0.0
      %717 = vmatprep.subr.mxu0 0.0
      %718 = vmatpush1.xpose.msra.mxu0 0.0
      %719 = vmatprep.subr.mxu0 0.0
      %720 = vmatpush1.xpose.msra.mxu0 0.0
      %721 = vmatprep.subr.mxu0 0.0
      %722 = vmatpush1.xpose.msra.mxu0 0.0
      %723 = vmatprep.subr.mxu0 0.0
      %724 = vmatpush1.xpose.msra.mxu0 0.0
      %725 = vmatprep.subr.mxu0 0.0
      %726 = vmatpush1.xpose.msra.mxu0 0.0
      %727 = vmatprep.subr.mxu0 0.0
      %728 = vmatpush1.xpose.msra.mxu0 0.0
      %729 = vmatprep.subr.mxu0 0.0
      %730 = vmatpush1.xpose.msra.mxu0 0.0
      %731 = vmatprep.subr.mxu0 0.0
      %732 = vmatpush1.xpose.msra.mxu0 0.0
      %733 = vmatprep.subr.mxu0 0.0
      %734 = vmatpush1.xpose.msra.mxu0 0.0
      %735 = vmatprep.subr.mxu0 0.0
      %736 = vmatpush1.xpose.msra.mxu0 0.0
      %737 = vmatprep.subr.mxu0 0.0
      %738 = vmatpush1.xpose.msra.mxu0 0.0
      %739 = vmatprep.subr.mxu0 0.0
      %740 = vmatpush1.xpose.msra.mxu0 0.0
      %741 = vmatprep.subr.mxu0 0.0
      %742 = vmatpush1.xpose.msra.mxu0 0.0
      %743 = vmatprep.mubr.f32.mxu0 0.0
      %744 = vmatmul.mubr.f32.gmra.mrb[0].mxu0 %v675
      %v745 = vpop.f32.mrb[0].mxu0
      %v746 = vadd.f32 0.0, %v745
      %v747 = vpop.f32.mrb[0].mxu0
      %748 = vdwg.mxu0
      %v749 = vmul.f32 %v746, 0.35355338
      %v750 = vadd.f32 %v749, %v169
      %v751 = vsel %vm173, %v750, -inf
      %752 = vmax.xlane.f32.xlu0 %v751
      %v753 = vpop.xlane.xlu0 %752
      %v754 = vsub.f32 %v750, %v753
      %v755 = vmul.f32 %v754, 1.442695
      %v756 = vpow.pop %v755
      %v757 = vsel %vm173, %v756, 0.0
      %758 = vadd.xlane.f32.xlu0 %v757
      %v759 = vpop.xlane.xlu0 %758
      %v760 = vrcp.pop %v759
      %v761 = vmul.f32 %v756, %v760
      %762 = vrot.lane.b32.xlu0 %v153, 40
      %v763 = vpop.permute.xlu0 %762
      %v766 = vsel %vm173, %v761, 0
      %768 = vmatprep.subr.mxu0 0.0
      %769 = vmatpush1.msra.mxu0 %v763
      %770 = vmatprep.subr.mxu0 0.0
      %771 = vmatpush1.msra.mxu0 0.0
      %772 = vmatprep.subr.mxu0 0.0
      %773 = vmatpush1.msra.mxu0 0.0
      %774 = vmatprep.subr.mxu0 0.0
      %775 = vmatpush1.msra.mxu0 0.0
      %776 = vmatprep.subr.mxu0 0.0
      %777 = vmatpush1.msra.mxu0 0.0
      %778 = vmatprep.subr.mxu0 0.0
      %779 = vmatpush1.msra.mxu0 0.0
      %780 = vmatprep.subr.mxu0 0.0
      %781 = vmatpush1.msra.mxu0 0.0
      %782 = vmatprep.subr.mxu0 0.0
      %783 = vmatpush1.msra.mxu0 0.0
      %784 = vmatprep.subr.mxu0 0.0
      %785 = vmatpush1.msra.mxu0 0.0
      %786 = vmatprep.subr.mxu0 0.0
      %787 = vmatpush1.msra.mxu0 0.0
      %788 = vmatprep.subr.mxu0 0.0
      %789 = vmatpush1.msra.mxu0 0.0
      %790 = vmatprep.subr.mxu0 0.0
      %791 = vmatpush1.msra.mxu0 0.0
      %792 = vmatprep.subr.mxu0 0.0
      %793 = vmatpush1.msra.mxu0 0.0
      %794 = vmatprep.subr.mxu0 0.0
      %795 = vmatpush1.msra.mxu0 0.0
      %796 = vmatprep.subr.mxu0 0.0
      %797 = vmatpush1.msra.mxu0 0.0
      %798 = vmatprep.subr.mxu0 0.0
      %799 = vmatpush1.msra.mxu0 0.0
      %800 = vmatprep.subr.mxu0 0.0
      %801 = vmatpush1.msra.mxu0 0.0
      %802 = vmatprep.subr.mxu0 0.0
      %803 = vmatpush1.msra.mxu0 0.0
      %804 = vmatprep.subr.mxu0 0.0
      %805 = vmatpush1.msra.mxu0 0.0
      %806 = vmatprep.subr.mxu0 0.0
      %807 = vmatpush1.msra.mxu0 0.0
      %808 = vmatprep.subr.mxu0 0.0
      %809 = vmatpush1.msra.mxu0 0.0
      %810 = vmatprep.subr.mxu0 0.0
      %811 = vmatpush1.msra.mxu0 0.0
      %812 = vmatprep.subr.mxu0 0.0
      %813 = vmatpush1.msra.mxu0 0.0
      %814 = vmatprep.subr.mxu0 0.0
      %815 = vmatpush1.msra.mxu0 0.0
      %816 = vmatprep.subr.mxu0 0.0
      %817 = vmatpush1.msra.mxu0 0.0
      %818 = vmatprep.subr.mxu0 0.0
      %819 = vmatpush1.msra.mxu0 0.0
      %820 = vmatprep.subr.mxu0 0.0
      %821 = vmatpush1.msra.mxu0 0.0
      %822 = vmatprep.subr.mxu0 0.0
      %823 = vmatpush1.msra.mxu0 0.0
      %824 = vmatprep.subr.mxu0 0.0
      %825 = vmatpush1.msra.mxu0 0.0
      %826 = vmatprep.subr.mxu0 0.0
      %827 = vmatpush1.msra.mxu0 0.0
      %828 = vmatprep.subr.mxu0 0.0
      %829 = vmatpush1.msra.mxu0 0.0
      %830 = vmatprep.subr.mxu0 0.0
      %831 = vmatpush1.msra.mxu0 0.0
      %832 = vmatprep.mubr.f32.mxu0 0.0
      %833 = vmatmul.mubr.f32.gmra.mrb[0].mxu0 %v766
      %v834 = vpop.f32.mrb[0].mxu0
      %v835 = vadd.f32 0.0, %v834
      %v836 = vpop.f32.mrb[0].mxu0
      %837 = vdwg.mxu0
      %839 = vrot.lane.b32.xlu0 %v501, 8
      %v840 = vpop.permute.xlu0 %839
      %843 = vrot.lane.b32.xlu0 %v668, 16
      %v844 = vpop.permute.xlu0 %843
      %847 = vrot.lane.b32.xlu0 %v835, 24
      %v848 = vpop.permute.xlu0 %847
      %v850 = vsel %vm173, %v334, %v840
      %vm851 = vcmask 130048
      %v852 = vsel %vm851, %v850, %v844
      %vm853 = vcmask 195584
      %v854 = vsel %vm853, %v852, %v848
      %vm855 = vcmask 261120
      %856 = vst.msk [vmem:[%s152] sm:$0xff] %vm855, %v854
      %p857 = scmp.lt.s32.totalorder %s13, 1
      %s858 = scalar_select %p857, %s13, 1
      %s859 = smul.addr %s858, 8
      %s860 = scalar_lea.vmem %s2, %s859
      // Predicated region
      $region29: #{seq2seq_forward.48} parent=27 // pred_check
        %p861 = pneg %p83
      $region30: #{seq2seq_forward.48} parent=27 // pred_check_branch
        %863 = sbr.rel (%p861) target = $region32
      $region31: #{seq2seq_forward.48} parent=27 // pred_region
        _
      $region32: #{seq2seq_forward.48} parent=27 // pred_fallthru
        _
    $region28: #{seq2seq_forward.48} parent=5 // pred_fallthru
      _
    %p864 = scmp.le.s32.totalorder 2, %s8
    // Predicated region
    $region33: #{seq2seq_forward.48} parent=5 // pred_check
      %p865 = pneg %p864
    $region34: #{seq2seq_forward.48} parent=5 // pred_check_branch
      %867 = sbr.rel (%p865) target = $region36
    $region35: #{seq2seq_forward.48} parent=5 // pred_region
      %s868 = ssub.s32 %s8, 2
      // Predicated region
      $region37: #{seq2seq_forward.48} parent=35 // pred_check
        %p869 = pneg %p89
      $region38: #{seq2seq_forward.48} parent=35 // pred_check_branch
        %871 = sbr.rel (%p869) target = $region40
      $region39: #{seq2seq_forward.48} parent=35 // pred_region
        %p872 = scmp.lt.s32.totalorder %s14, 1
        %s873 = scalar_select %p872, %s14, 1
        %s874 = smul.addr %s873, 8
        %s875 = scalar_lea.vmem %s2, %s874
      $region40: #{seq2seq_forward.48} parent=35 // pred_fallthru
        _
    $region36: #{seq2seq_forward.48} parent=5 // pred_fallthru
      _
  $region6: #{seq2seq_forward.48} parent=0 // loop_footer
    %s12 = sadd.s32 1, %s8
  $region7: #{seq2seq_forward.48} parent=0 // loop_footer_branch
    %7 = sbr.rel target = $region3
  $region8: #{seq2seq_forward.48} parent=0 // loop_exit
    _

// kernel: seq2seq_forward.53
$region0: #{seq2seq_forward.53}
  #allocation0 [shape = 'u32[]', space=smem, size = 0x4, offset = 0x4, fixed_abs, tag = 'smem constant byte address 0x4 - core index']
  #allocation1 [shape = 'u32[144,128]{1,0:T(1,128)}', space=vmem, size = 0x12000, scoped, tag = 'internal scratch']
  %s0 = inlined_call_operand.vmem [shape: f32[2,8,32], index: 0, kind: input, shape index: {}]
  %s1 = inlined_call_operand.vmem [shape: f32[2,8,64], index: 1, kind: input, shape index: {}]
  %s2 = inlined_call_operand.vmem [shape: f32[2,1,8], index: 2, kind: input, shape index: {}]
  %s3 = inlined_call_operand.vmem [shape: f32[2,8,32], index: 3, kind: output, shape index: {}]
  %s4 = sld [smem:[#allocation0]]
  $region45: #{seq2seq_forward.53} parent=0
    _
  %s6 = ssub.s32 1, %s4
  %s7 = scalar_select 0, %s6, %s4
  loop: start=0, step=1, limit=4
  $region2: #{seq2seq_forward.53} parent=0 // loop_pre_header
    _
  $region3: #{seq2seq_forward.53} parent=0 // loop_header
    %s9 = sphi 0, %s13
    %p10 = scmp.ge.s32.totalorder %s9, 4
    %s19 = sphi 0, %s21
    %s22 = sphi 0, %s19
    %s23 = sphi 0, %s22
    %s39 = sphi 0, %s23
    %s45 = sphi 0, %s47
    %s48 = sphi 0, %s45
    %s49 = sphi 0, %s48
    %s65 = sphi 0, %s49
    %s71 = sphi 0, %s73
    %s74 = sphi 0, %s71
    %s75 = sphi 0, %s74
    %s91 = sphi 0, %s75
    %s97 = sphi 0, %s99
    %s100 = sphi 0, %s97
    %s101 = sphi 0, %s100
    %s117 = sphi 0, %s101
  $region4: #{seq2seq_forward.53} parent=0 // loop_header_branch
    %12 = sbr.rel (%p10) target = $region8
  $region5: #{seq2seq_forward.53} parent=0 // loop_body
    %s14 = ssub.s32 %s9, 1
    %s15 = ssub.s32 %s9, 2
    %s16 = sadd.s32 %s9, 1
    %s17 = ssub.s32 %s9, %s16
    %p18 = scmp.eq.s32.totalorder %s17, 0
    %s20 = sadd.s32 %s19, 1
    %s21 = scalar_select %p18, %s19, %s20
    %p24 = pneg %p18
    %p25 = scmp.eq.s32.totalorder %s9, 1
    %p26 = por %p24, %p25
    %p27 = scmp.ne.s32.totalorder %s19, %s22
    %p28 = scmp.eq.s32.totalorder %s9, 0
    %p29 = por %p27, %p28
    %p30 = scmp.ne.s32.totalorder %s19, %s22
    %p31 = scmp.eq.s32.totalorder %s14, 1
    %p32 = por %p30, %p31
    %p33 = scmp.ne.s32.totalorder %s22, %s23
    %p34 = scmp.eq.s32.totalorder %s14, 0
    %p35 = por %p33, %p34
    %p36 = scmp.ne.s32.totalorder %s22, %s23
    %p37 = scmp.eq.s32.totalorder %s15, 1
    %p38 = por %p36, %p37
    %p40 = scmp.ne.s32.totalorder %s23, %s39
    %p41 = scmp.eq.s32.totalorder %s15, 0
    %p42 = por %p40, %p41
    %s43 = ssub.s32 %s9, %s16
    %p44 = scmp.eq.s32.totalorder %s43, 0
    %s46 = sadd.s32 %s45, 1
    %s47 = scalar_select %p44, %s45, %s46
    %p50 = pneg %p44
    %p51 = scmp.eq.s32.totalorder %s9, 1
    %p52 = por %p50, %p51
    %p53 = scmp.ne.s32.totalorder %s45, %s48
    %p54 = scmp.eq.s32.totalorder %s9, 0
    %p55 = por %p53, %p54
    %p56 = scmp.ne.s32.totalorder %s45, %s48
    %p57 = scmp.eq.s32.totalorder %s14, 1
    %p58 = por %p56, %p57
    %p59 = scmp.ne.s32.totalorder %s48, %s49
    %p60 = scmp.eq.s32.totalorder %s14, 0
    %p61 = por %p59, %p60
    %p62 = scmp.ne.s32.totalorder %s48, %s49
    %p63 = scmp.eq.s32.totalorder %s15, 1
    %p64 = por %p62, %p63
    %p66 = scmp.ne.s32.totalorder %s49, %s65
    %p67 = scmp.eq.s32.totalorder %s15, 0
    %p68 = por %p66, %p67
    %s69 = ssub.s32 %s9, %s16
    %p70 = scmp.eq.s32.totalorder %s69, 0
    %s72 = sadd.s32 %s71, 1
    %s73 = scalar_select %p70, %s71, %s72
    %p76 = pneg %p70
    %p77 = scmp.eq.s32.totalorder %s9, 1
    %p78 = por %p76, %p77
    %p79 = scmp.ne.s32.totalorder %s71, %s74
    %p80 = scmp.eq.s32.totalorder %s9, 0
    %p81 = por %p79, %p80
    %p82 = scmp.ne.s32.totalorder %s71, %s74
    %p83 = scmp.eq.s32.totalorder %s14, 1
    %p84 = por %p82, %p83
    %p85 = scmp.ne.s32.totalorder %s74, %s75
    %p86 = scmp.eq.s32.totalorder %s14, 0
    %p87 = por %p85, %p86
    %p88 = scmp.ne.s32.totalorder %s74, %s75
    %p89 = scmp.eq.s32.totalorder %s15, 1
    %p90 = por %p88, %p89
    %p92 = scmp.ne.s32.totalorder %s75, %s91
    %p93 = scmp.eq.s32.totalorder %s15, 0
    %p94 = por %p92, %p93
    %s95 = ssub.s32 %s9, %s16
    %p96 = scmp.eq.s32.totalorder %s95, 0
    %s98 = sadd.s32 %s97, 1
    %s99 = scalar_select %p96, %s97, %s98
    %p102 = pneg %p96
    %p103 = scmp.eq.s32.totalorder %s9, 1
    %p104 = por %p102, %p103
    %p105 = scmp.ne.s32.totalorder %s97, %s100
    %p106 = scmp.eq.s32.totalorder %s9, 0
    %p107 = por %p105, %p106
    %p108 = scmp.ne.s32.totalorder %s97, %s100
    %p109 = scmp.eq.s32.totalorder %s14, 1
    %p110 = por %p108, %p109
    %p111 = scmp.ne.s32.totalorder %s100, %s101
    %p112 = scmp.eq.s32.totalorder %s14, 0
    %p113 = por %p111, %p112
    %p114 = scmp.ne.s32.totalorder %s100, %s101
    %p115 = scmp.eq.s32.totalorder %s15, 1
    %p116 = por %p114, %p115
    %p118 = scmp.ne.s32.totalorder %s101, %s117
    %p119 = scmp.eq.s32.totalorder %s15, 0
    %p120 = por %p118, %p119
    %p121 = scmp.le.s32.totalorder 1, %s9
    %p122 = scmp.lt.s32.totalorder %s9, 3
    %p123 = pnand %p121, %p122
    %p124 = pneg %p123
    // Predicated region
    $region9: #{seq2seq_forward.53} parent=5 // pred_check
      _
    $region10: #{seq2seq_forward.53} parent=5 // pred_check_branch
      %126 = sbr.rel (%p123) target = $region12
    $region11: #{seq2seq_forward.53} parent=5 // pred_region
      %s127 = ssub.s32 %s9, 1
    $region12: #{seq2seq_forward.53} parent=5 // pred_fallthru
      _
    %p128 = scmp.lt.s32.totalorder %s9, 2
    // Predicated region
    $region13: #{seq2seq_forward.53} parent=5 // pred_check
      %p129 = pneg %p128
    $region14: #{seq2seq_forward.53} parent=5 // pred_check_branch
      %131 = sbr.rel (%p129) target = $region16
    $region15: #{seq2seq_forward.53} parent=5 // pred_region
      // Predicated region
      $region17: #{seq2seq_forward.53} parent=15 // pred_check
        %p132 = pneg %p29
      $region18: #{seq2seq_forward.53} parent=15 // pred_check_branch
        %134 = sbr.rel (%p132) target = $region20
      $region19: #{seq2seq_forward.53} parent=15 // pred_region
        %p135 = scmp.lt.s32.totalorder %s9, 1
        %s136 = scalar_select %p135, %s9, 1
        %s137 = smul.addr %s136, 8
        %s138 = scalar_lea.vmem %s0, %s137
      $region20: #{seq2seq_forward.53} parent=15 // pred_fallthru
        _
      // Predicated region
      $region21: #{seq2seq_forward.53} parent=15 // pred_check
        %p139 = pneg %p55
      $region22: #{seq2seq_forward.53} parent=15 // pred_check_branch
        %141 = sbr.rel (%p139) target = $region24
      $region23: #{seq2seq_forward.53} parent=15 // pred_region
        %p142 = scmp.lt.s32.totalorder %s9, 1
        %s143 = scalar_select %p142, %s9, 1
        %s144 = smul.addr %s143, 8
        %s145 = scalar_lea.vmem %s1, %s144
      $region24: #{seq2seq_forward.53} parent=15 // pred_fallthru
        _
      // Predicated region
      $region25: #{seq2seq_forward.53} parent=15 // pred_check
        %p146 = pneg %p81
      $region26: #{seq2seq_forward.53} parent=15 // pred_check_branch
        %148 = sbr.rel (%p146) target = $region28
      $region27: #{seq2seq_forward.53} parent=15 // pred_region
        %p149 = scmp.lt.s32.totalorder %s9, 1
        %s150 = scalar_select %p149, %s9, 1
        %s151 = scalar_lea.vmem %s2, %s150
      $region28: #{seq2seq_forward.53} parent=15 // pred_fallthru
        _
    $region16: #{seq2seq_forward.53} parent=5 // pred_fallthru
      _
    %p152 = scmp.le.s32.totalorder 1, %s9
    %p153 = scmp.lt.s32.totalorder %s9, 3
    %p154 = pnand %p152, %p153
    %p155 = pneg %p154
    // Predicated region
    $region29: #{seq2seq_forward.53} parent=5 // pred_check
      _
    $region30: #{seq2seq_forward.53} parent=5 // pred_check_branch
      %157 = sbr.rel (%p154) target = $region32
    $region31: #{seq2seq_forward.53} parent=5 // pred_region
      %s158 = ssub.s32 %s9, 1
      %p159 = scmp.lt.s32.totalorder %s14, 1
      %s160 = scalar_select %p159, %s14, 1
      %s161 = smul.addr %s160, 8
      %s162 = scalar_lea.vmem %s0, %s161
      %p163 = pneg %p35
      %p164 = pneg %p32
      %p165 = scmp.lt.s32.totalorder %s14, 1
      %s166 = scalar_select %p165, %s14, 1
      %s167 = smul.addr %s166, 8
      %s168 = scalar_lea.vmem %s1, %s167
      %p169 = pneg %p61
      %p170 = pneg %p58
      %p171 = scmp.lt.s32.totalorder %s14, 1
      %s172 = scalar_select %p171, %s14, 1
      %s173 = scalar_lea.vmem %s2, %s172
      %p174 = pneg %p87
      %p175 = pneg %p84
      %p176 = pneg %p113
      %p177 = pneg %p110
      %p178 = scmp.lt.s32.totalorder %s14, 1
      %s179 = scalar_select %p178, %s14, 1
      %s180 = smul.addr %s179, 8
      %s181 = scalar_lea.vmem %s3, %s180
      %p182 = scmp.lt.s32.totalorder %s14, 1
      %s183 = scalar_select %p182, %s14, 1
      %s184 = smul.addr %s183, 8
      %s185 = scalar_lea.vmem %s0, %s184
      %p186 = scmp.lt.s32.totalorder %s14, 1
      %s187 = scalar_select %p186, %s14, 1
      %s188 = smul.addr %s187, 8
      %s189 = scalar_lea.vmem %s1, %s188
      %p190 = scmp.lt.s32.totalorder %s14, 1
      %s191 = scalar_select %p190, %s14, 1
      %s192 = scalar_lea.vmem %s2, %s191
      %p193 = scmp.lt.s32.totalorder %s14, 1
      %s194 = scalar_select %p193, %s14, 1
      %s195 = smul.addr %s194, 8
      %s196 = scalar_lea.vmem %s3, %s195
      %v197 = vld [vmem:[%s185] sm:$0xff]
      %v198 = vld [vmem:[%s189] sm:$0xff]
      %v199 = vld [vmem:[%s192] sm:$0x1]
      %vm200 = vcmp.gt.f32.partialorder %v199, 0.0
      %v201 = vsel %vm200, -1e+09, 0.0
      %vm202 = vcmask 64512
      %v204 = vsel %vm202, %v197, 0
      %v207 = vsel %vm202, %v198, 0
      %209 = vmatprep.subr.mxu0 0.0
      %210 = vmatpush1.xpose.msra.mxu0 %v207
      %211 = vmatprep.subr.mxu0 0.0
      %212 = vmatpush1.xpose.msra.mxu0 0.0
      %213 = vmatprep.subr.mxu0 0.0
      %214 = vmatpush1.xpose.msra.mxu0 0.0
      %215 = vmatprep.subr.mxu0 0.0
      %216 = vmatpush1.xpose.msra.mxu0 0.0
      %217 = vmatprep.subr.mxu0 0.0
      %218 = vmatpush1.xpose.msra.mxu0 0.0
      %219 = vmatprep.subr.mxu0 0.0
      %220 = vmatpush1.xpose.msra.mxu0 0.0
      %221 = vmatprep.subr.mxu0 0.0
      %222 = vmatpush1.xpose.msra.mxu0 0.0
      %223 = vmatprep.subr.mxu0 0.0
      %224 = vmatpush1.xpose.msra.mxu0 0.0
      %225 = vmatprep.subr.mxu0 0.0
      %226 = vmatpush1.xpose.msra.mxu0 0.0
      %227 = vmatprep.subr.mxu0 0.0
      %228 = vmatpush1.xpose.msra.mxu0 0.0
      %229 = vmatprep.subr.mxu0 0.0
      %230 = vmatpush1.xpose.msra.mxu0 0.0
      %231 = vmatprep.subr.mxu0 0.0
      %232 = vmatpush1.xpose.msra.mxu0 0.0
      %233 = vmatprep.subr.mxu0 0.0
      %234 = vmatpush1.xpose.msra.mxu0 0.0
      %235 = vmatprep.subr.mxu0 0.0
      %236 = vmatpush1.xpose.msra.mxu0 0.0
      %237 = vmatprep.subr.mxu0 0.0
      %238 = vmatpush1.xpose.msra.mxu0 0.0
      %239 = vmatprep.subr.mxu0 0.0
      %240 = vmatpush1.xpose.msra.mxu0 0.0
      %241 = vmatprep.subr.mxu0 0.0
      %242 = vmatpush1.xpose.msra.mxu0 0.0
      %243 = vmatprep.subr.mxu0 0.0
      %244 = vmatpush1.xpose.msra.mxu0 0.0
      %245 = vmatprep.subr.mxu0 0.0
      %246 = vmatpush1.xpose.msra.mxu0 0.0
      %247 = vmatprep.subr.mxu0 0.0
      %248 = vmatpush1.xpose.msra.mxu0 0.0
      %249 = vmatprep.subr.mxu0 0.0
      %250 = vmatpush1.xpose.msra.mxu0 0.0
      %251 = vmatprep.subr.mxu0 0.0
      %252 = vmatpush1.xpose.msra.mxu0 0.0
      %253 = vmatprep.subr.mxu0 0.0
      %254 = vmatpush1.xpose.msra.mxu0 0.0
      %255 = vmatprep.subr.mxu0 0.0
      %256 = vmatpush1.xpose.msra.mxu0 0.0
      %257 = vmatprep.subr.mxu0 0.0
      %258 = vmatpush1.xpose.msra.mxu0 0.0
      %259 = vmatprep.subr.mxu0 0.0
      %260 = vmatpush1.xpose.msra.mxu0 0.0
      %261 = vmatprep.subr.mxu0 0.0
      %262 = vmatpush1.xpose.msra.mxu0 0.0
      %263 = vmatprep.subr.mxu0 0.0
      %264 = vmatpush1.xpose.msra.mxu0 0.0
      %265 = vmatprep.subr.mxu0 0.0
      %266 = vmatpush1.xpose.msra.mxu0 0.0
      %267 = vmatprep.subr.mxu0 0.0
      %268 = vmatpush1.xpose.msra.mxu0 0.0
      %269 = vmatprep.subr.mxu0 0.0
      %270 = vmatpush1.xpose.msra.mxu0 0.0
      %271 = vmatprep.subr.mxu0 0.0
      %272 = vmatpush1.xpose.msra.mxu0 0.0
      %273 = vmatprep.mubr.f32.mxu0 0.0
      %274 = vmatmul.mubr.f32.gmra.mrb[0].mxu0 %v204
      %v275 = vpop.f32.mrb[0].mxu0
      %v276 = vadd.f32 0.0, %v275
      %v277 = vpop.f32.mrb[0].mxu0
      %278 = vdwg.mxu0
      %v279 = vmul.f32 %v276, 0.35355338
      %v281 = vlaneseq
      %v282 = vshrl.u32 %v281, 7
      %v283 = vsub.s32 0, %v282
      %v284 = vrot.slane %v201, %v283
      %v286 = vadd.f32 %v279, %v284
      %v287 = vsel %vm202, %v286, -inf
      %288 = vmax.xlane.f32.xlu0 %v287
      %v289 = vpop.xlane.xlu0 %288
      %v290 = vsub.f32 %v286, %v289
      %v291 = vmul.f32 %v290, 1.442695
      %v292 = vpow.pop %v291
      %v293 = vsel %vm202, %v292, 0.0
      %294 = vadd.xlane.f32.xlu0 %v293
      %v295 = vpop.xlane.xlu0 %294
      %v296 = vrcp.pop %v295
      %v297 = vmul.f32 %v292, %v296
      %298 = vrot.lane.b32.xlu0 %v198, 96
      %v299 = vpop.permute.xlu0 %298
      %v302 = vsel %vm202, %v297, 0
      %304 = vmatprep.subr.mxu0 0.0
      %305 = vmatpush1.msra.mxu0 %v299
      %306 = vmatprep.subr.mxu0 0.0
      %307 = vmatpush1.msra.mxu0 0.0
      %308 = vmatprep.subr.mxu0 0.0
      %309 = vmatpush1.msra.mxu0 0.0
      %310 = vmatprep.subr.mxu0 0.0
      %311 = vmatpush1.msra.mxu0 0.0
      %312 = vmatprep.subr.mxu0 0.0
      %313 = vmatpush1.msra.mxu0 0.0
      %314 = vmatprep.subr.mxu0 0.0
      %315 = vmatpush1.msra.mxu0 0.0
      %316 = vmatprep.subr.mxu0 0.0
      %317 = vmatpush1.msra.mxu0 0.0
      %318 = vmatprep.subr.mxu0 0.0
      %319 = vmatpush1.msra.mxu0 0.0
      %320 = vmatprep.subr.mxu0 0.0
      %321 = vmatpush1.msra.mxu0 0.0
      %322 = vmatprep.subr.mxu0 0.0
      %323 = vmatpush1.msra.mxu0 0.0
      %324 = vmatprep.subr.mxu0 0.0
      %325 = vmatpush1.msra.mxu0 0.0
      %326 = vmatprep.subr.mxu0 0.0
      %327 = vmatpush1.msra.mxu0 0.0
      %328 = vmatprep.subr.mxu0 0.0
      %329 = vmatpush1.msra.mxu0 0.0
      %330 = vmatprep.subr.mxu0 0.0
      %331 = vmatpush1.msra.mxu0 0.0
      %332 = vmatprep.subr.mxu0 0.0
      %333 = vmatpush1.msra.mxu0 0.0
      %334 = vmatprep.subr.mxu0 0.0
      %335 = vmatpush1.msra.mxu0 0.0
      %336 = vmatprep.subr.mxu0 0.0
      %337 = vmatpush1.msra.mxu0 0.0
      %338 = vmatprep.subr.mxu0 0.0
      %339 = vmatpush1.msra.mxu0 0.0
      %340 = vmatprep.subr.mxu0 0.0
      %341 = vmatpush1.msra.mxu0 0.0
      %342 = vmatprep.subr.mxu0 0.0
      %343 = vmatpush1.msra.mxu0 0.0
      %344 = vmatprep.subr.mxu0 0.0
      %345 = vmatpush1.msra.mxu0 0.0
      %346 = vmatprep.subr.mxu0 0.0
      %347 = vmatpush1.msra.mxu0 0.0
      %348 = vmatprep.subr.mxu0 0.0
      %349 = vmatpush1.msra.mxu0 0.0
      %350 = vmatprep.subr.mxu0 0.0
      %351 = vmatpush1.msra.mxu0 0.0
      %352 = vmatprep.subr.mxu0 0.0
      %353 = vmatpush1.msra.mxu0 0.0
      %354 = vmatprep.subr.mxu0 0.0
      %355 = vmatpush1.msra.mxu0 0.0
      %356 = vmatprep.subr.mxu0 0.0
      %357 = vmatpush1.msra.mxu0 0.0
      %358 = vmatprep.subr.mxu0 0.0
      %359 = vmatpush1.msra.mxu0 0.0
      %360 = vmatprep.subr.mxu0 0.0
      %361 = vmatpush1.msra.mxu0 0.0
      %362 = vmatprep.subr.mxu0 0.0
      %363 = vmatpush1.msra.mxu0 0.0
      %364 = vmatprep.subr.mxu0 0.0
      %365 = vmatpush1.msra.mxu0 0.0
      %366 = vmatprep.subr.mxu0 0.0
      %367 = vmatpush1.msra.mxu0 0.0
      %368 = vmatprep.mubr.f32.mxu0 0.0
      %369 = vmatmul.mubr.f32.gmra.mrb[0].mxu0 %v302
      %v370 = vpop.f32.mrb[0].mxu0
      %v371 = vadd.f32 0.0, %v370
      %v372 = vpop.f32.mrb[0].mxu0
      %373 = vdwg.mxu0
      %374 = vrot.lane.b32.xlu0 %v197, 120
      %v375 = vpop.permute.xlu0 %374
      %376 = vrot.lane.b32.xlu0 %v198, 120
      %v377 = vpop.permute.xlu0 %376
      %v378 = vsel %vm202, %v375, 0
      %v380 = vsel %vm202, %v377, 0
      %382 = vmatprep.subr.mxu0 0.0
      %383 = vmatpush1.xpose.msra.mxu0 %v380
      %384 = vmatprep.subr.mxu0 0.0
      %385 = vmatpush1.xpose.msra.mxu0 0.0
      %386 = vmatprep.subr.mxu0 0.0
      %387 = vmatpush1.xpose.msra.mxu0 0.0
      %388 = vmatprep.subr.mxu0 0.0
      %389 = vmatpush1.xpose.msra.mxu0 0.0
      %390 = vmatprep.subr.mxu0 0.0
      %391 = vmatpush1.xpose.msra.mxu0 0.0
      %392 = vmatprep.subr.mxu0 0.0
      %393 = vmatpush1.xpose.msra.mxu0 0.0
      %394 = vmatprep.subr.mxu0 0.0
      %395 = vmatpush1.xpose.msra.mxu0 0.0
      %396 = vmatprep.subr.mxu0 0.0
      %397 = vmatpush1.xpose.msra.mxu0 0.0
      %398 = vmatprep.subr.mxu0 0.0
      %399 = vmatpush1.xpose.msra.mxu0 0.0
      %400 = vmatprep.subr.mxu0 0.0
      %401 = vmatpush1.xpose.msra.mxu0 0.0
      %402 = vmatprep.subr.mxu0 0.0
      %403 = vmatpush1.xpose.msra.mxu0 0.0
      %404 = vmatprep.subr.mxu0 0.0
      %405 = vmatpush1.xpose.msra.mxu0 0.0
      %406 = vmatprep.subr.mxu0 0.0
      %407 = vmatpush1.xpose.msra.mxu0 0.0
      %408 = vmatprep.subr.mxu0 0.0
      %409 = vmatpush1.xpose.msra.mxu0 0.0
      %410 = vmatprep.subr.mxu0 0.0
      %411 = vmatpush1.xpose.msra.mxu0 0.0
      %412 = vmatprep.subr.mxu0 0.0
      %413 = vmatpush1.xpose.msra.mxu0 0.0
      %414 = vmatprep.subr.mxu0 0.0
      %415 = vmatpush1.xpose.msra.mxu0 0.0
      %416 = vmatprep.subr.mxu0 0.0
      %417 = vmatpush1.xpose.msra.mxu0 0.0
      %418 = vmatprep.subr.mxu0 0.0
      %419 = vmatpush1.xpose.msra.mxu0 0.0
      %420 = vmatprep.subr.mxu0 0.0
      %421 = vmatpush1.xpose.msra.mxu0 0.0
      %422 = vmatprep.subr.mxu0 0.0
      %423 = vmatpush1.xpose.msra.mxu0 0.0
      %424 = vmatprep.subr.mxu0 0.0
      %425 = vmatpush1.xpose.msra.mxu0 0.0
      %426 = vmatprep.subr.mxu0 0.0
      %427 = vmatpush1.xpose.msra.mxu0 0.0
      %428 = vmatprep.subr.mxu0 0.0
      %429 = vmatpush1.xpose.msra.mxu0 0.0
      %430 = vmatprep.subr.mxu0 0.0
      %431 = vmatpush1.xpose.msra.mxu0 0.0
      %432 = vmatprep.subr.mxu0 0.0
      %433 = vmatpush1.xpose.msra.mxu0 0.0
      %434 = vmatprep.subr.mxu0 0.0
      %435 = vmatpush1.xpose.msra.mxu0 0.0
      %436 = vmatprep.subr.mxu0 0.0
      %437 = vmatpush1.xpose.msra.mxu0 0.0
      %438 = vmatprep.subr.mxu0 0.0
      %439 = vmatpush1.xpose.msra.mxu0 0.0
      %440 = vmatprep.subr.mxu0 0.0
      %441 = vmatpush1.xpose.msra.mxu0 0.0
      %442 = vmatprep.subr.mxu0 0.0
      %443 = vmatpush1.xpose.msra.mxu0 0.0
      %444 = vmatprep.subr.mxu0 0.0
      %445 = vmatpush1.xpose.msra.mxu0 0.0
      %446 = vmatprep.mubr.f32.mxu0 0.0
      %447 = vmatmul.mubr.f32.gmra.mrb[0].mxu0 %v378
      %v448 = vpop.f32.mrb[0].mxu0
      %v449 = vadd.f32 0.0, %v448
      %v450 = vpop.f32.mrb[0].mxu0
      %451 = vdwg.mxu0
      %v452 = vmul.f32 %v449, 0.35355338
      %v453 = vadd.f32 %v452, %v284
      %v454 = vsel %vm202, %v453, -inf
      %455 = vmax.xlane.f32.xlu0 %v454
      %v456 = vpop.xlane.xlu0 %455
      %v457 = vsub.f32 %v453, %v456
      %v458 = vmul.f32 %v457, 1.442695
      %v459 = vpow.pop %v458
      %v460 = vsel %vm202, %v459, 0.0
      %461 = vadd.xlane.f32.xlu0 %v460
      %v462 = vpop.xlane.xlu0 %461
      %v463 = vrcp.pop %v462
      %v464 = vmul.f32 %v459, %v463
      %465 = vrot.lane.b32.xlu0 %v198, 88
      %v466 = vpop.permute.xlu0 %465
      %v469 = vsel %vm202, %v464, 0
      %471 = vmatprep.subr.mxu0 0.0
      %472 = vmatpush1.msra.mxu0 %v466
      %473 = vmatprep.subr.mxu0 0.0
      %474 = vmatpush1.msra.mxu0 0.0
      %475 = vmatprep.subr.mxu0 0.0
      %476 = vmatpush1.msra.mxu0 0.0
      %477 = vmatprep.subr.mxu0 0.0
      %478 = vmatpush1.msra.mxu0 0.0
      %479 = vmatprep.subr.mxu0 0.0
      %480 = vmatpush1.msra.mxu0 0.0
      %481 = vmatprep.subr.mxu0 0.0
      %482 = vmatpush1.msra.mxu0 0.0
      %483 = vmatprep.subr.mxu0 0.0
      %484 = vmatpush1.msra.mxu0 0.0
      %485 = vmatprep.subr.mxu0 0.0
      %486 = vmatpush1.msra.mxu0 0.0
      %487 = vmatprep.subr.mxu0 0.0
      %488 = vmatpush1.msra.mxu0 0.0
      %489 = vmatprep.subr.mxu0 0.0
      %490 = vmatpush1.msra.mxu0 0.0
      %491 = vmatprep.subr.mxu0 0.0
      %492 = vmatpush1.msra.mxu0 0.0
      %493 = vmatprep.subr.mxu0 0.0
      %494 = vmatpush1.msra.mxu0 0.0
      %495 = vmatprep.subr.mxu0 0.0
      %496 = vmatpush1.msra.mxu0 0.0
      %497 = vmatprep.subr.mxu0 0.0
      %498 = vmatpush1.msra.mxu0 0.0
      %499 = vmatprep.subr.mxu0 0.0
      %500 = vmatpush1.msra.mxu0 0.0
      %501 = vmatprep.subr.mxu0 0.0
      %502 = vmatpush1.msra.mxu0 0.0
      %503 = vmatprep.subr.mxu0 0.0
      %504 = vmatpush1.msra.mxu0 0.0
      %505 = vmatprep.subr.mxu0 0.0
      %506 = vmatpush1.msra.mxu0 0.0
      %507 = vmatprep.subr.mxu0 0.0
      %508 = vmatpush1.msra.mxu0 0.0
      %509 = vmatprep.subr.mxu0 0.0
      %510 = vmatpush1.msra.mxu0 0.0
      %511 = vmatprep.subr.mxu0 0.0
      %512 = vmatpush1.msra.mxu0 0.0
      %513 = vmatprep.subr.mxu0 0.0
      %514 = vmatpush1.msra.mxu0 0.0
      %515 = vmatprep.subr.mxu0 0.0
      %516 = vmatpush1.msra.mxu0 0.0
      %517 = vmatprep.subr.mxu0 0.0
      %518 = vmatpush1.msra.mxu0 0.0
      %519 = vmatprep.subr.mxu0 0.0
      %520 = vmatpush1.msra.mxu0 0.0
      %521 = vmatprep.subr.mxu0 0.0
      %522 = vmatpush1.msra.mxu0 0.0
      %523 = vmatprep.subr.mxu0 0.0
      %524 = vmatpush1.msra.mxu0 0.0
      %525 = vmatprep.subr.mxu0 0.0
      %526 = vmatpush1.msra.mxu0 0.0
      %527 = vmatprep.subr.mxu0 0.0
      %528 = vmatpush1.msra.mxu0 0.0
      %529 = vmatprep.subr.mxu0 0.0
      %530 = vmatpush1.msra.mxu0 0.0
      %531 = vmatprep.subr.mxu0 0.0
      %532 = vmatpush1.msra.mxu0 0.0
      %533 = vmatprep.subr.mxu0 0.0
      %534 = vmatpush1.msra.mxu0 0.0
      %535 = vmatprep.mubr.f32.mxu0 0.0
      %536 = vmatmul.mubr.f32.gmra.mrb[0].mxu0 %v469
      %v537 = vpop.f32.mrb[0].mxu0
      %v538 = vadd.f32 0.0, %v537
      %v539 = vpop.f32.mrb[0].mxu0
      %540 = vdwg.mxu0
      %541 = vrot.lane.b32.xlu0 %v197, 112
      %v542 = vpop.permute.xlu0 %541
      %543 = vrot.lane.b32.xlu0 %v198, 112
      %v544 = vpop.permute.xlu0 %543
      %v545 = vsel %vm202, %v542, 0
      %v547 = vsel %vm202, %v544, 0
      %549 = vmatprep.subr.mxu0 0.0
      %550 = vmatpush1.xpose.msra.mxu0 %v547
      %551 = vmatprep.subr.mxu0 0.0
      %552 = vmatpush1.xpose.msra.mxu0 0.0
      %553 = vmatprep.subr.mxu0 0.0
      %554 = vmatpush1.xpose.msra.mxu0 0.0
      %555 = vmatprep.subr.mxu0 0.0
      %556 = vmatpush1.xpose.msra.mxu0 0.0
      %557 = vmatprep.subr.mxu0 0.0
      %558 = vmatpush1.xpose.msra.mxu0 0.0
      %559 = vmatprep.subr.mxu0 0.0
      %560 = vmatpush1.xpose.msra.mxu0 0.0
      %561 = vmatprep.subr.mxu0 0.0
      %562 = vmatpush1.xpose.msra.mxu0 0.0
      %563 = vmatprep.subr.mxu0 0.0
      %564 = vmatpush1.xpose.msra.mxu0 0.0
      %565 = vmatprep.subr.mxu0 0.0
      %566 = vmatpush1.xpose.msra.mxu0 0.0
      %567 = vmatprep.subr.mxu0 0.0
      %568 = vmatpush1.xpose.msra.mxu0 0.0
      %569 = vmatprep.subr.mxu0 0.0
      %570 = vmatpush1.xpose.msra.mxu0 0.0
      %571 = vmatprep.subr.mxu0 0.0
      %572 = vmatpush1.xpose.msra.mxu0 0.0
      %573 = vmatprep.subr.mxu0 0.0
      %574 = vmatpush1.xpose.msra.mxu0 0.0
      %575 = vmatprep.subr.mxu0 0.0
      %576 = vmatpush1.xpose.msra.mxu0 0.0
      %577 = vmatprep.subr.mxu0 0.0
      %578 = vmatpush1.xpose.msra.mxu0 0.0
      %579 = vmatprep.subr.mxu0 0.0
      %580 = vmatpush1.xpose.msra.mxu0 0.0
      %581 = vmatprep.subr.mxu0 0.0
      %582 = vmatpush1.xpose.msra.mxu0 0.0
      %583 = vmatprep.subr.mxu0 0.0
      %584 = vmatpush1.xpose.msra.mxu0 0.0
      %585 = vmatprep.subr.mxu0 0.0
      %586 = vmatpush1.xpose.msra.mxu0 0.0
      %587 = vmatprep.subr.mxu0 0.0
      %588 = vmatpush1.xpose.msra.mxu0 0.0
      %589 = vmatprep.subr.mxu0 0.0
      %590 = vmatpush1.xpose.msra.mxu0 0.0
      %591 = vmatprep.subr.mxu0 0.0
      %592 = vmatpush1.xpose.msra.mxu0 0.0
      %593 = vmatprep.subr.mxu0 0.0
      %594 = vmatpush1.xpose.msra.mxu0 0.0
      %595 = vmatprep.subr.mxu0 0.0
      %596 = vmatpush1.xpose.msra.mxu0 0.0
      %597 = vmatprep.subr.mxu0 0.0
      %598 = vmatpush1.xpose.msra.mxu0 0.0
      %599 = vmatprep.subr.mxu0 0.0
      %600 = vmatpush1.xpose.msra.mxu0 0.0
      %601 = vmatprep.subr.mxu0 0.0
      %602 = vmatpush1.xpose.msra.mxu0 0.0
      %603 = vmatprep.subr.mxu0 0.0
      %604 = vmatpush1.xpose.msra.mxu0 0.0
      %605 = vmatprep.subr.mxu0 0.0
      %606 = vmatpush1.xpose.msra.mxu0 0.0
      %607 = vmatprep.subr.mxu0 0.0
      %608 = vmatpush1.xpose.msra.mxu0 0.0
      %609 = vmatprep.subr.mxu0 0.0
      %610 = vmatpush1.xpose.msra.mxu0 0.0
      %611 = vmatprep.subr.mxu0 0.0
      %612 = vmatpush1.xpose.msra.mxu0 0.0
      %613 = vmatprep.mubr.f32.mxu0 0.0
      %614 = vmatmul.mubr.f32.gmra.mrb[0].mxu0 %v545
      %v615 = vpop.f32.mrb[0].mxu0
      %v616 = vadd.f32 0.0, %v615
      %v617 = vpop.f32.mrb[0].mxu0
      %618 = vdwg.mxu0
      %v619 = vmul.f32 %v616, 0.35355338
      %v620 = vadd.f32 %v619, %v284
      %v621 = vsel %vm202, %v620, -inf
      %622 = vmax.xlane.f32.xlu0 %v621
      %v623 = vpop.xlane.xlu0 %622
      %v624 = vsub.f32 %v620, %v623
      %v625 = vmul.f32 %v624, 1.442695
      %v626 = vpow.pop %v625
      %v627 = vsel %vm202, %v626, 0.0
      %628 = vadd.xlane.f32.xlu0 %v627
      %v629 = vpop.xlane.xlu0 %628
      %v630 = vrcp.pop %v629
      %v631 = vmul.f32 %v626, %v630
      %632 = vrot.lane.b32.xlu0 %v198, 80
      %v633 = vpop.permute.xlu0 %632
      %v636 = vsel %vm202, %v631, 0
      %638 = vmatprep.subr.mxu0 0.0
      %639 = vmatpush1.msra.mxu0 %v633
      %640 = vmatprep.subr.mxu0 0.0
      %641 = vmatpush1.msra.mxu0 0.0
      %642 = vmatprep.subr.mxu0 0.0
      %643 = vmatpush1.msra.mxu0 0.0
      %644 = vmatprep.subr.mxu0 0.0
      %645 = vmatpush1.msra.mxu0 0.0
      %646 = vmatprep.subr.mxu0 0.0
      %647 = vmatpush1.msra.mxu0 0.0
      %648 = vmatprep.subr.mxu0 0.0
      %649 = vmatpush1.msra.mxu0 0.0
      %650 = vmatprep.subr.mxu0 0.0
      %651 = vmatpush1.msra.mxu0 0.0
      %652 = vmatprep.subr.mxu0 0.0
      %653 = vmatpush1.msra.mxu0 0.0
      %654 = vmatprep.subr.mxu0 0.0
      %655 = vmatpush1.msra.mxu0 0.0
      %656 = vmatprep.subr.mxu0 0.0
      %657 = vmatpush1.msra.mxu0 0.0
      %658 = vmatprep.subr.mxu0 0.0
      %659 = vmatpush1.msra.mxu0 0.0
      %660 = vmatprep.subr.mxu0 0.0
      %661 = vmatpush1.msra.mxu0 0.0
      %662 = vmatprep.subr.mxu0 0.0
      %663 = vmatpush1.msra.mxu0 0.0
      %664 = vmatprep.subr.mxu0 0.0
      %665 = vmatpush1.msra.mxu0 0.0
      %666 = vmatprep.subr.mxu0 0.0
      %667 = vmatpush1.msra.mxu0 0.0
      %668 = vmatprep.subr.mxu0 0.0
      %669 = vmatpush1.msra.mxu0 0.0
      %670 = vmatprep.subr.mxu0 0.0
      %671 = vmatpush1.msra.mxu0 0.0
      %672 = vmatprep.subr.mxu0 0.0
      %673 = vmatpush1.msra.mxu0 0.0
      %674 = vmatprep.subr.mxu0 0.0
      %675 = vmatpush1.msra.mxu0 0.0
      %676 = vmatprep.subr.mxu0 0.0
      %677 = vmatpush1.msra.mxu0 0.0
      %678 = vmatprep.subr.mxu0 0.0
      %679 = vmatpush1.msra.mxu0 0.0
      %680 = vmatprep.subr.mxu0 0.0
      %681 = vmatpush1.msra.mxu0 0.0
      %682 = vmatprep.subr.mxu0 0.0
      %683 = vmatpush1.msra.mxu0 0.0
      %684 = vmatprep.subr.mxu0 0.0
      %685 = vmatpush1.msra.mxu0 0.0
      %686 = vmatprep.subr.mxu0 0.0
      %687 = vmatpush1.msra.mxu0 0.0
      %688 = vmatprep.subr.mxu0 0.0
      %689 = vmatpush1.msra.mxu0 0.0
      %690 = vmatprep.subr.mxu0 0.0
      %691 = vmatpush1.msra.mxu0 0.0
      %692 = vmatprep.subr.mxu0 0.0
      %693 = vmatpush1.msra.mxu0 0.0
      %694 = vmatprep.subr.mxu0 0.0
      %695 = vmatpush1.msra.mxu0 0.0
      %696 = vmatprep.subr.mxu0 0.0
      %697 = vmatpush1.msra.mxu0 0.0
      %698 = vmatprep.subr.mxu0 0.0
      %699 = vmatpush1.msra.mxu0 0.0
      %700 = vmatprep.subr.mxu0 0.0
      %701 = vmatpush1.msra.mxu0 0.0
      %702 = vmatprep.mubr.f32.mxu0 0.0
      %703 = vmatmul.mubr.f32.gmra.mrb[0].mxu0 %v636
      %v704 = vpop.f32.mrb[0].mxu0
      %v705 = vadd.f32 0.0, %v704
      %v706 = vpop.f32.mrb[0].mxu0
      %707 = vdwg.mxu0
      %708 = vrot.lane.b32.xlu0 %v197, 104
      %v709 = vpop.permute.xlu0 %708
      %710 = vrot.lane.b32.xlu0 %v198, 104
      %v711 = vpop.permute.xlu0 %710
      %v712 = vsel %vm202, %v709, 0
      %v714 = vsel %vm202, %v711, 0
      %716 = vmatprep.subr.mxu0 0.0
      %717 = vmatpush1.xpose.msra.mxu0 %v714
      %718 = vmatprep.subr.mxu0 0.0
      %719 = vmatpush1.xpose.msra.mxu0 0.0
      %720 = vmatprep.subr.mxu0 0.0
      %721 = vmatpush1.xpose.msra.mxu0 0.0
      %722 = vmatprep.subr.mxu0 0.0
      %723 = vmatpush1.xpose.msra.mxu0 0.0
      %724 = vmatprep.subr.mxu0 0.0
      %725 = vmatpush1.xpose.msra.mxu0 0.0
      %726 = vmatprep.subr.mxu0 0.0
      %727 = vmatpush1.xpose.msra.mxu0 0.0
      %728 = vmatprep.subr.mxu0 0.0
      %729 = vmatpush1.xpose.msra.mxu0 0.0
      %730 = vmatprep.subr.mxu0 0.0
      %731 = vmatpush1.xpose.msra.mxu0 0.0
      %732 = vmatprep.subr.mxu0 0.0
      %733 = vmatpush1.xpose.msra.mxu0 0.0
      %734 = vmatprep.subr.mxu0 0.0
      %735 = vmatpush1.xpose.msra.mxu0 0.0
      %736 = vmatprep.subr.mxu0 0.0
      %737 = vmatpush1.xpose.msra.mxu0 0.0
      %738 = vmatprep.subr.mxu0 0.0
      %739 = vmatpush1.xpose.msra.mxu0 0.0
      %740 = vmatprep.subr.mxu0 0.0
      %741 = vmatpush1.xpose.msra.mxu0 0.0
      %742 = vmatprep.subr.mxu0 0.0
      %743 = vmatpush1.xpose.msra.mxu0 0.0
      %744 = vmatprep.subr.mxu0 0.0
      %745 = vmatpush1.xpose.msra.mxu0 0.0
      %746 = vmatprep.subr.mxu0 0.0
      %747 = vmatpush1.xpose.msra.mxu0 0.0
      %748 = vmatprep.subr.mxu0 0.0
      %749 = vmatpush1.xpose.msra.mxu0 0.0
      %750 = vmatprep.subr.mxu0 0.0
      %751 = vmatpush1.xpose.msra.mxu0 0.0
      %752 = vmatprep.subr.mxu0 0.0
      %753 = vmatpush1.xpose.msra.mxu0 0.0
      %754 = vmatprep.subr.mxu0 0.0
      %755 = vmatpush1.xpose.msra.mxu0 0.0
      %756 = vmatprep.subr.mxu0 0.0
      %757 = vmatpush1.xpose.msra.mxu0 0.0
      %758 = vmatprep.subr.mxu0 0.0
      %759 = vmatpush1.xpose.msra.mxu0 0.0
      %760 = vmatprep.subr.mxu0 0.0
      %761 = vmatpush1.xpose.msra.mxu0 0.0
      %762 = vmatprep.subr.mxu0 0.0
      %763 = vmatpush1.xpose.msra.mxu0 0.0
      %764 = vmatprep.subr.mxu0 0.0
      %765 = vmatpush1.xpose.msra.mxu0 0.0
      %766 = vmatprep.subr.mxu0 0.0
      %767 = vmatpush1.xpose.msra.mxu0 0.0
      %768 = vmatprep.subr.mxu0 0.0
      %769 = vmatpush1.xpose.msra.mxu0 0.0
      %770 = vmatprep.subr.mxu0 0.0
      %771 = vmatpush1.xpose.msra.mxu0 0.0
      %772 = vmatprep.subr.mxu0 0.0
      %773 = vmatpush1.xpose.msra.mxu0 0.0
      %774 = vmatprep.subr.mxu0 0.0
      %775 = vmatpush1.xpose.msra.mxu0 0.0
      %776 = vmatprep.subr.mxu0 0.0
      %777 = vmatpush1.xpose.msra.mxu0 0.0
      %778 = vmatprep.subr.mxu0 0.0
      %779 = vmatpush1.xpose.msra.mxu0 0.0
      %780 = vmatprep.mubr.f32.mxu0 0.0
      %781 = vmatmul.mubr.f32.gmra.mrb[0].mxu0 %v712
      %v782 = vpop.f32.mrb[0].mxu0
      %v783 = vadd.f32 0.0, %v782
      %v784 = vpop.f32.mrb[0].mxu0
      %785 = vdwg.mxu0
      %v786 = vmul.f32 %v783, 0.35355338
      %v787 = vadd.f32 %v786, %v284
      %v788 = vsel %vm202, %v787, -inf
      %789 = vmax.xlane.f32.xlu0 %v788
      %v790 = vpop.xlane.xlu0 %789
      %v791 = vsub.f32 %v787, %v790
      %v792 = vmul.f32 %v791, 1.442695
      %v793 = vpow.pop %v792
      %v794 = vsel %vm202, %v793, 0.0
      %795 = vadd.xlane.f32.xlu0 %v794
      %v796 = vpop.xlane.xlu0 %795
      %v797 = vrcp.pop %v796
      %v798 = vmul.f32 %v793, %v797
      %799 = vrot.lane.b32.xlu0 %v198, 72
      %v800 = vpop.permute.xlu0 %799
      %v803 = vsel %vm202, %v798, 0
      %805 = vmatprep.subr.mxu0 0.0
      %806 = vmatpush1.msra.mxu0 %v800
      %807 = vmatprep.subr.mxu0 0.0
      %808 = vmatpush1.msra.mxu0 0.0
      %809 = vmatprep.subr.mxu0 0.0
      %810 = vmatpush1.msra.mxu0 0.0
      %811 = vmatprep.subr.mxu0 0.0
      %812 = vmatpush1.msra.mxu0 0.0
      %813 = vmatprep.subr.mxu0 0.0
      %814 = vmatpush1.msra.mxu0 0.0
      %815 = vmatprep.subr.mxu0 0.0
      %816 = vmatpush1.msra.mxu0 0.0
      %817 = vmatprep.subr.mxu0 0.0
      %818 = vmatpush1.msra.mxu0 0.0
      %819 = vmatprep.subr.mxu0 0.0
      %820 = vmatpush1.msra.mxu0 0.0
      %821 = vmatprep.subr.mxu0 0.0
      %822 = vmatpush1.msra.mxu0 0.0
      %823 = vmatprep.subr.mxu0 0.0
      %824 = vmatpush1.msra.mxu0 0.0
      %825 = vmatprep.subr.mxu0 0.0
      %826 = vmatpush1.msra.mxu0 0.0
      %827 = vmatprep.subr.mxu0 0.0
      %828 = vmatpush1.msra.mxu0 0.0
      %829 = vmatprep.subr.mxu0 0.0
      %830 = vmatpush1.msra.mxu0 0.0
      %831 = vmatprep.subr.mxu0 0.0
      %832 = vmatpush1.msra.mxu0 0.0
      %833 = vmatprep.subr.mxu0 0.0
      %834 = vmatpush1.msra.mxu0 0.0
      %835 = vmatprep.subr.mxu0 0.0
      %836 = vmatpush1.msra.mxu0 0.0
      %837 = vmatprep.subr.mxu0 0.0
      %838 = vmatpush1.msra.mxu0 0.0
      %839 = vmatprep.subr.mxu0 0.0
      %840 = vmatpush1.msra.mxu0 0.0
      %841 = vmatprep.subr.mxu0 0.0
      %842 = vmatpush1.msra.mxu0 0.0
      %843 = vmatprep.subr.mxu0 0.0
      %844 = vmatpush1.msra.mxu0 0.0
      %845 = vmatprep.subr.mxu0 0.0
      %846 = vmatpush1.msra.mxu0 0.0
      %847 = vmatprep.subr.mxu0 0.0
      %848 = vmatpush1.msra.mxu0 0.0
      %849 = vmatprep.subr.mxu0 0.0
      %850 = vmatpush1.msra.mxu0 0.0
      %851 = vmatprep.subr.mxu0 0.0
      %852 = vmatpush1.msra.mxu0 0.0
      %853 = vmatprep.subr.mxu0 0.0
      %854 = vmatpush1.msra.mxu0 0.0
      %855 = vmatprep.subr.mxu0 0.0
      %856 = vmatpush1.msra.mxu0 0.0
      %857 = vmatprep.subr.mxu0 0.0
      %858 = vmatpush1.msra.mxu0 0.0
      %859 = vmatprep.subr.mxu0 0.0
      %860 = vmatpush1.msra.mxu0 0.0
      %861 = vmatprep.subr.mxu0 0.0
      %862 = vmatpush1.msra.mxu0 0.0
      %863 = vmatprep.subr.mxu0 0.0
      %864 = vmatpush1.msra.mxu0 0.0
      %865 = vmatprep.subr.mxu0 0.0
      %866 = vmatpush1.msra.mxu0 0.0
      %867 = vmatprep.subr.mxu0 0.0
      %868 = vmatpush1.msra.mxu0 0.0
      %869 = vmatprep.mubr.f32.mxu0 0.0
      %870 = vmatmul.mubr.f32.gmra.mrb[0].mxu0 %v803
      %v871 = vpop.f32.mrb[0].mxu0
      %v872 = vadd.f32 0.0, %v871
      %v873 = vpop.f32.mrb[0].mxu0
      %874 = vdwg.mxu0
      %876 = vrot.lane.b32.xlu0 %v538, 8
      %v877 = vpop.permute.xlu0 %876
      %880 = vrot.lane.b32.xlu0 %v705, 16
      %v881 = vpop.permute.xlu0 %880
      %884 = vrot.lane.b32.xlu0 %v872, 24
      %v885 = vpop.permute.xlu0 %884
      %v887 = vsel %vm202, %v371, %v877
      %vm888 = vcmask 130048
      %v889 = vsel %vm888, %v887, %v881
      %vm890 = vcmask 195584
      %v891 = vsel %vm890, %v889, %v885
      %vm892 = vcmask 261120
      %893 = vst.msk [vmem:[%s196] sm:$0xff] %vm892, %v891
      %p894 = scmp.lt.s32.totalorder %s14, 1
      %s895 = scalar_select %p894, %s14, 1
      %s896 = smul.addr %s895, 8
      %s897 = scalar_lea.vmem %s3, %s896
      // Predicated region
      $region33: #{seq2seq_forward.53} parent=31 // pred_check
        %p898 = pneg %p110
      $region34: #{seq2seq_forward.53} parent=31 // pred_check_branch
        %900 = sbr.rel (%p898) target = $region36
      $region35: #{seq2seq_forward.53} parent=31 // pred_region
        _
      $region36: #{seq2seq_forward.53} parent=31 // pred_fallthru
        _
    $region32: #{seq2seq_forward.53} parent=5 // pred_fallthru
      _
    %p901 = scmp.le.s32.totalorder 2, %s9
    // Predicated region
    $region37: #{seq2seq_forward.53} parent=5 // pred_check
      %p902 = pneg %p901
    $region38: #{seq2seq_forward.53} parent=5 // pred_check_branch
      %904 = sbr.rel (%p902) target = $region40
    $region39: #{seq2seq_forward.53} parent=5 // pred_region
      %s905 = ssub.s32 %s9, 2
      // Predicated region
      $region41: #{seq2seq_forward.53} parent=39 // pred_check
        %p906 = pneg %p116
      $region42: #{seq2seq_forward.53} parent=39 // pred_check_branch
        %908 = sbr.rel (%p906) target = $region44
      $region43: #{seq2seq_forward.53} parent=39 // pred_region
        %p909 = scmp.lt.s32.totalorder %s15, 1
        %s910 = scalar_select %p909, %s15, 1
        %s911 = smul.addr %s910, 8
        %s912 = scalar_lea.vmem %s3, %s911
      $region44: #{seq2seq_forward.53} parent=39 // pred_fallthru
        _
    $region40: #{seq2seq_forward.53} parent=5 // pred_fallthru
      _
  $region6: #{seq2seq_forward.53} parent=0 // loop_footer
    %s13 = sadd.s32 1, %s9
  $region7: #{seq2seq_forward.53} parent=0 // loop_footer_branch
    %8 = sbr.rel target = $region3
  $region8: #{seq2seq_forward.53} parent=0 // loop_exit
    _

// kernel: seq2seq_forward.69
$region0: #{seq2seq_forward.69}
  #allocation0 [shape = 'u32[]', space=smem, size = 0x4, offset = 0x4, fixed_abs, tag = 'smem constant byte address 0x4 - core index']
  #allocation1 [shape = 'u32[144,128]{1,0:T(1,128)}', space=vmem, size = 0x12000, scoped, tag = 'internal scratch']
  #allocation2 [shape = 'f32[16,60]{1,0:T(8,128)}', space=vmem, size = 0x2000, scoped, tag = 'scratch operand']
  %s0 = inlined_call_operand.vmem [shape: f32[16,32], index: 0, kind: input, shape index: {}]
  %s1 = inlined_call_operand.vmem [shape: f32[32,60], index: 1, kind: input, shape index: {}]
  %s2 = inlined_call_operand.vmem [shape: f32[1,60], index: 2, kind: input, shape index: {}]
  %s3 = inlined_call_operand.hbm [shape: f32[16,60], index: 3, kind: output, shape index: {}]
  %s4 = sld [smem:[#allocation0]]
  $region30: #{seq2seq_forward.69} parent=0
    _
  %s6 = ssub.s32 1, %s4
  %s7 = scalar_select 0, %s6, %s4
  $region1: #{seq2seq_forward.69} parent=0
    #allocation3 [shape = 'u8[8192]{0}', space=vmem, size = 0x2000, scoped, tag = 'output window, operand 0, single buffered']
    #allocation4 [shape = 's32[1]{0}', space=sflag, size = 0x4, scoped, tag = 'scoped memory for seq2seq_forward.69']
    %8 = vsyncpa [#allocation4], 0
    // Predicated region
    $region2: #{seq2seq_forward.69} parent=1 // pred_check
      _
    $region3: #{seq2seq_forward.69} parent=1 // pred_check_branch
      %10 = sbr.rel (0) target = $region5
    $region4: #{seq2seq_forward.69} parent=1 // pred_region
      _
    $region5: #{seq2seq_forward.69} parent=1 // pred_fallthru
      _
    // Predicated region
    $region6: #{seq2seq_forward.69} parent=1 // pred_check
      _
    $region7: #{seq2seq_forward.69} parent=1 // pred_check_branch
      %12 = sbr.rel (0) target = $region9
    $region8: #{seq2seq_forward.69} parent=1 // pred_region
      _
    $region9: #{seq2seq_forward.69} parent=1 // pred_fallthru
      _
    // Predicated region
    $region10: #{seq2seq_forward.69} parent=1 // pred_check
      _
    $region11: #{seq2seq_forward.69} parent=1 // pred_check_branch
      %14 = sbr.rel (0) target = $region13
    $region12: #{seq2seq_forward.69} parent=1 // pred_region
      _
    $region13: #{seq2seq_forward.69} parent=1 // pred_fallthru
      _
    %p15 = scmp.eq.s32.totalorder 0, 0
    // Predicated region
    $region14: #{seq2seq_forward.69} parent=1 // pred_check
      %p16 = pneg %p15
    $region15: #{seq2seq_forward.69} parent=1 // pred_check_branch
      %18 = sbr.rel (%p16) target = $region17
    $region16: #{seq2seq_forward.69} parent=1 // pred_region
      %vm19 = vcmask 490496
      %20 = vst.msk [vmem:[#allocation2] sm:$0xff] %vm19, 0.0
      %21 = vst.msk [vmem:[#allocation2 + $0x8] sm:$0xff] %vm19, 0.0
    $region17: #{seq2seq_forward.69} parent=1 // pred_fallthru
      _
    %v22 = vld [vmem:[#allocation2] sm:$0xff]
    %v23 = vld [vmem:[#allocation2 + $0x8] sm:$0xff]
    %v24 = vld [vmem:[%s0] sm:$0xff]
    %v25 = vld [vmem:[%s0 + $0x8] sm:$0xff]
    %v26 = vld [vmem:[%s1] sm:$0xff]
    %v27 = vld [vmem:[%s1 + $0x8] sm:$0xff]
    %v28 = vld [vmem:[%s1 + $0x10] sm:$0xff]
    %v29 = vld [vmem:[%s1 + $0x18] sm:$0xff]
    %vm30 = vcmask 261120
    %v32 = vsel %vm30, %v24, 0
    %v35 = vsel %vm30, %v25, 0
    %37 = vmatprep.subr.mxu0 0.0
    %38 = vmatpush1.msra.mxu0 %v26
    %39 = vmatprep.subr.mxu0 0.0
    %40 = vmatpush1.msra.mxu0 %v27
    %41 = vmatprep.subr.mxu0 0.0
    %42 = vmatpush1.msra.mxu0 %v28
    %43 = vmatprep.subr.mxu0 0.0
    %44 = vmatpush1.msra.mxu0 %v29
    %45 = vmatprep.subr.mxu0 0.0
    %46 = vmatpush1.msra.mxu0 0.0
    %47 = vmatprep.subr.mxu0 0.0
    %48 = vmatpush1.msra.mxu0 0.0
    %49 = vmatprep.subr.mxu0 0.0
    %50 = vmatpush1.msra.mxu0 0.0
    %51 = vmatprep.subr.mxu0 0.0
    %52 = vmatpush1.msra.mxu0 0.0
    %53 = vmatprep.subr.mxu0 0.0
    %54 = vmatpush1.msra.mxu0 0.0
    %55 = vmatprep.subr.mxu0 0.0
    %56 = vmatpush1.msra.mxu0 0.0
    %57 = vmatprep.subr.mxu0 0.0
    %58 = vmatpush1.msra.mxu0 0.0
    %59 = vmatprep.subr.mxu0 0.0
    %60 = vmatpush1.msra.mxu0 0.0
    %61 = vmatprep.subr.mxu0 0.0
    %62 = vmatpush1.msra.mxu0 0.0
    %63 = vmatprep.subr.mxu0 0.0
    %64 = vmatpush1.msra.mxu0 0.0
    %65 = vmatprep.subr.mxu0 0.0
    %66 = vmatpush1.msra.mxu0 0.0
    %67 = vmatprep.subr.mxu0 0.0
    %68 = vmatpush1.msra.mxu0 0.0
    %69 = vmatprep.subr.mxu0 0.0
    %70 = vmatpush1.msra.mxu0 0.0
    %71 = vmatprep.subr.mxu0 0.0
    %72 = vmatpush1.msra.mxu0 0.0
    %73 = vmatprep.subr.mxu0 0.0
    %74 = vmatpush1.msra.mxu0 0.0
    %75 = vmatprep.subr.mxu0 0.0
    %76 = vmatpush1.msra.mxu0 0.0
    %77 = vmatprep.subr.mxu0 0.0
    %78 = vmatpush1.msra.mxu0 0.0
    %79 = vmatprep.subr.mxu0 0.0
    %80 = vmatpush1.msra.mxu0 0.0
    %81 = vmatprep.subr.mxu0 0.0
    %82 = vmatpush1.msra.mxu0 0.0
    %83 = vmatprep.subr.mxu0 0.0
    %84 = vmatpush1.msra.mxu0 0.0
    %85 = vmatprep.subr.mxu0 0.0
    %86 = vmatpush1.msra.mxu0 0.0
    %87 = vmatprep.subr.mxu0 0.0
    %88 = vmatpush1.msra.mxu0 0.0
    %89 = vmatprep.subr.mxu0 0.0
    %90 = vmatpush1.msra.mxu0 0.0
    %91 = vmatprep.subr.mxu0 0.0
    %92 = vmatpush1.msra.mxu0 0.0
    %93 = vmatprep.subr.mxu0 0.0
    %94 = vmatpush1.msra.mxu0 0.0
    %95 = vmatprep.subr.mxu0 0.0
    %96 = vmatpush1.msra.mxu0 0.0
    %97 = vmatprep.subr.mxu0 0.0
    %98 = vmatpush1.msra.mxu0 0.0
    %99 = vmatprep.subr.mxu0 0.0
    %100 = vmatpush1.msra.mxu0 0.0
    %101 = vmatprep.mubr.f32.mxu0 0.0
    %102 = vmatmul.mubr.f32.gmra.mrb[0].mxu0 %v32
    %v103 = vpop.f32.mrb[0].mxu0
    %v104 = vadd.f32 0.0, %v103
    %v105 = vpop.f32.mrb[0].mxu0
    %106 = vmatprep.mubr.f32.mxu0 0.0
    %107 = vmatmul.mubr.f32.gmra.mrb[0].mxu0 %v35
    %v108 = vpop.f32.mrb[0].mxu0
    %v109 = vadd.f32 0.0, %v108
    %v110 = vpop.f32.mrb[0].mxu0
    %111 = vdwg.mxu0
    %v112 = vadd.f32 %v22, %v104
    %v113 = vadd.f32 %v23, %v109
    %vm114 = vcmask 490496
    %115 = vst.msk [vmem:[#allocation2] sm:$0xff] %vm114, %v112
    %116 = vst.msk [vmem:[#allocation2 + $0x8] sm:$0xff] %vm114, %v113
    // Predicated region
    $region18: #{seq2seq_forward.69} parent=1 // pred_check
      %p117 = pneg %p15
    $region19: #{seq2seq_forward.69} parent=1 // pred_check_branch
      %119 = sbr.rel (%p117) target = $region21
    $region20: #{seq2seq_forward.69} parent=1 // pred_region
      %v120 = vld [vmem:[#allocation2] sm:$0xff]
      %v121 = vld [vmem:[#allocation2 + $0x8] sm:$0xff]
      %v122 = vld [vmem:[%s2] sm:$0x1]
      %v124 = vlaneseq
      %v125 = vshrl.u32 %v124, 7
      %v126 = vsub.s32 0, %v125
      %v127 = vrot.slane %v122, %v126
      %v129 = vadd.f32 %v120, %v127
      %v130 = vadd.f32 %v121, %v127
      %131 = vst.msk [vmem:[#allocation3] sm:$0xff] %vm114, %v129
      %132 = vst.msk [vmem:[#allocation3 + $0x8] sm:$0xff] %vm114, %v130
    $region21: #{seq2seq_forward.69} parent=1 // pred_fallthru
      _
    // Predicated region
    $region22: #{seq2seq_forward.69} parent=1 // pred_check
      _
    $region23: #{seq2seq_forward.69} parent=1 // pred_check_branch
      %134 = sbr.rel (0) target = $region25
    $region24: #{seq2seq_forward.69} parent=1 // pred_region
      %s136 = ssub.s32 256, 256
      %137 = vsyncadd [#allocation4], %s136
      %s138 = sshll.u32 [#allocation3], 4
      %s139 = int_to_ptr.vmem [resolvable:$true] %s138
      %144 = dma.vmem_to_hbm [thread:$0]  %s139, 256, %s3, [#allocation4], 128, 128, 8
    $region25: #{seq2seq_forward.69} parent=1 // pred_fallthru
      _
    // Predicated region
    $region26: #{seq2seq_forward.69} parent=1 // pred_check
      _
    $region27: #{seq2seq_forward.69} parent=1 // pred_check_branch
      %146 = sbr.rel (0) target = $region29
    $region28: #{seq2seq_forward.69} parent=1 // pred_region
      %147 = dma.done [#allocation4], 256
    $region29: #{seq2seq_forward.69} parent=1 // pred_fallthru
      _
    %148 = vsyncpa [#allocation4], 1

</llo_original>
